<compile_context>
chip_gen: v7x
topology: tpu7x:2x2x1
jax: 0.10.0
libtpu: 0.0.40
codegen_flags: <defaults>
</compile_context>

<pallas_src>
import math
import functools

import jax
import jax.numpy as jnp
from jax import lax
from jax.experimental import pallas as pl
from jax.experimental.pallas import tpu as pltpu


# ----------------------------- in-kernel helpers -----------------------------

def _rmsnorm(x, eps=1e-6):
    # matches torch rmsnorm(x0): float32 math, mean over last dim
    return x * lax.rsqrt(jnp.mean(x * x, axis=-1, keepdims=True) + eps)


def _erf_approx(z):
    # Abramowitz & Stegun 7.1.26 (exp/mul/add only), max abs error ~1.5e-7.
    a1, a2, a3, a4, a5 = (0.254829592, -0.284496736, 1.421413741,
                          -1.453152027, 1.061405429)
    p = 0.3275911
    x = jnp.abs(z)
    t = 1.0 / (1.0 + p * x)
    poly = ((((a5 * t + a4) * t + a3) * t + a2) * t + a1) * t
    y = 1.0 - poly * jnp.exp(-x * x)
    return jnp.where(z < 0, -y, y)


def _gelu_exact(x):
    # matches F.gelu default (erf-based) to ~1e-7
    return 0.5 * x * (1.0 + _erf_approx(x * (1.0 / math.sqrt(2.0))))


# ------------------------------- Pallas kernels -------------------------------

def gpt_fused_kernel(x_ref, wqkv_ref, wproj_ref, wfc_ref, wfcp_ref,
                     cos_ref, sin_ref, o_ref, resid_ref, y_ref,
                     *, n_head, head_dim, n_layer):
    """All transformer Blocks for one batch element; grid = (B, n_layer).

    x_ref block: (T, C) f32 token embeddings (fetched once per b).
    Weight refs: per-layer bf16 (in, out) blocks selected by the layer axis,
    with 1/sqrt(head_dim) folded into the q columns of wqkv and attn_scale
    folded into wproj.  cos_ref / sin_ref: (T, head_dim) f32 tables laid out
    as [cos|cos] and [sin|-sin], so rotary is lane-dense x*cos + roll(x,d)*sin.
    resid_ref: (T, C) f32 VMEM residual, resident across the layer axis.
    y_ref: (T, C) bf16 VMEM slab collecting per-head attention outputs.
    o_ref block: (1, C) bf16 — final-rmsnorm'd last token, written at l==L-1.
    """
    l = pl.program_id(1)
    T, C = resid_ref.shape
    hd = head_dim
    d = hd // 2

    @pl.when(l == 0)
    def _():
        resid_ref[...] = x_ref[...]

    x = resid_ref[...]                                  # (T, C) f32 residual

    # ---- attention branch ----
    xn = _rmsnorm(x).astype(jnp.bfloat16)
    qkv = jnp.dot(xn, wqkv_ref[...], preferred_element_type=jnp.float32)  # (T, 3C)

    cosf = cos_ref[...]                                 # (T, hd)  [cos | cos]
    sins = sin_ref[...]                                 # (T, hd)  [sin | -sin]
    v_bf = qkv[:, 2 * C:].astype(jnp.bfloat16)          # cast v slab once (hoisted)

    rows = lax.broadcasted_iota(jnp.int32, (T, T), 0)
    cols = lax.broadcasted_iota(jnp.int32, (T, T), 1)
    causal = cols <= rows

    for h in range(n_head):                             # static unroll (small n_head)
        qh = qkv[:, h * hd:(h + 1) * hd]                # (T, hd) f32, q pre-scaled
        kh = qkv[:, C + h * hd:C + (h + 1) * hd]
        vh = v_bf[:, h * hd:(h + 1) * hd]

        # rotary: [q1*c + q2*s, -q1*s + q2*c] via half-roll + signed-sin table
        qh = qh * cosf + pltpu.roll(qh, shift=d, axis=1) * sins
        kh = kh * cosf + pltpu.roll(kh, shift=d, axis=1) * sins

        # causal attention; contract last dims directly (no explicit kh.T)
        s = lax.dot_general(qh.astype(jnp.bfloat16), kh.astype(jnp.bfloat16),
                            (((1,), (1,)), ((), ())),
                            preferred_element_type=jnp.float32)           # (T, T)
        s = jnp.where(causal, s, -1e30)
        s = s - jnp.max(s, axis=-1, keepdims=True)
        p = jnp.exp(s)
        p = p * pl.reciprocal(jnp.sum(p, axis=-1, keepdims=True), approx=True)

        yh = jnp.dot(p.astype(jnp.bfloat16), vh,
                     preferred_element_type=jnp.float32)                  # (T, hd)
        y_ref[:, h * hd:(h + 1) * hd] = yh.astype(jnp.bfloat16)

    # output projection (attn_scale folded into wproj) + residual in f32
    x = x + jnp.dot(y_ref[...], wproj_ref[...], preferred_element_type=jnp.float32)

    # ---- MLP branch ----
    xn2 = _rmsnorm(x).astype(jnp.bfloat16)
    hcc = _gelu_exact(jnp.dot(xn2, wfc_ref[...], preferred_element_type=jnp.float32))
    x = x + jnp.dot(hcc.astype(jnp.bfloat16), wfcp_ref[...],
                    preferred_element_type=jnp.float32)

    resid_ref[...] = x

    @pl.when(l == n_layer - 1)
    def _():
        # final rmsnorm of the last token, hoisted out of the lm_head kernel
        o_ref[...] = _rmsnorm(x[T - 1:T, :]).astype(jnp.bfloat16)


def lm_head_kernel(xn_ref, w_ref, o_ref):
    """lm_head for all batch rows and one vocab tile (rmsnorm already applied).

    xn_ref: (B, C) bf16;  w_ref: (C, TILE_V) bf16;  o_ref: (B, TILE_V) f32.
    """
    o_ref[...] = jnp.dot(xn_ref[...], w_ref[...], preferred_element_type=jnp.float32)


# ------------------------------- JAX wrappers ---------------------------------

def run_gpt_blocks(x, wqkv, wproj, wfc, wfcp, cosf, sins, *, n_head, head_dim):
    """x: (B, T, C) f32 embeddings; stacked weights: (L, in, out) bf16.

    Returns (B, 1, C) bf16: final-rmsnorm'd last-token features.
    """
    B, T, C = x.shape
    L = wqkv.shape[0]
    kern = functools.partial(gpt_fused_kernel, n_head=n_head,
                             head_dim=head_dim, n_layer=L)
    flops = 2 * B * L * (12 * T * C * C + 2 * n_head * T * T * head_dim)
    transcendentals = B * L * (n_head * T * T + 4 * T * C)
    bytes_accessed = (B * L * 12 * C * C * 2      # bf16 weights (streamed per b)
                      + B * T * C * 4 + B * C * 2)
    return pl.pallas_call(
        kern,
        out_shape=jax.ShapeDtypeStruct((B, 1, C), jnp.bfloat16),
        grid=(B, L),
        in_specs=[
            pl.BlockSpec((None, T, C), lambda b, l: (b, 0, 0)),
            pl.BlockSpec((None, C, 3 * C), lambda b, l: (l, 0, 0)),
            pl.BlockSpec((None, C, C), lambda b, l: (l, 0, 0)),
            pl.BlockSpec((None, C, 4 * C), lambda b, l: (l, 0, 0)),
            pl.BlockSpec((None, 4 * C, C), lambda b, l: (l, 0, 0)),
            pl.BlockSpec((T, head_dim), lambda b, l: (0, 0)),
            pl.BlockSpec((T, head_dim), lambda b, l: (0, 0)),
        ],
        out_specs=pl.BlockSpec((None, 1, C), lambda b, l: (b, 0, 0)),
        scratch_shapes=[pltpu.VMEM((T, C), jnp.float32),    # residual (resident)
                        pltpu.VMEM((T, C), jnp.bfloat16)],  # per-head attn outputs
        compiler_params=pltpu.CompilerParams(
            dimension_semantics=("parallel", "arbitrary")),
        cost_estimate=pl.CostEstimate(flops=flops,
                                      transcendentals=transcendentals,
                                      bytes_accessed=bytes_accessed),
    )(x, wqkv, wproj, wfc, wfcp, cosf, sins)


def run_lm_head(x_norm, w_t, *, tile_v=2048):
    """x_norm: (B, C) bf16 (already rmsnorm'd last token); w_t: (C, V) bf16."""
    B, C = x_norm.shape
    V = w_t.shape[1]
    tile_v = min(tile_v, V)
    assert V % tile_v == 0
    return pl.pallas_call(
        lm_head_kernel,
        out_shape=jax.ShapeDtypeStruct((B, V), jnp.float32),
        grid=(V // tile_v,),
        in_specs=[
            pl.BlockSpec((B, C), lambda j: (0, 0)),
            pl.BlockSpec((C, tile_v), lambda j: (0, j)),
        ],
        out_specs=pl.BlockSpec((B, tile_v), lambda j: (0, j)),
        compiler_params=pltpu.CompilerParams(
            dimension_semantics=("parallel",)),
        cost_estimate=pl.CostEstimate(flops=2 * B * C * V, transcendentals=0,
                                      bytes_accessed=C * V * 2 + B * C * 2 + B * V * 4),
    )(x_norm, w_t)


def rotary_tables(T, head_dim, base=10000.0):
    inv_freq = 1.0 / (base ** (jnp.arange(0, head_dim, 2, dtype=jnp.float32) / head_dim))
    t = jnp.arange(T, dtype=jnp.float32)
    freqs = jnp.outer(t, inv_freq)                 # (T, head_dim//2)
    return jnp.cos(freqs), jnp.sin(freqs)


def prepare_params(params, *, n_head, n_layer):
    """Static reparameterization, layer-stacking, and bf16 cast of matmul weights.

    - 1/sqrt(head_dim) folded into q columns of wqkv (rotary is a rotation, so
      pre-scaling q is equivalent to scaling the attention scores).
    - attn_scale = 1/sqrt(2*n_layer) folded into wproj.
    - per-layer weights stacked with a leading layer dim for the fused kernel.
    - tied lm_head weight pre-transposed to (C, V) bf16.
    """
    wte = params["wte"]
    C = wte.shape[1]
    head_dim = C // n_head
    inv_sqrt_hd = 1.0 / math.sqrt(head_dim)
    attn_scale = 1.0 / math.sqrt(2 * n_layer)

    wqkv = jnp.stack([p["wqkv_t"] for p in params["blocks"]])           # (L, C, 3C)
    wqkv = wqkv.at[:, :, :C].multiply(inv_sqrt_hd)
    wproj = jnp.stack([p["wproj_t"] for p in params["blocks"]]) * attn_scale
    wfc = jnp.stack([p["wfc_t"] for p in params["blocks"]])
    wfcp = jnp.stack([p["wfcp_t"] for p in params["blocks"]])

    return {
        "wte": wte,
        "w_head_t": wte.T.astype(jnp.bfloat16),
        "wqkv": wqkv.astype(jnp.bfloat16),
        "wproj": wproj.astype(jnp.bfloat16),
        "wfc": wfc.astype(jnp.bfloat16),
        "wfcp": wfcp.astype(jnp.bfloat16),
    }


def gpt_forward(idx, params, *, n_head, n_layer, lm_head_tile_v=2048):
    """GPT.forward(idx, targets=None, return_logits=True) -> (logits, None)."""
    del n_layer  # attn_scale already folded into the weights at prep time
    wte = params["wte"]
    x = wte[idx].astype(jnp.float32)               # (B, T, C) embedding gather (glue)
    B, T, C = x.shape
    head_dim = C // n_head
    cos, sin = rotary_tables(T, head_dim)
    cos_full = jnp.concatenate([cos, cos], axis=1)         # (T, hd)  [cos | cos]
    sin_signed = jnp.concatenate([sin, -sin], axis=1)      # (T, hd)  [sin | -sin]

    # single fused pallas_call over all layers -> (B, 1, C) bf16 normalized last token
    x_norm = run_gpt_blocks(x, params["wqkv"], params["wproj"], params["wfc"],
                            params["wfcp"], cos_full, sin_signed,
                            n_head=n_head, head_dim=head_dim)

    logits = run_lm_head(x_norm.reshape(B, C), params["w_head_t"],
                         tile_v=lm_head_tile_v)            # (B, V) f32
    return logits.reshape(B, 1, -1), None


# ----------------------------- pure-JAX reference ------------------------------

def ref_forward(idx, params, *, n_head, n_layer):
    wte = params["wte"]
    x = wte[idx].astype(jnp.float32)
    B, T, C = x.shape
    head_dim = C // n_head
    d = head_dim // 2
    cos, sin = rotary_tables(T, head_dim)
    cosb = cos[None, :, None, :]
    sinb = sin[None, :, None, :]
    attn_scale = 1.0 / math.sqrt(2 * n_layer)
    mask = jnp.tril(jnp.ones((T, T), dtype=bool))

    def rope(u):
        u1, u2 = u[..., :d], u[..., d:]
        return jnp.concatenate([u1 * cosb + u2 * sinb, -u1 * sinb + u2 * cosb], axis=-1)

    for l in range(n_layer):
        p = params["blocks"][l]
        xn = _rmsnorm(x)
        qkv = xn @ p["wqkv_t"]
        q = qkv[..., :C].reshape(B, T, n_head, head_dim)
        k = qkv[..., C:2 * C].reshape(B, T, n_head, head_dim)
        v = qkv[..., 2 * C:].reshape(B, T, n_head, head_dim)
        q, k = rope(q), rope(k)
        q = q.transpose(0, 2, 1, 3)
        k = k.transpose(0, 2, 1, 3)
        v = v.transpose(0, 2, 1, 3)
        s = jnp.einsum("bhqd,bhkd->bhqk", q, k) / math.sqrt(head_dim)
        s = jnp.where(mask, s, -jnp.inf)
        a = jax.nn.softmax(s, axis=-1)
        y = jnp.einsum("bhqk,bhkd->bhqd", a, v)
        y = y.transpose(0, 2, 1, 3).reshape(B, T, C)
        y = y @ p["wproj_t"]
        x = x + attn_scale * y
        xn2 = _rmsnorm(x)
        h = jax.nn.gelu(xn2 @ p["wfc_t"], approximate=False)
        x = x + h @ p["wfcp_t"]

    x = _rmsnorm(x)
    logits = x[:, -1:, :] @ wte.T
    return logits


# ---------------------------------- main ---------------------------------------

if __name__ == "__main__":
    # small but lane-aligned config (C / head_dim multiples of 128, T multiple
    # of 8): vocab_size=512, n_layer=2, n_head=2, n_embd=256
    V, n_layer, n_head, C = 512, 2, 2, 256
    B, T = 2, 16

    key = jax.random.PRNGKey(0)
    keys = jax.random.split(key, 2 + 4 * n_layer)

    def init(k, shape, fan_in):
        return (jax.random.normal(k, shape, dtype=jnp.float32)
                * (1.0 / math.sqrt(fan_in)))

    # wte shared with lm_head (weight tying), shape (V, C) like nn.Embedding
    wte = init(keys[0], (V, C), C)

    blocks = []
    ki = 2
    for _ in range(n_layer):
        blocks.append({
            # stored pre-transposed as (in, out)
            "wqkv_t": init(keys[ki + 0], (C, 3 * C), C),
            "wproj_t": init(keys[ki + 1], (C, C), C),
            "wfc_t": init(keys[ki + 2], (C, 4 * C), C),
            "wfcp_t": init(keys[ki + 3], (4 * C, C), 4 * C),
        })
        ki += 4

    params = {"wte": wte, "blocks": blocks}
    idx = jax.random.randint(keys[1], (B, T), 0, V, dtype=jnp.int32)

    fast_params = prepare_params(params, n_head=n_head, n_layer=n_layer)
    logits, loss = gpt_forward(idx, fast_params, n_head=n_head, n_layer=n_layer)
    logits = jax.block_until_ready(logits)
    assert logits.shape == (B, 1, V) and loss is None

    ref = jax.block_until_ready(ref_forward(idx, params, n_head=n_head, n_layer=n_layer))
    max_err = float(jnp.max(jnp.abs(logits - ref)))
    # bf16 MXU operands (f32 accumulation) vs. an all-f32 reference -> looser tol
    assert jnp.allclose(logits, ref, rtol=5e-2, atol=5e-2), max_err

    print("KERNEL_OK")
</pallas_src>

<mosaic_0001>
module attributes {stable_mosaic.version = 11 : i64} {
  func.func @gpt_fused_kernel(%arg0: i32, %arg1: i32, %arg2: memref<1x16x256xf32, #tpu.memory_space<vmem>>, %arg3: memref<1x256x768xbf16, #tpu.memory_space<vmem>>, %arg4: memref<1x256x256xbf16, #tpu.memory_space<vmem>>, %arg5: memref<1x256x1024xbf16, #tpu.memory_space<vmem>>, %arg6: memref<1x1024x256xbf16, #tpu.memory_space<vmem>>, %arg7: memref<16x128xf32, #tpu.memory_space<vmem>>, %arg8: memref<16x128xf32, #tpu.memory_space<vmem>>, %arg9: memref<1x1x256xbf16, #tpu.memory_space<vmem>>, %arg10: memref<16x256xf32, #tpu.memory_space<vmem>>, %arg11: memref<16x256xbf16, #tpu.memory_space<vmem>>) attributes {dimension_semantics = [#tpu.dimension_semantics<parallel>, #tpu.dimension_semantics<arbitrary>], iteration_bounds = array<i64: 2, 2>, scalar_prefetch = 0 : i64, scratch_operands = 2 : i64, tpu.core_type = #tpu.core_type<tc>, window_params = [{transform_indices = @transform_0, window_bounds = array<i64: 1, 16, 256>}, {transform_indices = @transform_1, window_bounds = array<i64: 1, 256, 768>}, {transform_indices = @transform_2, window_bounds = array<i64: 1, 256, 256>}, {transform_indices = @transform_3, window_bounds = array<i64: 1, 256, 1024>}, {transform_indices = @transform_4, window_bounds = array<i64: 1, 1024, 256>}, {pipeline_mode = #tpu.pipeline_mode<synchronous>, transform_indices = @transform_5, window_bounds = array<i64: 16, 128>}, {pipeline_mode = #tpu.pipeline_mode<synchronous>, transform_indices = @transform_6, window_bounds = array<i64: 16, 128>}, {transform_indices = @transform_7, window_bounds = array<i64: 1, 1, 256>}]} {
    %c0_i32 = arith.constant 0 : i32
    %0 = arith.cmpi eq, %arg1, %c0_i32 : i32
    %1 = arith.extui %0 : i1 to i32
    %c0_i32_0 = arith.constant 0 : i32
    %2 = arith.cmpi ne, %1, %c0_i32_0 : i32
    scf.if %2 {
      %c0_63 = arith.constant 0 : index
      %c0_64 = arith.constant 0 : index
      %c0_65 = arith.constant 0 : index
      %153 = vector.load %arg2[%c0_63, %c0_64, %c0_65] : memref<1x16x256xf32, #tpu.memory_space<vmem>>, vector<1x16x256xf32>
      %154 = vector.shape_cast %153 : vector<1x16x256xf32> to vector<16x256xf32>
      %c0_66 = arith.constant 0 : index
      %c0_67 = arith.constant 0 : index
      %155 = vector.load %arg10[%c0_66, %c0_67] : memref<16x256xf32, #tpu.memory_space<vmem>>, vector<16x256xf32>
      tpu.vector_store %arg10[%c0_66, %c0_67], %154 {strides = array<i32>} : memref<16x256xf32, #tpu.memory_space<vmem>>, vector<16x256xf32>,
    } else {
    }
    %c0 = arith.constant 0 : index
    %c0_1 = arith.constant 0 : index
    %3 = vector.load %arg10[%c0, %c0_1] : memref<16x256xf32, #tpu.memory_space<vmem>>, vector<16x256xf32>
    %4 = arith.mulf %3, %3 : vector<16x256xf32>
    %cst = arith.constant dense<0.000000e+00> : vector<16xf32>
    %5 = vector.multi_reduction <add>, %4, %cst [1] : vector<16x256xf32> to vector<16xf32>
    %6 = vector.shape_cast %5 : vector<16xf32> to vector<16x1xf32>
    %cst_2 = arith.constant 2.560000e+02 : f32
    %7 = vector.broadcast %cst_2 : f32 to vector<16x1xf32>
    %8 = arith.divf %6, %7 : vector<16x1xf32>
    %cst_3 = arith.constant 9.99999997E-7 : f32
    %9 = vector.broadcast %cst_3 : f32 to vector<16x1xf32>
    %10 = arith.addf %8, %9 : vector<16x1xf32>
    %11 = math.rsqrt %10 : vector<16x1xf32>
    %12 = vector.broadcast %11 : vector<16x1xf32> to vector<16x256xf32>
    %13 = arith.mulf %3, %12 : vector<16x256xf32>
    %14 = arith.truncf %13 : vector<16x256xf32> to vector<16x256xbf16>
    %c0_4 = arith.constant 0 : index
    %c0_5 = arith.constant 0 : index
    %c0_6 = arith.constant 0 : index
    %15 = vector.load %arg3[%c0_4, %c0_5, %c0_6] : memref<1x256x768xbf16, #tpu.memory_space<vmem>>, vector<1x256x768xbf16>
    %16 = vector.shape_cast %15 : vector<1x256x768xbf16> to vector<256x768xbf16>
    %cst_7 = arith.constant dense<0.000000e+00> : vector<16x768xf32>
    %17 = tpu.matmul %14, %16, %cst_7 {dimension_numbers = #tpu.dot_dimension_numbers<[1], [0], [0], [1], [0, 0, 1, 1], [], []>} : vector<16x256xbf16>, vector<256x768xbf16>, vector<16x768xf32> -> vector<16x768xf32>
    %c0_8 = arith.constant 0 : index
    %c0_9 = arith.constant 0 : index
    %18 = vector.load %arg7[%c0_8, %c0_9] : memref<16x128xf32, #tpu.memory_space<vmem>>, vector<16x128xf32>
    %c0_10 = arith.constant 0 : index
    %c0_11 = arith.constant 0 : index
    %19 = vector.load %arg8[%c0_10, %c0_11] : memref<16x128xf32, #tpu.memory_space<vmem>>, vector<16x128xf32>
    %20 = vector.extract_strided_slice %17 {offsets = [0, 512], sizes = [16, 256], strides = [1, 1]} : vector<16x768xf32> to vector<16x256xf32>
    %21 = arith.truncf %20 : vector<16x256xf32> to vector<16x256xbf16>
    %22 = tpu.iota {dimensions = array<i32: 0>} : vector<16x16xi32>
    %23 = tpu.iota {dimensions = array<i32: 1>} : vector<16x16xi32>
    %24 = arith.cmpi sle, %23, %22 : vector<16x16xi32>
    %25 = vector.extract_strided_slice %17 {offsets = [0, 0], sizes = [16, 128], strides = [1, 1]} : vector<16x768xf32> to vector<16x128xf32>
    %26 = vector.extract_strided_slice %17 {offsets = [0, 256], sizes = [16, 128], strides = [1, 1]} : vector<16x768xf32> to vector<16x128xf32>
    %27 = vector.extract_strided_slice %21 {offsets = [0, 0], sizes = [16, 128], strides = [1, 1]} : vector<16x256xbf16> to vector<16x128xbf16>
    %28 = arith.mulf %25, %18 : vector<16x128xf32>
    %c64_i32 = arith.constant 64 : i32
    %29 = tpu.dynamic_rotate %25 by %c64_i32 dim 1 : vector<16x128xf32>, i32 -> vector<16x128xf32>
    %30 = arith.mulf %29, %19 : vector<16x128xf32>
    %31 = arith.addf %28, %30 : vector<16x128xf32>
    %32 = arith.mulf %26, %18 : vector<16x128xf32>
    %c64_i32_12 = arith.constant 64 : i32
    %33 = tpu.dynamic_rotate %26 by %c64_i32_12 dim 1 : vector<16x128xf32>, i32 -> vector<16x128xf32>
    %34 = arith.mulf %33, %19 : vector<16x128xf32>
    %35 = arith.addf %32, %34 : vector<16x128xf32>
    %36 = arith.truncf %31 : vector<16x128xf32> to vector<16x128xbf16>
    %37 = arith.truncf %35 : vector<16x128xf32> to vector<16x128xbf16>
    %cst_13 = arith.constant dense<0.000000e+00> : vector<16x16xf32>
    %38 = tpu.matmul %36, %37, %cst_13 {dimension_numbers = #tpu.dot_dimension_numbers<[1], [1], [0], [0], [0, 0, 1, 0], [], []>} : vector<16x128xbf16>, vector<16x128xbf16>, vector<16x16xf32> -> vector<16x16xf32>
    %cst_14 = arith.constant -1.000000e+30 : f32
    %39 = vector.broadcast %cst_14 : f32 to vector<16x16xf32>
    %40 = arith.select %24, %38, %39 : vector<16x16xi1>, vector<16x16xf32>
    %cst_15 = arith.constant dense<0xFF800000> : vector<16xf32>
    %41 = vector.multi_reduction <maximumf>, %40, %cst_15 [1] : vector<16x16xf32> to vector<16xf32>
    %42 = vector.shape_cast %41 : vector<16xf32> to vector<16x1xf32>
    %43 = vector.broadcast %42 : vector<16x1xf32> to vector<16x16xf32>
    %44 = arith.subf %40, %43 : vector<16x16xf32>
    %45 = math.exp %44 : vector<16x16xf32>
    %cst_16 = arith.constant dense<0.000000e+00> : vector<16xf32>
    %46 = vector.multi_reduction <add>, %45, %cst_16 [1] : vector<16x16xf32> to vector<16xf32>
    %47 = vector.shape_cast %46 : vector<16xf32> to vector<16x1xf32>
    %48 = tpu.reciprocal %47 {approx = true} : vector<16x1xf32> -> vector<16x1xf32>
    %49 = vector.broadcast %48 : vector<16x1xf32> to vector<16x16xf32>
    %50 = arith.mulf %45, %49 : vector<16x16xf32>
    %51 = arith.truncf %50 : vector<16x16xf32> to vector<16x16xbf16>
    %cst_17 = arith.constant dense<0.000000e+00> : vector<16x128xf32>
    %52 = tpu.matmul %51, %27, %cst_17 {dimension_numbers = #tpu.dot_dimension_numbers<[1], [0], [0], [1], [0, 0, 1, 1], [], []>} : vector<16x16xbf16>, vector<16x128xbf16>, vector<16x128xf32> -> vector<16x128xf32>
    %53 = arith.truncf %52 : vector<16x128xf32> to vector<16x128xbf16>
    %c0_18 = arith.constant 0 : index
    %c0_19 = arith.constant 0 : index
    %54 = vector.load %arg11[%c0_18, %c0_19] : memref<16x256xbf16, #tpu.memory_space<vmem>>, vector<16x128xbf16>
    tpu.vector_store %arg11[%c0_18, %c0_19], %53 {strides = array<i32>} : memref<16x256xbf16, #tpu.memory_space<vmem>>, vector<16x128xbf16>,
    %55 = vector.extract_strided_slice %17 {offsets = [0, 128], sizes = [16, 128], strides = [1, 1]} : vector<16x768xf32> to vector<16x128xf32>
    %56 = vector.extract_strided_slice %17 {offsets = [0, 384], sizes = [16, 128], strides = [1, 1]} : vector<16x768xf32> to vector<16x128xf32>
    %57 = vector.extract_strided_slice %21 {offsets = [0, 128], sizes = [16, 128], strides = [1, 1]} : vector<16x256xbf16> to vector<16x128xbf16>
    %58 = arith.mulf %55, %18 : vector<16x128xf32>
    %c64_i32_20 = arith.constant 64 : i32
    %59 = tpu.dynamic_rotate %55 by %c64_i32_20 dim 1 : vector<16x128xf32>, i32 -> vector<16x128xf32>
    %60 = arith.mulf %59, %19 : vector<16x128xf32>
    %61 = arith.addf %58, %60 : vector<16x128xf32>
    %62 = arith.mulf %56, %18 : vector<16x128xf32>
    %c64_i32_21 = arith.constant 64 : i32
    %63 = tpu.dynamic_rotate %56 by %c64_i32_21 dim 1 : vector<16x128xf32>, i32 -> vector<16x128xf32>
    %64 = arith.mulf %63, %19 : vector<16x128xf32>
    %65 = arith.addf %62, %64 : vector<16x128xf32>
    %66 = arith.truncf %61 : vector<16x128xf32> to vector<16x128xbf16>
    %67 = arith.truncf %65 : vector<16x128xf32> to vector<16x128xbf16>
    %cst_22 = arith.constant dense<0.000000e+00> : vector<16x16xf32>
    %68 = tpu.matmul %66, %67, %cst_22 {dimension_numbers = #tpu.dot_dimension_numbers<[1], [1], [0], [0], [0, 0, 1, 0], [], []>} : vector<16x128xbf16>, vector<16x128xbf16>, vector<16x16xf32> -> vector<16x16xf32>
    %cst_23 = arith.constant -1.000000e+30 : f32
    %69 = vector.broadcast %cst_23 : f32 to vector<16x16xf32>
    %70 = arith.select %24, %68, %69 : vector<16x16xi1>, vector<16x16xf32>
    %cst_24 = arith.constant dense<0xFF800000> : vector<16xf32>
    %71 = vector.multi_reduction <maximumf>, %70, %cst_24 [1] : vector<16x16xf32> to vector<16xf32>
    %72 = vector.shape_cast %71 : vector<16xf32> to vector<16x1xf32>
    %73 = vector.broadcast %72 : vector<16x1xf32> to vector<16x16xf32>
    %74 = arith.subf %70, %73 : vector<16x16xf32>
    %75 = math.exp %74 : vector<16x16xf32>
    %cst_25 = arith.constant dense<0.000000e+00> : vector<16xf32>
    %76 = vector.multi_reduction <add>, %75, %cst_25 [1] : vector<16x16xf32> to vector<16xf32>
    %77 = vector.shape_cast %76 : vector<16xf32> to vector<16x1xf32>
    %78 = tpu.reciprocal %77 {approx = true} : vector<16x1xf32> -> vector<16x1xf32>
    %79 = vector.broadcast %78 : vector<16x1xf32> to vector<16x16xf32>
    %80 = arith.mulf %75, %79 : vector<16x16xf32>
    %81 = arith.truncf %80 : vector<16x16xf32> to vector<16x16xbf16>
    %cst_26 = arith.constant dense<0.000000e+00> : vector<16x128xf32>
    %82 = tpu.matmul %81, %57, %cst_26 {dimension_numbers = #tpu.dot_dimension_numbers<[1], [0], [0], [1], [0, 0, 1, 1], [], []>} : vector<16x16xbf16>, vector<16x128xbf16>, vector<16x128xf32> -> vector<16x128xf32>
    %83 = arith.truncf %82 : vector<16x128xf32> to vector<16x128xbf16>
    %c0_27 = arith.constant 0 : index
    %c128 = arith.constant 128 : index
    %84 = vector.load %arg11[%c0_27, %c128] : memref<16x256xbf16, #tpu.memory_space<vmem>>, vector<16x128xbf16>
    tpu.vector_store %arg11[%c0_27, %c128], %83 {strides = array<i32>} : memref<16x256xbf16, #tpu.memory_space<vmem>>, vector<16x128xbf16>,
    %c0_28 = arith.constant 0 : index
    %c0_29 = arith.constant 0 : index
    %85 = vector.load %arg11[%c0_28, %c0_29] : memref<16x256xbf16, #tpu.memory_space<vmem>>, vector<16x256xbf16>
    %c0_30 = arith.constant 0 : index
    %c0_31 = arith.constant 0 : index
    %c0_32 = arith.constant 0 : index
    %86 = vector.load %arg4[%c0_30, %c0_31, %c0_32] : memref<1x256x256xbf16, #tpu.memory_space<vmem>>, vector<1x256x256xbf16>
    %87 = vector.shape_cast %86 : vector<1x256x256xbf16> to vector<256x256xbf16>
    %cst_33 = arith.constant dense<0.000000e+00> : vector<16x256xf32>
    %88 = tpu.matmul %85, %87, %cst_33 {dimension_numbers = #tpu.dot_dimension_numbers<[1], [0], [0], [1], [0, 0, 1, 1], [], []>} : vector<16x256xbf16>, vector<256x256xbf16>, vector<16x256xf32> -> vector<16x256xf32>
    %89 = arith.addf %3, %88 : vector<16x256xf32>
    %90 = arith.mulf %89, %89 : vector<16x256xf32>
    %cst_34 = arith.constant dense<0.000000e+00> : vector<16xf32>
    %91 = vector.multi_reduction <add>, %90, %cst_34 [1] : vector<16x256xf32> to vector<16xf32>
    %92 = vector.shape_cast %91 : vector<16xf32> to vector<16x1xf32>
    %cst_35 = arith.constant 2.560000e+02 : f32
    %93 = vector.broadcast %cst_35 : f32 to vector<16x1xf32>
    %94 = arith.divf %92, %93 : vector<16x1xf32>
    %cst_36 = arith.constant 9.99999997E-7 : f32
    %95 = vector.broadcast %cst_36 : f32 to vector<16x1xf32>
    %96 = arith.addf %94, %95 : vector<16x1xf32>
    %97 = math.rsqrt %96 : vector<16x1xf32>
    %98 = vector.broadcast %97 : vector<16x1xf32> to vector<16x256xf32>
    %99 = arith.mulf %89, %98 : vector<16x256xf32>
    %100 = arith.truncf %99 : vector<16x256xf32> to vector<16x256xbf16>
    %c0_37 = arith.constant 0 : index
    %c0_38 = arith.constant 0 : index
    %c0_39 = arith.constant 0 : index
    %101 = vector.load %arg5[%c0_37, %c0_38, %c0_39] : memref<1x256x1024xbf16, #tpu.memory_space<vmem>>, vector<1x256x1024xbf16>
    %102 = vector.shape_cast %101 : vector<1x256x1024xbf16> to vector<256x1024xbf16>
    %cst_40 = arith.constant dense<0.000000e+00> : vector<16x1024xf32>
    %103 = tpu.matmul %100, %102, %cst_40 {dimension_numbers = #tpu.dot_dimension_numbers<[1], [0], [0], [1], [0, 0, 1, 1], [], []>} : vector<16x256xbf16>, vector<256x1024xbf16>, vector<16x1024xf32> -> vector<16x1024xf32>
    %cst_41 = arith.constant 5.000000e-01 : f32
    %104 = vector.broadcast %cst_41 : f32 to vector<16x1024xf32>
    %105 = arith.mulf %104, %103 : vector<16x1024xf32>
    %cst_42 = arith.constant 0.707106769 : f32
    %106 = vector.broadcast %cst_42 : f32 to vector<16x1024xf32>
    %107 = arith.mulf %103, %106 : vector<16x1024xf32>
    %108 = math.absf %107 : vector<16x1024xf32>
    %cst_43 = arith.constant 0.327591091 : f32
    %109 = vector.broadcast %cst_43 : f32 to vector<16x1024xf32>
    %110 = arith.mulf %109, %108 : vector<16x1024xf32>
    %cst_44 = arith.constant 1.000000e+00 : f32
    %111 = vector.broadcast %cst_44 : f32 to vector<16x1024xf32>
    %112 = arith.addf %111, %110 : vector<16x1024xf32>
    %cst_45 = arith.constant 1.000000e+00 : f32
    %113 = vector.broadcast %cst_45 : f32 to vector<16x1024xf32>
    %114 = arith.divf %113, %112 : vector<16x1024xf32>
    %cst_46 = arith.constant 1.06140542 : f32
    %115 = vector.broadcast %cst_46 : f32 to vector<16x1024xf32>
    %116 = arith.mulf %115, %114 : vector<16x1024xf32>
    %cst_47 = arith.constant -1.45315206 : f32
    %117 = vector.broadcast %cst_47 : f32 to vector<16x1024xf32>
    %118 = arith.addf %116, %117 : vector<16x1024xf32>
    %119 = arith.mulf %118, %114 : vector<16x1024xf32>
    %cst_48 = arith.constant 1.42141378 : f32
    %120 = vector.broadcast %cst_48 : f32 to vector<16x1024xf32>
    %121 = arith.addf %119, %120 : vector<16x1024xf32>
    %122 = arith.mulf %121, %114 : vector<16x1024xf32>
    %cst_49 = arith.constant -0.284496725 : f32
    %123 = vector.broadcast %cst_49 : f32 to vector<16x1024xf32>
    %124 = arith.addf %122, %123 : vector<16x1024xf32>
    %125 = arith.mulf %124, %114 : vector<16x1024xf32>
    %cst_50 = arith.constant 0.254829586 : f32
    %126 = vector.broadcast %cst_50 : f32 to vector<16x1024xf32>
    %127 = arith.addf %125, %126 : vector<16x1024xf32>
    %128 = arith.mulf %127, %114 : vector<16x1024xf32>
    %cst_51 = arith.constant 0.000000e+00 : f32
    %129 = vector.broadcast %cst_51 : f32 to vector<16x1024xf32>
    %130 = arith.subf %129, %108 : vector<16x1024xf32>
    %131 = arith.mulf %130, %108 : vector<16x1024xf32>
    %132 = math.exp %131 : vector<16x1024xf32>
    %133 = arith.mulf %128, %132 : vector<16x1024xf32>
    %cst_52 = arith.constant 1.000000e+00 : f32
    %134 = vector.broadcast %cst_52 : f32 to vector<16x1024xf32>
    %135 = arith.subf %134, %133 : vector<16x1024xf32>
    %cst_53 = arith.constant 0.000000e+00 : f32
    %136 = vector.broadcast %cst_53 : f32 to vector<16x1024xf32>
    %137 = arith.cmpf olt, %107, %136 : vector<16x1024xf32>
    %cst_54 = arith.constant 0.000000e+00 : f32
    %138 = vector.broadcast %cst_54 : f32 to vector<16x1024xf32>
    %139 = arith.subf %138, %135 : vector<16x1024xf32>
    %140 = arith.select %137, %139, %135 : vector<16x1024xi1>, vector<16x1024xf32>
    %cst_55 = arith.constant 1.000000e+00 : f32
    %141 = vector.broadcast %cst_55 : f32 to vector<16x1024xf32>
    %142 = arith.addf %141, %140 : vector<16x1024xf32>
    %143 = arith.mulf %105, %142 : vector<16x1024xf32>
    %144 = arith.truncf %143 : vector<16x1024xf32> to vector<16x1024xbf16>
    %c0_56 = arith.constant 0 : index
    %c0_57 = arith.constant 0 : index
    %c0_58 = arith.constant 0 : index
    %145 = vector.load %arg6[%c0_56, %c0_57, %c0_58] : memref<1x1024x256xbf16, #tpu.memory_space<vmem>>, vector<1x1024x256xbf16>
    %146 = vector.shape_cast %145 : vector<1x1024x256xbf16> to vector<1024x256xbf16>
    %cst_59 = arith.constant dense<0.000000e+00> : vector<16x256xf32>
    %147 = tpu.matmul %144, %146, %cst_59 {dimension_numbers = #tpu.dot_dimension_numbers<[1], [0], [0], [1], [0, 0, 1, 1], [], []>} : vector<16x1024xbf16>, vector<1024x256xbf16>, vector<16x256xf32> -> vector<16x256xf32>
    %148 = arith.addf %89, %147 : vector<16x256xf32>
    %c0_60 = arith.constant 0 : index
    %c0_61 = arith.constant 0 : index
    %149 = vector.load %arg10[%c0_60, %c0_61] : memref<16x256xf32, #tpu.memory_space<vmem>>, vector<16x256xf32>
    tpu.vector_store %arg10[%c0_60, %c0_61], %148 {strides = array<i32>} : memref<16x256xf32, #tpu.memory_space<vmem>>, vector<16x256xf32>,
    %c1_i32 = arith.constant 1 : i32
    %150 = arith.cmpi eq, %arg1, %c1_i32 : i32
    %151 = arith.extui %150 : i1 to i32
    %c0_i32_62 = arith.constant 0 : i32
    %152 = arith.cmpi ne, %151, %c0_i32_62 : i32
    scf.if %152 {
      %153 = vector.extract_strided_slice %148 {offsets = [15, 0], sizes = [1, 256], strides = [1, 1]} : vector<16x256xf32> to vector<1x256xf32>
      %154 = arith.mulf %153, %153 : vector<1x256xf32>
      %cst_63 = arith.constant dense<0.000000e+00> : vector<1xf32>
      %155 = vector.multi_reduction <add>, %154, %cst_63 [1] : vector<1x256xf32> to vector<1xf32>
      %156 = vector.shape_cast %155 : vector<1xf32> to vector<1x1xf32>
      %cst_64 = arith.constant 2.560000e+02 : f32
      %157 = vector.broadcast %cst_64 : f32 to vector<1x1xf32>
      %158 = arith.divf %156, %157 : vector<1x1xf32>
      %cst_65 = arith.constant 9.99999997E-7 : f32
      %159 = vector.broadcast %cst_65 : f32 to vector<1x1xf32>
      %160 = arith.addf %158, %159 : vector<1x1xf32>
      %161 = math.rsqrt %160 : vector<1x1xf32>
      %162 = vector.broadcast %161 : vector<1x1xf32> to vector<1x256xf32>
      %163 = arith.mulf %153, %162 : vector<1x256xf32>
      %164 = arith.truncf %163 : vector<1x256xf32> to vector<1x256xbf16>
      %c0_66 = arith.constant 0 : index
      %c0_67 = arith.constant 0 : index
      %c0_68 = arith.constant 0 : index
      %165 = vector.load %arg9[%c0_66, %c0_67, %c0_68] : memref<1x1x256xbf16, #tpu.memory_space<vmem>>, vector<1x1x256xbf16>
      %166 = vector.shape_cast %165 : vector<1x1x256xbf16> to vector<1x256xbf16>
      %167 = vector.shape_cast %164 : vector<1x256xbf16> to vector<1x1x256xbf16>
      tpu.vector_store %arg9[%c0_66, %c0_67, %c0_68], %167 {strides = array<i32>} : memref<1x1x256xbf16, #tpu.memory_space<vmem>>, vector<1x1x256xbf16>,
    } else {
    }
    return
  }
  func.func @transform_0(%arg0: i32, %arg1: i32) -> (i32, i32, i32) {
    %c0_i32 = arith.constant 0 : i32
    %c0_i32_0 = arith.constant 0 : i32
    %c0_i32_1 = arith.constant 0 : i32
    return %arg0, %c0_i32, %c0_i32_0 : i32, i32, i32
  }
  func.func @transform_1(%arg0: i32, %arg1: i32) -> (i32, i32, i32) {
    %c0_i32 = arith.constant 0 : i32
    %c0_i32_0 = arith.constant 0 : i32
    %c0_i32_1 = arith.constant 0 : i32
    return %arg1, %c0_i32, %c0_i32_0 : i32, i32, i32
  }
  func.func @transform_2(%arg0: i32, %arg1: i32) -> (i32, i32, i32) {
    %c0_i32 = arith.constant 0 : i32
    %c0_i32_0 = arith.constant 0 : i32
    %c0_i32_1 = arith.constant 0 : i32
    return %arg1, %c0_i32, %c0_i32_0 : i32, i32, i32
  }
  func.func @transform_3(%arg0: i32, %arg1: i32) -> (i32, i32, i32) {
    %c0_i32 = arith.constant 0 : i32
    %c0_i32_0 = arith.constant 0 : i32
    %c0_i32_1 = arith.constant 0 : i32
    return %arg1, %c0_i32, %c0_i32_0 : i32, i32, i32
  }
  func.func @transform_4(%arg0: i32, %arg1: i32) -> (i32, i32, i32) {
    %c0_i32 = arith.constant 0 : i32
    %c0_i32_0 = arith.constant 0 : i32
    %c0_i32_1 = arith.constant 0 : i32
    return %arg1, %c0_i32, %c0_i32_0 : i32, i32, i32
  }
  func.func @transform_5(%arg0: i32, %arg1: i32) -> (i32, i32) {
    %c0_i32 = arith.constant 0 : i32
    %c0_i32_0 = arith.constant 0 : i32
    %c0_i32_1 = arith.constant 0 : i32
    return %c0_i32, %c0_i32_0 : i32, i32
  }
  func.func @transform_6(%arg0: i32, %arg1: i32) -> (i32, i32) {
    %c0_i32 = arith.constant 0 : i32
    %c0_i32_0 = arith.constant 0 : i32
    %c0_i32_1 = arith.constant 0 : i32
    return %c0_i32, %c0_i32_0 : i32, i32
  }
  func.func @transform_7(%arg0: i32, %arg1: i32) -> (i32, i32, i32) {
    %c0_i32 = arith.constant 0 : i32
    %c0_i32_0 = arith.constant 0 : i32
    %c0_i32_1 = arith.constant 0 : i32
    return %arg0, %c0_i32, %c0_i32_0 : i32, i32, i32
  }
}

</mosaic_0001>

<llo_original>
// kernel: tpu_custom_call.1
$region0: #{tpu_custom_call.1}
  #allocation0 [shape = 'u32[]', space=smem, size = 0x4, offset = 0x4, fixed_abs, tag = 'smem constant byte address 0x4 - core index']
  #allocation1 [shape = 'u32[144,128]{1,0:T(1,128)}', space=vmem, size = 0x12000, scoped, tag = 'internal scratch']
  #allocation2 [shape = 'f32[16,256]{1,0:T(8,128)}', space=vmem, size = 0x4000, scoped, tag = 'scratch operand']
  #allocation3 [shape = 'bf16[16,256]{1,0:T(16,128)(2,1)}', space=vmem, size = 0x2000, scoped, tag = 'scratch operand']
  %s0 = inlined_call_operand.hbm [shape: f32[2,16,256], index: 0, kind: input, shape index: {}]
  %s1 = inlined_call_operand.hbm [shape: bf16[2,256,768], index: 1, kind: input, shape index: {}]
  %s2 = inlined_call_operand.hbm [shape: bf16[2,256,256], index: 2, kind: input, shape index: {}]
  %s3 = inlined_call_operand.hbm [shape: bf16[2,256,1024], index: 3, kind: input, shape index: {}]
  %s4 = inlined_call_operand.hbm [shape: bf16[2,1024,256], index: 4, kind: input, shape index: {}]
  %s5 = inlined_call_operand.vmem [shape: f32[16,128], index: 5, kind: input, shape index: {}]
  %s6 = inlined_call_operand.hbm [shape: f32[16,128], index: 6, kind: input, shape index: {}]
  %s7 = inlined_call_operand.vmem [shape: bf16[2,1,256], index: 7, kind: output, shape index: {}]
  %s8 = sld [smem:[#allocation0]]
  $region93: #{tpu_custom_call.1} parent=0
    _
  %s10 = ssub.s32 1, %s8
  %s11 = scalar_select 0, %s10, %s8
  $region1: #{tpu_custom_call.1} parent=0
    #allocation4 [shape = 'u8[32768]{0}', space=vmem, size = 0x8000, scoped, tag = 'input window, operand 0']
    #allocation5 [shape = 's32[2]{0}', space=sflag, size = 0x8, scoped, tag = 'scoped memory for tpu_custom_call.1']
    #allocation6 [shape = 'u8[786432]{0}', space=vmem, size = 0xc0000, scoped, tag = 'input window, operand 1']
    #allocation7 [shape = 's32[2]{0}', space=sflag, size = 0x8, scoped, tag = 'scoped memory for tpu_custom_call.1']
    #allocation8 [shape = 'u8[262144]{0}', space=vmem, size = 0x40000, scoped, tag = 'input window, operand 2']
    #allocation9 [shape = 'u8[1048576]{0}', space=vmem, size = 0x100000, scoped, tag = 'input window, operand 3']
    #allocation10 [shape = 's32[2]{0}', space=sflag, size = 0x8, scoped, tag = 'scoped memory for tpu_custom_call.1']
    #allocation11 [shape = 'u8[1048576]{0}', space=vmem, size = 0x100000, scoped, tag = 'input window, operand 4']
    #allocation12 [shape = 'u8[8192]{0}', space=vmem, size = 0x2000, scoped, tag = 'input window, operand 6, single buffered']
    #allocation13 [shape = 's32[1]{0}', space=sflag, size = 0x4, scoped, tag = 'scoped memory for tpu_custom_call.1']
    %12 = vsyncpa [#allocation5], 0
    %s13 = scalar_lea.sflag [#allocation5], 1
    %14 = vsyncpa %s13, 0
    %15 = vsyncpa [#allocation7], 0
    %s16 = scalar_lea.sflag [#allocation7], 1
    %17 = vsyncpa %s16, 0
    %18 = vsyncpa [#allocation10], 0
    %s19 = scalar_lea.sflag [#allocation10], 1
    %20 = vsyncpa %s19, 0
    %21 = vsyncpa [#allocation13], 0
    loop: start=0, step=1, limit=6
    $region2: #{tpu_custom_call.1} parent=1 // loop_pre_header
      _
    $region3: #{tpu_custom_call.1} parent=1 // loop_header
      %s23 = sphi 0, %s27
      %p24 = scmp.ge.s32.totalorder %s23, 6
      %s30 = sphi 0, %s42
      %s31 = sphi 0, %s38
      %s32 = sphi 0, %s30
      %s33 = sphi 0, %s31
      %s34 = sphi 0, %s32
      %s35 = sphi 0, %s33
      %s45 = sphi 0, %s47
      %s48 = sphi 0, %s45
      %s49 = sphi 0, %s48
      %s65 = sphi 0, %s49
      %s71 = sphi 0, %s73
      %s74 = sphi 0, %s71
      %s75 = sphi 0, %s74
      %s91 = sphi 0, %s75
      %s97 = sphi 0, %s99
      %s100 = sphi 0, %s97
      %s101 = sphi 0, %s100
      %s117 = sphi 0, %s101
      %s123 = sphi 0, %s125
      %s126 = sphi 0, %s123
      %s127 = sphi 0, %s126
      %s143 = sphi 0, %s127
      %s149 = sphi 0, %s151
      %s152 = sphi 0, %s149
      %s153 = sphi 0, %s152
      %s169 = sphi 0, %s153
      %s173 = sphi 0, %s173
      %s175 = sphi 0, %s173
      %s176 = sphi 0, %s175
      %s190 = sphi 0, %s176
      %s194 = sphi 0, %s194
      %s196 = sphi 0, %s194
      %s197 = sphi 0, %s196
      %s211 = sphi 0, %s197
      %s217 = sphi 0, %s219
      %s220 = sphi 0, %s217
      %s221 = sphi 0, %s220
      %s237 = sphi 0, %s221
    $region4: #{tpu_custom_call.1} parent=1 // loop_header_branch
      %26 = sbr.rel (%p24) target = $region8
    $region5: #{tpu_custom_call.1} parent=1 // loop_body
      %s28 = ssub.s32 %s23, 1
      %s29 = ssub.s32 %s23, 2
      %s36 = sadd.s32 1, %s31
      %p37 = scmp.ge.s32.totalorder %s36, 2
      %s38 = scalar_select %p37, 0, %s36
      %s39 = sadd.s32 1, %s30
      %s40 = scalar_select %p37, %s39, %s30
      %p41 = scmp.ge.s32.totalorder %s40, 2
      %s42 = scalar_select %p41, 0, %s40
      %s43 = ssub.s32 %s30, %s42
      %p44 = scmp.eq.s32.totalorder %s43, 0
      %s46 = sadd.s32 %s45, 1
      %s47 = scalar_select %p44, %s45, %s46
      %p50 = pneg %p44
      %p51 = scmp.eq.s32.totalorder %s23, 3
      %p52 = por %p50, %p51
      %p53 = scmp.ne.s32.totalorder %s45, %s48
      %p54 = scmp.eq.s32.totalorder %s23, 0
      %p55 = por %p53, %p54
      %p56 = scmp.ne.s32.totalorder %s45, %s48
      %p57 = scmp.eq.s32.totalorder %s28, 3
      %p58 = por %p56, %p57
      %p59 = scmp.ne.s32.totalorder %s48, %s49
      %p60 = scmp.eq.s32.totalorder %s28, 0
      %p61 = por %p59, %p60
      %p62 = scmp.ne.s32.totalorder %s48, %s49
      %p63 = scmp.eq.s32.totalorder %s29, 3
      %p64 = por %p62, %p63
      %p66 = scmp.ne.s32.totalorder %s49, %s65
      %p67 = scmp.eq.s32.totalorder %s29, 0
      %p68 = por %p66, %p67
      %s69 = ssub.s32 %s31, %s38
      %p70 = scmp.eq.s32.totalorder %s69, 0
      %s72 = sadd.s32 %s71, 1
      %s73 = scalar_select %p70, %s71, %s72
      %p76 = pneg %p70
      %p77 = scmp.eq.s32.totalorder %s23, 3
      %p78 = por %p76, %p77
      %p79 = scmp.ne.s32.totalorder %s71, %s74
      %p80 = scmp.eq.s32.totalorder %s23, 0
      %p81 = por %p79, %p80
      %p82 = scmp.ne.s32.totalorder %s71, %s74
      %p83 = scmp.eq.s32.totalorder %s28, 3
      %p84 = por %p82, %p83
      %p85 = scmp.ne.s32.totalorder %s74, %s75
      %p86 = scmp.eq.s32.totalorder %s28, 0
      %p87 = por %p85, %p86
      %p88 = scmp.ne.s32.totalorder %s74, %s75
      %p89 = scmp.eq.s32.totalorder %s29, 3
      %p90 = por %p88, %p89
      %p92 = scmp.ne.s32.totalorder %s75, %s91
      %p93 = scmp.eq.s32.totalorder %s29, 0
      %p94 = por %p92, %p93
      %s95 = ssub.s32 %s31, %s38
      %p96 = scmp.eq.s32.totalorder %s95, 0
      %s98 = sadd.s32 %s97, 1
      %s99 = scalar_select %p96, %s97, %s98
      %p102 = pneg %p96
      %p103 = scmp.eq.s32.totalorder %s23, 3
      %p104 = por %p102, %p103
      %p105 = scmp.ne.s32.totalorder %s97, %s100
      %p106 = scmp.eq.s32.totalorder %s23, 0
      %p107 = por %p105, %p106
      %p108 = scmp.ne.s32.totalorder %s97, %s100
      %p109 = scmp.eq.s32.totalorder %s28, 3
      %p110 = por %p108, %p109
      %p111 = scmp.ne.s32.totalorder %s100, %s101
      %p112 = scmp.eq.s32.totalorder %s28, 0
      %p113 = por %p111, %p112
      %p114 = scmp.ne.s32.totalorder %s100, %s101
      %p115 = scmp.eq.s32.totalorder %s29, 3
      %p116 = por %p114, %p115
      %p118 = scmp.ne.s32.totalorder %s101, %s117
      %p119 = scmp.eq.s32.totalorder %s29, 0
      %p120 = por %p118, %p119
      %s121 = ssub.s32 %s31, %s38
      %p122 = scmp.eq.s32.totalorder %s121, 0
      %s124 = sadd.s32 %s123, 1
      %s125 = scalar_select %p122, %s123, %s124
      %p128 = pneg %p122
      %p129 = scmp.eq.s32.totalorder %s23, 3
      %p130 = por %p128, %p129
      %p131 = scmp.ne.s32.totalorder %s123, %s126
      %p132 = scmp.eq.s32.totalorder %s23, 0
      %p133 = por %p131, %p132
      %p134 = scmp.ne.s32.totalorder %s123, %s126
      %p135 = scmp.eq.s32.totalorder %s28, 3
      %p136 = por %p134, %p135
      %p137 = scmp.ne.s32.totalorder %s126, %s127
      %p138 = scmp.eq.s32.totalorder %s28, 0
      %p139 = por %p137, %p138
      %p140 = scmp.ne.s32.totalorder %s126, %s127
      %p141 = scmp.eq.s32.totalorder %s29, 3
      %p142 = por %p140, %p141
      %p144 = scmp.ne.s32.totalorder %s127, %s143
      %p145 = scmp.eq.s32.totalorder %s29, 0
      %p146 = por %p144, %p145
      %s147 = ssub.s32 %s31, %s38
      %p148 = scmp.eq.s32.totalorder %s147, 0
      %s150 = sadd.s32 %s149, 1
      %s151 = scalar_select %p148, %s149, %s150
      %p154 = pneg %p148
      %p155 = scmp.eq.s32.totalorder %s23, 3
      %p156 = por %p154, %p155
      %p157 = scmp.ne.s32.totalorder %s149, %s152
      %p158 = scmp.eq.s32.totalorder %s23, 0
      %p159 = por %p157, %p158
      %p160 = scmp.ne.s32.totalorder %s149, %s152
      %p161 = scmp.eq.s32.totalorder %s28, 3
      %p162 = por %p160, %p161
      %p163 = scmp.ne.s32.totalorder %s152, %s153
      %p164 = scmp.eq.s32.totalorder %s28, 0
      %p165 = por %p163, %p164
      %p166 = scmp.ne.s32.totalorder %s152, %s153
      %p167 = scmp.eq.s32.totalorder %s29, 3
      %p168 = por %p166, %p167
      %p170 = scmp.ne.s32.totalorder %s153, %s169
      %p171 = scmp.eq.s32.totalorder %s29, 0
      %p172 = por %p170, %p171
      %s174 = sadd.s32 %s173, 1
      %p177 = scmp.eq.s32.totalorder %s23, 3
      %p178 = scmp.ne.s32.totalorder %s173, %s175
      %p179 = scmp.eq.s32.totalorder %s23, 0
      %p180 = por %p178, %p179
      %p181 = scmp.ne.s32.totalorder %s173, %s175
      %p182 = scmp.eq.s32.totalorder %s28, 3
      %p183 = por %p181, %p182
      %p184 = scmp.ne.s32.totalorder %s175, %s176
      %p185 = scmp.eq.s32.totalorder %s28, 0
      %p186 = por %p184, %p185
      %p187 = scmp.ne.s32.totalorder %s175, %s176
      %p188 = scmp.eq.s32.totalorder %s29, 3
      %p189 = por %p187, %p188
      %p191 = scmp.ne.s32.totalorder %s176, %s190
      %p192 = scmp.eq.s32.totalorder %s29, 0
      %p193 = por %p191, %p192
      %s195 = sadd.s32 %s194, 1
      %p198 = scmp.eq.s32.totalorder %s23, 3
      %p199 = scmp.ne.s32.totalorder %s194, %s196
      %p200 = scmp.eq.s32.totalorder %s23, 0
      %p201 = por %p199, %p200
      %p202 = scmp.ne.s32.totalorder %s194, %s196
      %p203 = scmp.eq.s32.totalorder %s28, 3
      %p204 = por %p202, %p203
      %p205 = scmp.ne.s32.totalorder %s196, %s197
      %p206 = scmp.eq.s32.totalorder %s28, 0
      %p207 = por %p205, %p206
      %p208 = scmp.ne.s32.totalorder %s196, %s197
      %p209 = scmp.eq.s32.totalorder %s29, 3
      %p210 = por %p208, %p209
      %p212 = scmp.ne.s32.totalorder %s197, %s211
      %p213 = scmp.eq.s32.totalorder %s29, 0
      %p214 = por %p212, %p213
      %s215 = ssub.s32 %s30, %s42
      %p216 = scmp.eq.s32.totalorder %s215, 0
      %s218 = sadd.s32 %s217, 1
      %s219 = scalar_select %p216, %s217, %s218
      %p222 = pneg %p216
      %p223 = scmp.eq.s32.totalorder %s23, 3
      %p224 = por %p222, %p223
      %p225 = scmp.ne.s32.totalorder %s217, %s220
      %p226 = scmp.eq.s32.totalorder %s23, 0
      %p227 = por %p225, %p226
      %p228 = scmp.ne.s32.totalorder %s217, %s220
      %p229 = scmp.eq.s32.totalorder %s28, 3
      %p230 = por %p228, %p229
      %p231 = scmp.ne.s32.totalorder %s220, %s221
      %p232 = scmp.eq.s32.totalorder %s28, 0
      %p233 = por %p231, %p232
      %p234 = scmp.ne.s32.totalorder %s220, %s221
      %p235 = scmp.eq.s32.totalorder %s29, 3
      %p236 = por %p234, %p235
      %p238 = scmp.ne.s32.totalorder %s221, %s237
      %p239 = scmp.eq.s32.totalorder %s29, 0
      %p240 = por %p238, %p239
      %p241 = scmp.le.s32.totalorder 1, %s23
      %p242 = scmp.lt.s32.totalorder %s23, 5
      %p243 = pnand %p241, %p242
      %p244 = pneg %p243
      // Predicated region
      $region9: #{tpu_custom_call.1} parent=5 // pred_check
        _
      $region10: #{tpu_custom_call.1} parent=5 // pred_check_branch
        %246 = sbr.rel (%p243) target = $region12
      $region11: #{tpu_custom_call.1} parent=5 // pred_region
        %s247 = ssub.s32 %s23, 1
        // Predicated region
        $region13: #{tpu_custom_call.1} parent=11 // pred_check
          %p248 = pneg %p186
        $region14: #{tpu_custom_call.1} parent=11 // pred_check_branch
          %250 = sbr.rel (%p248) target = $region16
        $region15: #{tpu_custom_call.1} parent=11 // pred_region
          _
        $region16: #{tpu_custom_call.1} parent=11 // pred_fallthru
          _
        // Predicated region
        $region17: #{tpu_custom_call.1} parent=11 // pred_check
          %p251 = pneg %p207
        $region18: #{tpu_custom_call.1} parent=11 // pred_check_branch
          %253 = sbr.rel (%p251) target = $region20
        $region19: #{tpu_custom_call.1} parent=11 // pred_region
          %s255 = ssub.s32 256, 256
          %256 = vsyncadd [#allocation13], %s255
          %s257 = sshll.u32 [#allocation12], 4
          %s258 = int_to_ptr.vmem [resolvable:$true] %s257
          %263 = dma.hbm_to_vmem [thread:$0]  %s6, 256, %s258, [#allocation13], 128, 128, 8
        $region20: #{tpu_custom_call.1} parent=11 // pred_fallthru
          _
      $region12: #{tpu_custom_call.1} parent=5 // pred_fallthru
        _
      %p264 = scmp.lt.s32.totalorder %s23, 4
      // Predicated region
      $region21: #{tpu_custom_call.1} parent=5 // pred_check
        %p265 = pneg %p264
      $region22: #{tpu_custom_call.1} parent=5 // pred_check_branch
        %267 = sbr.rel (%p265) target = $region24
      $region23: #{tpu_custom_call.1} parent=5 // pred_region
        // Predicated region
        $region25: #{tpu_custom_call.1} parent=23 // pred_check
          %p268 = pneg %p55
        $region26: #{tpu_custom_call.1} parent=23 // pred_check_branch
          %270 = sbr.rel (%p268) target = $region28
        $region27: #{tpu_custom_call.1} parent=23 // pred_region
          %s271 = sand.u32 %s45, 1
          %s272 = scalar_lea.sflag [#allocation5], %s271
          %s273 = sand.u32 %s45, 1
          %s274 = smul.addr %s273, 32
          %s275 = scalar_lea.vmem [#allocation4], %s274
          %s277 = ssub.s32 512, 512
          %278 = vsyncadd %s272, %s277
          %s279 = smul.addr %s30, 4
          %s280 = smul.addr %s279, 128
          %s281 = scalar_lea.hbm %s0, %s280
          %s282 = sshll.u32 %s275, 4
          %s283 = int_to_ptr.vmem [resolvable:$true] %s282
          %288 = dma.hbm_to_vmem [thread:$0]  %s281, 512, %s283, %s272, 256, 256, 16
        $region28: #{tpu_custom_call.1} parent=23 // pred_fallthru
          _
        // Predicated region
        $region29: #{tpu_custom_call.1} parent=23 // pred_check
          %p289 = pneg %p81
        $region30: #{tpu_custom_call.1} parent=23 // pred_check_branch
          %291 = sbr.rel (%p289) target = $region32
        $region31: #{tpu_custom_call.1} parent=23 // pred_region
          %s292 = sand.u32 %s23, 1
          %s293 = scalar_lea.sflag [#allocation7], %s292
          %s294 = sand.u32 %s71, 1
          %s295 = smul.addr %s294, 768
          %s296 = scalar_lea.vmem [#allocation6], %s295
          %s298 = ssub.s32 12288, 12288
          %299 = vsyncadd %s293, %s298
          %s300 = smul.addr %s31, 192
          %s301 = smul.addr %s300, 64
          %s302 = scalar_lea.hbm %s1, %s301
          %s303 = sshll.u32 %s296, 4
          %s304 = int_to_ptr.vmem [resolvable:$true] %s303
          %309 = dma.hbm_to_vmem [thread:$0]  %s302, 12288, %s304, %s293, 384, 384, 24
        $region32: #{tpu_custom_call.1} parent=23 // pred_fallthru
          _
        // Predicated region
        $region33: #{tpu_custom_call.1} parent=23 // pred_check
          %p310 = pneg %p107
        $region34: #{tpu_custom_call.1} parent=23 // pred_check_branch
          %312 = sbr.rel (%p310) target = $region36
        $region35: #{tpu_custom_call.1} parent=23 // pred_region
          %s313 = sand.u32 %s23, 1
          %s314 = scalar_lea.sflag [#allocation7], %s313
          %s315 = sand.u32 %s97, 1
          %s316 = smul.addr %s315, 256
          %s317 = scalar_lea.vmem [#allocation8], %s316
          %s319 = ssub.s32 4096, 4096
          %320 = vsyncadd %s314, %s319
          %s321 = smul.addr %s31, 64
          %s322 = smul.addr %s321, 64
          %s323 = scalar_lea.hbm %s2, %s322
          %s324 = sshll.u32 %s317, 4
          %s325 = int_to_ptr.vmem [resolvable:$true] %s324
          %330 = dma.hbm_to_vmem [thread:$0]  %s323, 4096, %s325, %s314, 128, 128, 8
        $region36: #{tpu_custom_call.1} parent=23 // pred_fallthru
          _
        // Predicated region
        $region37: #{tpu_custom_call.1} parent=23 // pred_check
          %p331 = pneg %p133
        $region38: #{tpu_custom_call.1} parent=23 // pred_check_branch
          %333 = sbr.rel (%p331) target = $region40
        $region39: #{tpu_custom_call.1} parent=23 // pred_region
          %s334 = sand.u32 %s23, 1
          %s335 = scalar_lea.sflag [#allocation10], %s334
          %s336 = sand.u32 %s123, 1
          %s337 = smul.addr %s336, 1024
          %s338 = scalar_lea.vmem [#allocation9], %s337
          %s340 = ssub.s32 16384, 16384
          %341 = vsyncadd %s335, %s340
          %s342 = smul.addr %s31, 256
          %s343 = smul.addr %s342, 64
          %s344 = scalar_lea.hbm %s3, %s343
          %s345 = sshll.u32 %s338, 4
          %s346 = int_to_ptr.vmem [resolvable:$true] %s345
          %351 = dma.hbm_to_vmem [thread:$0]  %s344, 16384, %s346, %s335, 512, 512, 32
        $region40: #{tpu_custom_call.1} parent=23 // pred_fallthru
          _
        // Predicated region
        $region41: #{tpu_custom_call.1} parent=23 // pred_check
          %p352 = pneg %p159
        $region42: #{tpu_custom_call.1} parent=23 // pred_check_branch
          %354 = sbr.rel (%p352) target = $region44
        $region43: #{tpu_custom_call.1} parent=23 // pred_region
          %s355 = sand.u32 %s23, 1
          %s356 = scalar_lea.sflag [#allocation10], %s355
          %s357 = sand.u32 %s149, 1
          %s358 = smul.addr %s357, 1024
          %s359 = scalar_lea.vmem [#allocation11], %s358
          %s361 = ssub.s32 16384, 16384
          %362 = vsyncadd %s356, %s361
          %s363 = smul.addr %s31, 256
          %s364 = smul.addr %s363, 64
          %s365 = scalar_lea.hbm %s4, %s364
          %s366 = sshll.u32 %s359, 4
          %s367 = int_to_ptr.vmem [resolvable:$true] %s366
          %372 = dma.hbm_to_vmem [thread:$0]  %s365, 16384, %s367, %s356, 128, 128, 8
        $region44: #{tpu_custom_call.1} parent=23 // pred_fallthru
          _
      $region24: #{tpu_custom_call.1} parent=5 // pred_fallthru
        _
      %p373 = scmp.le.s32.totalorder 1, %s23
      %p374 = scmp.lt.s32.totalorder %s23, 5
      %p375 = pnand %p373, %p374
      %p376 = pneg %p375
      // Predicated region
      $region45: #{tpu_custom_call.1} parent=5 // pred_check
        _
      $region46: #{tpu_custom_call.1} parent=5 // pred_check_branch
        %378 = sbr.rel (%p375) target = $region48
      $region47: #{tpu_custom_call.1} parent=5 // pred_region
        %s379 = ssub.s32 %s23, 1
        %s380 = sand.u32 %s48, 1
        %s381 = scalar_lea.sflag [#allocation5], %s380
        %s382 = sand.u32 %s48, 1
        %s383 = smul.addr %s382, 32
        %s384 = scalar_lea.vmem [#allocation4], %s383
        // Predicated region
        $region49: #{tpu_custom_call.1} parent=47 // pred_check
          %p385 = pneg %p61
        $region50: #{tpu_custom_call.1} parent=47 // pred_check_branch
          %387 = sbr.rel (%p385) target = $region52
        $region51: #{tpu_custom_call.1} parent=47 // pred_region
          %388 = dma.done %s381, 512
        $region52: #{tpu_custom_call.1} parent=47 // pred_fallthru
          _
        %s389 = sand.u32 %s28, 1
        %s390 = scalar_lea.sflag [#allocation7], %s389
        %s391 = sand.u32 %s74, 1
        %s392 = smul.addr %s391, 768
        %s393 = scalar_lea.vmem [#allocation6], %s392
        // Predicated region
        $region53: #{tpu_custom_call.1} parent=47 // pred_check
          %p394 = pneg %p87
        $region54: #{tpu_custom_call.1} parent=47 // pred_check_branch
          %396 = sbr.rel (%p394) target = $region56
        $region55: #{tpu_custom_call.1} parent=47 // pred_region
          %397 = dma.done %s390, 12288
        $region56: #{tpu_custom_call.1} parent=47 // pred_fallthru
          _
        %s398 = sand.u32 %s28, 1
        %s399 = scalar_lea.sflag [#allocation7], %s398
        %s400 = sand.u32 %s100, 1
        %s401 = smul.addr %s400, 256
        %s402 = scalar_lea.vmem [#allocation8], %s401
        // Predicated region
        $region57: #{tpu_custom_call.1} parent=47 // pred_check
          %p403 = pneg %p113
        $region58: #{tpu_custom_call.1} parent=47 // pred_check_branch
          %405 = sbr.rel (%p403) target = $region60
        $region59: #{tpu_custom_call.1} parent=47 // pred_region
          %406 = dma.done %s399, 4096
        $region60: #{tpu_custom_call.1} parent=47 // pred_fallthru
          _
        %s407 = sand.u32 %s28, 1
        %s408 = scalar_lea.sflag [#allocation10], %s407
        %s409 = sand.u32 %s126, 1
        %s410 = smul.addr %s409, 1024
        %s411 = scalar_lea.vmem [#allocation9], %s410
        // Predicated region
        $region61: #{tpu_custom_call.1} parent=47 // pred_check
          %p412 = pneg %p139
        $region62: #{tpu_custom_call.1} parent=47 // pred_check_branch
          %414 = sbr.rel (%p412) target = $region64
        $region63: #{tpu_custom_call.1} parent=47 // pred_region
          %415 = dma.done %s408, 16384
        $region64: #{tpu_custom_call.1} parent=47 // pred_fallthru
          _
        %s416 = sand.u32 %s28, 1
        %s417 = scalar_lea.sflag [#allocation10], %s416
        %s418 = sand.u32 %s152, 1
        %s419 = smul.addr %s418, 1024
        %s420 = scalar_lea.vmem [#allocation11], %s419
        // Predicated region
        $region65: #{tpu_custom_call.1} parent=47 // pred_check
          %p421 = pneg %p165
        $region66: #{tpu_custom_call.1} parent=47 // pred_check_branch
          %423 = sbr.rel (%p421) target = $region68
        $region67: #{tpu_custom_call.1} parent=47 // pred_region
          %424 = dma.done %s417, 16384
        $region68: #{tpu_custom_call.1} parent=47 // pred_fallthru
          _
        // Predicated region
        $region69: #{tpu_custom_call.1} parent=47 // pred_check
          %p425 = pneg %p207
        $region70: #{tpu_custom_call.1} parent=47 // pred_check_branch
          %427 = sbr.rel (%p425) target = $region72
        $region71: #{tpu_custom_call.1} parent=47 // pred_region
          %428 = dma.done [#allocation13], 256
        $region72: #{tpu_custom_call.1} parent=47 // pred_fallthru
          _
        %s429 = sand.u32 %s48, 1
        %s430 = scalar_lea.sflag [#allocation5], %s429
        %s431 = sand.u32 %s48, 1
        %s432 = smul.addr %s431, 32
        %s433 = scalar_lea.vmem [#allocation4], %s432
        %p434 = pneg %p61
        %p435 = pneg %p58
        %s436 = sand.u32 %s28, 1
        %s437 = scalar_lea.sflag [#allocation7], %s436
        %s438 = sand.u32 %s74, 1
        %s439 = smul.addr %s438, 768
        %s440 = scalar_lea.vmem [#allocation6], %s439
        %p441 = pneg %p87
        %p442 = pneg %p84
        %s443 = sand.u32 %s28, 1
        %s444 = scalar_lea.sflag [#allocation7], %s443
        %s445 = sand.u32 %s100, 1
        %s446 = smul.addr %s445, 256
        %s447 = scalar_lea.vmem [#allocation8], %s446
        %p448 = pneg %p113
        %p449 = pneg %p110
        %s450 = sand.u32 %s28, 1
        %s451 = scalar_lea.sflag [#allocation10], %s450
        %s452 = sand.u32 %s126, 1
        %s453 = smul.addr %s452, 1024
        %s454 = scalar_lea.vmem [#allocation9], %s453
        %p455 = pneg %p139
        %p456 = pneg %p136
        %s457 = sand.u32 %s28, 1
        %s458 = scalar_lea.sflag [#allocation10], %s457
        %s459 = sand.u32 %s152, 1
        %s460 = smul.addr %s459, 1024
        %s461 = scalar_lea.vmem [#allocation11], %s460
        %p462 = pneg %p165
        %p463 = pneg %p162
        %p464 = pneg %p186
        %p465 = pneg %p183
        %p466 = pneg %p207
        %p467 = pneg %p204
        %p468 = pneg %p233
        %p469 = pneg %p230
        %p470 = scmp.lt.s32.totalorder %s32, 1
        %s471 = scalar_select %p470, %s32, 1
        %s472 = smul.addr %s471, 2
        %s473 = scalar_lea.vmem %s7, %s472
        %p474 = scmp.lt.s32.totalorder %s32, 1
        %s475 = scalar_select %p474, %s32, 1
        %s476 = smul.addr %s475, 2
        %s477 = scalar_lea.vmem %s7, %s476
        %p479 = scmp.eq.s32.totalorder %s33, 0
        // Predicated region
        $region73: #{tpu_custom_call.1} parent=47 // pred_check
          %p480 = pneg %p479
        $region74: #{tpu_custom_call.1} parent=47 // pred_check_branch
          %482 = sbr.rel (%p480) target = $region76
        $region75: #{tpu_custom_call.1} parent=47 // pred_region
          %v483 = vld [vmem:[%s384] sm:$0xff]
          %v484 = vld [vmem:[%s384 + $0x8] sm:$0xff]
          %v485 = vld [vmem:[%s384 + $0x10] sm:$0xff]
          %v486 = vld [vmem:[%s384 + $0x18] sm:$0xff]
          %487 = vst [vmem:[#allocation2] sm:$0xff] %v483
          %488 = vst [vmem:[#allocation2 + $0x8] sm:$0xff] %v484
          %489 = vst [vmem:[#allocation2 + $0x10] sm:$0xff] %v485
          %490 = vst [vmem:[#allocation2 + $0x18] sm:$0xff] %v486
        $region76: #{tpu_custom_call.1} parent=47 // pred_fallthru
          _
        %v491 = vld [vmem:[#allocation2] sm:$0xff]
        %v492 = vld [vmem:[#allocation2 + $0x8] sm:$0xff]
        %v493 = vld [vmem:[#allocation2 + $0x10] sm:$0xff]
        %v494 = vld [vmem:[#allocation2 + $0x18] sm:$0xff]
        %v495 = vmul.f32 %v491, %v491
        %v496 = vmul.f32 %v492, %v492
        %v497 = vmul.f32 %v493, %v493
        %v498 = vmul.f32 %v494, %v494
        %v499 = vadd.f32 %v495, %v496
        %500 = vadd.xlane.f32.xlu0 %v499
        %v501 = vpop.xlane.xlu0 %500
        %v502 = vadd.f32 %v497, %v498
        %503 = vadd.xlane.f32.xlu0 %v502
        %v504 = vpop.xlane.xlu0 %503
        %v505 = vrcp.pop 256.0
        %v506 = vmul.f32 %v501, %v505
        %v507 = vmul.f32 %v504, %v505
        %v508 = vadd.f32 %v506, 1e-06
        %v509 = vadd.f32 %v507, 1e-06
        %v510 = vrsqrt.pop %v508
        %v511 = vrsqrt.pop %v509
        %v512 = vmul.f32 %v491, %v510
        %v513 = vmul.f32 %v492, %v510
        %v514 = vmul.f32 %v493, %v511
        %v515 = vmul.f32 %v494, %v511
        %v516 = vpack.c.bf16 %v514, %v512
        %v517 = vpack.c.bf16 %v515, %v513
        %v518 = vld [vmem:[%s393] sm:$0xff]
        %v519 = vld [vmem:[%s393 + $0x8] sm:$0xff]
        %v520 = vld [vmem:[%s393 + $0x10] sm:$0xff]
        %v521 = vld [vmem:[%s393 + $0x18] sm:$0xff]
        %v522 = vld [vmem:[%s393 + $0x20] sm:$0xff]
        %v523 = vld [vmem:[%s393 + $0x28] sm:$0xff]
        %v524 = vld [vmem:[%s393 + $0x30] sm:$0xff]
        %v525 = vld [vmem:[%s393 + $0x38] sm:$0xff]
        %v526 = vld [vmem:[%s393 + $0x40] sm:$0xff]
        %v527 = vld [vmem:[%s393 + $0x48] sm:$0xff]
        %v528 = vld [vmem:[%s393 + $0x50] sm:$0xff]
        %v529 = vld [vmem:[%s393 + $0x58] sm:$0xff]
        %v530 = vld [vmem:[%s393 + $0x60] sm:$0xff]
        %v531 = vld [vmem:[%s393 + $0x68] sm:$0xff]
        %v532 = vld [vmem:[%s393 + $0x70] sm:$0xff]
        %v533 = vld [vmem:[%s393 + $0x78] sm:$0xff]
        %v534 = vld [vmem:[%s393 + $0x80] sm:$0xff]
        %v535 = vld [vmem:[%s393 + $0x88] sm:$0xff]
        %v536 = vld [vmem:[%s393 + $0x90] sm:$0xff]
        %v537 = vld [vmem:[%s393 + $0x98] sm:$0xff]
        %v538 = vld [vmem:[%s393 + $0xa0] sm:$0xff]
        %v539 = vld [vmem:[%s393 + $0xa8] sm:$0xff]
        %v540 = vld [vmem:[%s393 + $0xb0] sm:$0xff]
        %v541 = vld [vmem:[%s393 + $0xb8] sm:$0xff]
        %v542 = vld [vmem:[%s393 + $0xc0] sm:$0xff]
        %v543 = vld [vmem:[%s393 + $0xc8] sm:$0xff]
        %v544 = vld [vmem:[%s393 + $0xd0] sm:$0xff]
        %v545 = vld [vmem:[%s393 + $0xd8] sm:$0xff]
        %v546 = vld [vmem:[%s393 + $0xe0] sm:$0xff]
        %v547 = vld [vmem:[%s393 + $0xe8] sm:$0xff]
        %v548 = vld [vmem:[%s393 + $0xf0] sm:$0xff]
        %v549 = vld [vmem:[%s393 + $0xf8] sm:$0xff]
        %v550 = vld [vmem:[%s393 + $0x100] sm:$0xff]
        %v551 = vld [vmem:[%s393 + $0x108] sm:$0xff]
        %v552 = vld [vmem:[%s393 + $0x110] sm:$0xff]
        %v553 = vld [vmem:[%s393 + $0x118] sm:$0xff]
        %v554 = vld [vmem:[%s393 + $0x120] sm:$0xff]
        %v555 = vld [vmem:[%s393 + $0x128] sm:$0xff]
        %v556 = vld [vmem:[%s393 + $0x130] sm:$0xff]
        %v557 = vld [vmem:[%s393 + $0x138] sm:$0xff]
        %v558 = vld [vmem:[%s393 + $0x140] sm:$0xff]
        %v559 = vld [vmem:[%s393 + $0x148] sm:$0xff]
        %v560 = vld [vmem:[%s393 + $0x150] sm:$0xff]
        %v561 = vld [vmem:[%s393 + $0x158] sm:$0xff]
        %v562 = vld [vmem:[%s393 + $0x160] sm:$0xff]
        %v563 = vld [vmem:[%s393 + $0x168] sm:$0xff]
        %v564 = vld [vmem:[%s393 + $0x170] sm:$0xff]
        %v565 = vld [vmem:[%s393 + $0x178] sm:$0xff]
        %v566 = vld [vmem:[%s393 + $0x180] sm:$0xff]
        %v567 = vld [vmem:[%s393 + $0x188] sm:$0xff]
        %v568 = vld [vmem:[%s393 + $0x190] sm:$0xff]
        %v569 = vld [vmem:[%s393 + $0x198] sm:$0xff]
        %v570 = vld [vmem:[%s393 + $0x1a0] sm:$0xff]
        %v571 = vld [vmem:[%s393 + $0x1a8] sm:$0xff]
        %v572 = vld [vmem:[%s393 + $0x1b0] sm:$0xff]
        %v573 = vld [vmem:[%s393 + $0x1b8] sm:$0xff]
        %v574 = vld [vmem:[%s393 + $0x1c0] sm:$0xff]
        %v575 = vld [vmem:[%s393 + $0x1c8] sm:$0xff]
        %v576 = vld [vmem:[%s393 + $0x1d0] sm:$0xff]
        %v577 = vld [vmem:[%s393 + $0x1d8] sm:$0xff]
        %v578 = vld [vmem:[%s393 + $0x1e0] sm:$0xff]
        %v579 = vld [vmem:[%s393 + $0x1e8] sm:$0xff]
        %v580 = vld [vmem:[%s393 + $0x1f0] sm:$0xff]
        %v581 = vld [vmem:[%s393 + $0x1f8] sm:$0xff]
        %v582 = vld [vmem:[%s393 + $0x200] sm:$0xff]
        %v583 = vld [vmem:[%s393 + $0x208] sm:$0xff]
        %v584 = vld [vmem:[%s393 + $0x210] sm:$0xff]
        %v585 = vld [vmem:[%s393 + $0x218] sm:$0xff]
        %v586 = vld [vmem:[%s393 + $0x220] sm:$0xff]
        %v587 = vld [vmem:[%s393 + $0x228] sm:$0xff]
        %v588 = vld [vmem:[%s393 + $0x230] sm:$0xff]
        %v589 = vld [vmem:[%s393 + $0x238] sm:$0xff]
        %v590 = vld [vmem:[%s393 + $0x240] sm:$0xff]
        %v591 = vld [vmem:[%s393 + $0x248] sm:$0xff]
        %v592 = vld [vmem:[%s393 + $0x250] sm:$0xff]
        %v593 = vld [vmem:[%s393 + $0x258] sm:$0xff]
        %v594 = vld [vmem:[%s393 + $0x260] sm:$0xff]
        %v595 = vld [vmem:[%s393 + $0x268] sm:$0xff]
        %v596 = vld [vmem:[%s393 + $0x270] sm:$0xff]
        %v597 = vld [vmem:[%s393 + $0x278] sm:$0xff]
        %v598 = vld [vmem:[%s393 + $0x280] sm:$0xff]
        %v599 = vld [vmem:[%s393 + $0x288] sm:$0xff]
        %v600 = vld [vmem:[%s393 + $0x290] sm:$0xff]
        %v601 = vld [vmem:[%s393 + $0x298] sm:$0xff]
        %v602 = vld [vmem:[%s393 + $0x2a0] sm:$0xff]
        %v603 = vld [vmem:[%s393 + $0x2a8] sm:$0xff]
        %v604 = vld [vmem:[%s393 + $0x2b0] sm:$0xff]
        %v605 = vld [vmem:[%s393 + $0x2b8] sm:$0xff]
        %v606 = vld [vmem:[%s393 + $0x2c0] sm:$0xff]
        %v607 = vld [vmem:[%s393 + $0x2c8] sm:$0xff]
        %v608 = vld [vmem:[%s393 + $0x2d0] sm:$0xff]
        %v609 = vld [vmem:[%s393 + $0x2d8] sm:$0xff]
        %v610 = vld [vmem:[%s393 + $0x2e0] sm:$0xff]
        %v611 = vld [vmem:[%s393 + $0x2e8] sm:$0xff]
        %v612 = vld [vmem:[%s393 + $0x2f0] sm:$0xff]
        %v613 = vld [vmem:[%s393 + $0x2f8] sm:$0xff]
        %v710 = vunpack.c.l.b16 %v518
        %v711 = vunpack.c.h.b16 %v518
        %v712 = vunpack.c.l.b16 %v519
        %v713 = vunpack.c.h.b16 %v519
        %v714 = vunpack.c.l.b16 %v520
        %v715 = vunpack.c.h.b16 %v520
        %v716 = vunpack.c.l.b16 %v521
        %v717 = vunpack.c.h.b16 %v521
        %v718 = vunpack.c.l.b16 %v522
        %v719 = vunpack.c.h.b16 %v522
        %v720 = vunpack.c.l.b16 %v523
        %v721 = vunpack.c.h.b16 %v523
        %v722 = vunpack.c.l.b16 %v524
        %v723 = vunpack.c.h.b16 %v524
        %v724 = vunpack.c.l.b16 %v525
        %v725 = vunpack.c.h.b16 %v525
        %v726 = vunpack.c.l.b16 %v526
        %v727 = vunpack.c.h.b16 %v526
        %v728 = vunpack.c.l.b16 %v527
        %v729 = vunpack.c.h.b16 %v527
        %v730 = vunpack.c.l.b16 %v528
        %v731 = vunpack.c.h.b16 %v528
        %v732 = vunpack.c.l.b16 %v529
        %v733 = vunpack.c.h.b16 %v529
        %v734 = vunpack.c.l.b16 %v530
        %v735 = vunpack.c.h.b16 %v530
        %v736 = vunpack.c.l.b16 %v531
        %v737 = vunpack.c.h.b16 %v531
        %v738 = vunpack.c.l.b16 %v532
        %v739 = vunpack.c.h.b16 %v532
        %v740 = vunpack.c.l.b16 %v533
        %v741 = vunpack.c.h.b16 %v533
        %v742 = vunpack.c.l.b16 %v534
        %v743 = vunpack.c.h.b16 %v534
        %v744 = vunpack.c.l.b16 %v535
        %v745 = vunpack.c.h.b16 %v535
        %v746 = vunpack.c.l.b16 %v536
        %v747 = vunpack.c.h.b16 %v536
        %v748 = vunpack.c.l.b16 %v537
        %v749 = vunpack.c.h.b16 %v537
        %v750 = vunpack.c.l.b16 %v538
        %v751 = vunpack.c.h.b16 %v538
        %v752 = vunpack.c.l.b16 %v539
        %v753 = vunpack.c.h.b16 %v539
        %v754 = vunpack.c.l.b16 %v540
        %v755 = vunpack.c.h.b16 %v540
        %v756 = vunpack.c.l.b16 %v541
        %v757 = vunpack.c.h.b16 %v541
        %v758 = vunpack.c.l.b16 %v542
        %v759 = vunpack.c.h.b16 %v542
        %v760 = vunpack.c.l.b16 %v543
        %v761 = vunpack.c.h.b16 %v543
        %v762 = vunpack.c.l.b16 %v544
        %v763 = vunpack.c.h.b16 %v544
        %v764 = vunpack.c.l.b16 %v545
        %v765 = vunpack.c.h.b16 %v545
        %v766 = vunpack.c.l.b16 %v546
        %v767 = vunpack.c.h.b16 %v546
        %v768 = vunpack.c.l.b16 %v547
        %v769 = vunpack.c.h.b16 %v547
        %v770 = vunpack.c.l.b16 %v548
        %v771 = vunpack.c.h.b16 %v548
        %v772 = vunpack.c.l.b16 %v549
        %v773 = vunpack.c.h.b16 %v549
        %v774 = vunpack.c.l.b16 %v550
        %v775 = vunpack.c.h.b16 %v550
        %v776 = vunpack.c.l.b16 %v551
        %v777 = vunpack.c.h.b16 %v551
        %v778 = vunpack.c.l.b16 %v552
        %v779 = vunpack.c.h.b16 %v552
        %v780 = vunpack.c.l.b16 %v553
        %v781 = vunpack.c.h.b16 %v553
        %v782 = vunpack.c.l.b16 %v554
        %v783 = vunpack.c.h.b16 %v554
        %v784 = vunpack.c.l.b16 %v555
        %v785 = vunpack.c.h.b16 %v555
        %v786 = vunpack.c.l.b16 %v556
        %v787 = vunpack.c.h.b16 %v556
        %v788 = vunpack.c.l.b16 %v557
        %v789 = vunpack.c.h.b16 %v557
        %v790 = vunpack.c.l.b16 %v558
        %v791 = vunpack.c.h.b16 %v558
        %v792 = vunpack.c.l.b16 %v559
        %v793 = vunpack.c.h.b16 %v559
        %v794 = vunpack.c.l.b16 %v560
        %v795 = vunpack.c.h.b16 %v560
        %v796 = vunpack.c.l.b16 %v561
        %v797 = vunpack.c.h.b16 %v561
        %v798 = vunpack.c.l.b16 %v562
        %v799 = vunpack.c.h.b16 %v562
        %v800 = vunpack.c.l.b16 %v563
        %v801 = vunpack.c.h.b16 %v563
        %v802 = vunpack.c.l.b16 %v564
        %v803 = vunpack.c.h.b16 %v564
        %v804 = vunpack.c.l.b16 %v565
        %v805 = vunpack.c.h.b16 %v565
        %v806 = vunpack.c.l.b16 %v566
        %v807 = vunpack.c.h.b16 %v566
        %v808 = vunpack.c.l.b16 %v567
        %v809 = vunpack.c.h.b16 %v567
        %v810 = vunpack.c.l.b16 %v568
        %v811 = vunpack.c.h.b16 %v568
        %v812 = vunpack.c.l.b16 %v569
        %v813 = vunpack.c.h.b16 %v569
        %v814 = vunpack.c.l.b16 %v570
        %v815 = vunpack.c.h.b16 %v570
        %v816 = vunpack.c.l.b16 %v571
        %v817 = vunpack.c.h.b16 %v571
        %v818 = vunpack.c.l.b16 %v572
        %v819 = vunpack.c.h.b16 %v572
        %v820 = vunpack.c.l.b16 %v573
        %v821 = vunpack.c.h.b16 %v573
        %v822 = vunpack.c.l.b16 %v574
        %v823 = vunpack.c.h.b16 %v574
        %v824 = vunpack.c.l.b16 %v575
        %v825 = vunpack.c.h.b16 %v575
        %v826 = vunpack.c.l.b16 %v576
        %v827 = vunpack.c.h.b16 %v576
        %v828 = vunpack.c.l.b16 %v577
        %v829 = vunpack.c.h.b16 %v577
        %v830 = vunpack.c.l.b16 %v578
        %v831 = vunpack.c.h.b16 %v578
        %v832 = vunpack.c.l.b16 %v579
        %v833 = vunpack.c.h.b16 %v579
        %v834 = vunpack.c.l.b16 %v580
        %v835 = vunpack.c.h.b16 %v580
        %v836 = vunpack.c.l.b16 %v581
        %v837 = vunpack.c.h.b16 %v581
        %v838 = vunpack.c.l.b16 %v582
        %v839 = vunpack.c.h.b16 %v582
        %v840 = vunpack.c.l.b16 %v583
        %v841 = vunpack.c.h.b16 %v583
        %v842 = vunpack.c.l.b16 %v584
        %v843 = vunpack.c.h.b16 %v584
        %v844 = vunpack.c.l.b16 %v585
        %v845 = vunpack.c.h.b16 %v585
        %v846 = vunpack.c.l.b16 %v586
        %v847 = vunpack.c.h.b16 %v586
        %v848 = vunpack.c.l.b16 %v587
        %v849 = vunpack.c.h.b16 %v587
        %v850 = vunpack.c.l.b16 %v588
        %v851 = vunpack.c.h.b16 %v588
        %v852 = vunpack.c.l.b16 %v589
        %v853 = vunpack.c.h.b16 %v589
        %v854 = vunpack.c.l.b16 %v590
        %v855 = vunpack.c.h.b16 %v590
        %v856 = vunpack.c.l.b16 %v591
        %v857 = vunpack.c.h.b16 %v591
        %v858 = vunpack.c.l.b16 %v592
        %v859 = vunpack.c.h.b16 %v592
        %v860 = vunpack.c.l.b16 %v593
        %v861 = vunpack.c.h.b16 %v593
        %v862 = vunpack.c.l.b16 %v594
        %v863 = vunpack.c.h.b16 %v594
        %v864 = vunpack.c.l.b16 %v595
        %v865 = vunpack.c.h.b16 %v595
        %v866 = vunpack.c.l.b16 %v596
        %v867 = vunpack.c.h.b16 %v596
        %v868 = vunpack.c.l.b16 %v597
        %v869 = vunpack.c.h.b16 %v597
        %v870 = vunpack.c.l.b16 %v598
        %v871 = vunpack.c.h.b16 %v598
        %v872 = vunpack.c.l.b16 %v599
        %v873 = vunpack.c.h.b16 %v599
        %v874 = vunpack.c.l.b16 %v600
        %v875 = vunpack.c.h.b16 %v600
        %v876 = vunpack.c.l.b16 %v601
        %v877 = vunpack.c.h.b16 %v601
        %v878 = vunpack.c.l.b16 %v602
        %v879 = vunpack.c.h.b16 %v602
        %v880 = vunpack.c.l.b16 %v603
        %v881 = vunpack.c.h.b16 %v603
        %v882 = vunpack.c.l.b16 %v604
        %v883 = vunpack.c.h.b16 %v604
        %v884 = vunpack.c.l.b16 %v605
        %v885 = vunpack.c.h.b16 %v605
        %v886 = vunpack.c.l.b16 %v606
        %v887 = vunpack.c.h.b16 %v606
        %v888 = vunpack.c.l.b16 %v607
        %v889 = vunpack.c.h.b16 %v607
        %v890 = vunpack.c.l.b16 %v608
        %v891 = vunpack.c.h.b16 %v608
        %v892 = vunpack.c.l.b16 %v609
        %v893 = vunpack.c.h.b16 %v609
        %v894 = vunpack.c.l.b16 %v610
        %v895 = vunpack.c.h.b16 %v610
        %v896 = vunpack.c.l.b16 %v611
        %v897 = vunpack.c.h.b16 %v611
        %v898 = vunpack.c.l.b16 %v612
        %v899 = vunpack.c.h.b16 %v612
        %v900 = vunpack.c.l.b16 %v613
        %v901 = vunpack.c.h.b16 %v613
        %v902 = vpack.c.b16 %v716, %v710
        %v903 = vpack.c.b16 %v717, %v711
        %v904 = vpack.c.b16 %v718, %v712
        %v905 = vpack.c.b16 %v719, %v713
        %v906 = vpack.c.b16 %v720, %v714
        %v907 = vpack.c.b16 %v721, %v715
        %v908 = vpack.c.b16 %v728, %v722
        %v909 = vpack.c.b16 %v729, %v723
        %v910 = vpack.c.b16 %v730, %v724
        %v911 = vpack.c.b16 %v731, %v725
        %v912 = vpack.c.b16 %v732, %v726
        %v913 = vpack.c.b16 %v733, %v727
        %v914 = vpack.c.b16 %v740, %v734
        %v915 = vpack.c.b16 %v741, %v735
        %v916 = vpack.c.b16 %v742, %v736
        %v917 = vpack.c.b16 %v743, %v737
        %v918 = vpack.c.b16 %v744, %v738
        %v919 = vpack.c.b16 %v745, %v739
        %v920 = vpack.c.b16 %v752, %v746
        %v921 = vpack.c.b16 %v753, %v747
        %v922 = vpack.c.b16 %v754, %v748
        %v923 = vpack.c.b16 %v755, %v749
        %v924 = vpack.c.b16 %v756, %v750
        %v925 = vpack.c.b16 %v757, %v751
        %v926 = vpack.c.b16 %v764, %v758
        %v927 = vpack.c.b16 %v765, %v759
        %v928 = vpack.c.b16 %v766, %v760
        %v929 = vpack.c.b16 %v767, %v761
        %v930 = vpack.c.b16 %v768, %v762
        %v931 = vpack.c.b16 %v769, %v763
        %v932 = vpack.c.b16 %v776, %v770
        %v933 = vpack.c.b16 %v777, %v771
        %v934 = vpack.c.b16 %v778, %v772
        %v935 = vpack.c.b16 %v779, %v773
        %v936 = vpack.c.b16 %v780, %v774
        %v937 = vpack.c.b16 %v781, %v775
        %v938 = vpack.c.b16 %v788, %v782
        %v939 = vpack.c.b16 %v789, %v783
        %v940 = vpack.c.b16 %v790, %v784
        %v941 = vpack.c.b16 %v791, %v785
        %v942 = vpack.c.b16 %v792, %v786
        %v943 = vpack.c.b16 %v793, %v787
        %v944 = vpack.c.b16 %v800, %v794
        %v945 = vpack.c.b16 %v801, %v795
        %v946 = vpack.c.b16 %v802, %v796
        %v947 = vpack.c.b16 %v803, %v797
        %v948 = vpack.c.b16 %v804, %v798
        %v949 = vpack.c.b16 %v805, %v799
        %v950 = vpack.c.b16 %v812, %v806
        %v951 = vpack.c.b16 %v813, %v807
        %v952 = vpack.c.b16 %v814, %v808
        %v953 = vpack.c.b16 %v815, %v809
        %v954 = vpack.c.b16 %v816, %v810
        %v955 = vpack.c.b16 %v817, %v811
        %v956 = vpack.c.b16 %v824, %v818
        %v957 = vpack.c.b16 %v825, %v819
        %v958 = vpack.c.b16 %v826, %v820
        %v959 = vpack.c.b16 %v827, %v821
        %v960 = vpack.c.b16 %v828, %v822
        %v961 = vpack.c.b16 %v829, %v823
        %v962 = vpack.c.b16 %v836, %v830
        %v963 = vpack.c.b16 %v837, %v831
        %v964 = vpack.c.b16 %v838, %v832
        %v965 = vpack.c.b16 %v839, %v833
        %v966 = vpack.c.b16 %v840, %v834
        %v967 = vpack.c.b16 %v841, %v835
        %v968 = vpack.c.b16 %v848, %v842
        %v969 = vpack.c.b16 %v849, %v843
        %v970 = vpack.c.b16 %v850, %v844
        %v971 = vpack.c.b16 %v851, %v845
        %v972 = vpack.c.b16 %v852, %v846
        %v973 = vpack.c.b16 %v853, %v847
        %v974 = vpack.c.b16 %v860, %v854
        %v975 = vpack.c.b16 %v861, %v855
        %v976 = vpack.c.b16 %v862, %v856
        %v977 = vpack.c.b16 %v863, %v857
        %v978 = vpack.c.b16 %v864, %v858
        %v979 = vpack.c.b16 %v865, %v859
        %v980 = vpack.c.b16 %v872, %v866
        %v981 = vpack.c.b16 %v873, %v867
        %v982 = vpack.c.b16 %v874, %v868
        %v983 = vpack.c.b16 %v875, %v869
        %v984 = vpack.c.b16 %v876, %v870
        %v985 = vpack.c.b16 %v877, %v871
        %v986 = vpack.c.b16 %v884, %v878
        %v987 = vpack.c.b16 %v885, %v879
        %v988 = vpack.c.b16 %v886, %v880
        %v989 = vpack.c.b16 %v887, %v881
        %v990 = vpack.c.b16 %v888, %v882
        %v991 = vpack.c.b16 %v889, %v883
        %v992 = vpack.c.b16 %v896, %v890
        %v993 = vpack.c.b16 %v897, %v891
        %v994 = vpack.c.b16 %v898, %v892
        %v995 = vpack.c.b16 %v899, %v893
        %v996 = vpack.c.b16 %v900, %v894
        %v997 = vpack.c.b16 %v901, %v895
        %1094 = vmatprep.subr.bf16.mxu0 %v903
        %1095 = vmatpush1.bf16.msra.mxu0 %v902
        %1096 = vmatprep.subr.bf16.mxu0 %v909
        %1097 = vmatpush1.bf16.msra.mxu0 %v908
        %1098 = vmatprep.subr.bf16.mxu0 %v915
        %1099 = vmatpush1.bf16.msra.mxu0 %v914
        %1100 = vmatprep.subr.bf16.mxu0 %v921
        %1101 = vmatpush1.bf16.msra.mxu0 %v920
        %1102 = vmatprep.subr.bf16.mxu0 %v927
        %1103 = vmatpush1.bf16.msra.mxu0 %v926
        %1104 = vmatprep.subr.bf16.mxu0 %v933
        %1105 = vmatpush1.bf16.msra.mxu0 %v932
        %1106 = vmatprep.subr.bf16.mxu0 %v939
        %1107 = vmatpush1.bf16.msra.mxu0 %v938
        %1108 = vmatprep.subr.bf16.mxu0 %v945
        %1109 = vmatpush1.bf16.msra.mxu0 %v944
        %1110 = vmatprep.subr.bf16.mxu0 %v951
        %1111 = vmatpush1.bf16.msra.mxu0 %v950
        %1112 = vmatprep.subr.bf16.mxu0 %v957
        %1113 = vmatpush1.bf16.msra.mxu0 %v956
        %1114 = vmatprep.subr.bf16.mxu0 %v963
        %1115 = vmatpush1.bf16.msra.mxu0 %v962
        %1116 = vmatprep.subr.bf16.mxu0 %v969
        %1117 = vmatpush1.bf16.msra.mxu0 %v968
        %1118 = vmatprep.subr.bf16.mxu0 %v975
        %1119 = vmatpush1.bf16.msra.mxu0 %v974
        %1120 = vmatprep.subr.bf16.mxu0 %v981
        %1121 = vmatpush1.bf16.msra.mxu0 %v980
        %1122 = vmatprep.subr.bf16.mxu0 %v987
        %1123 = vmatpush1.bf16.msra.mxu0 %v986
        %1124 = vmatprep.subr.bf16.mxu0 %v993
        %1125 = vmatpush1.bf16.msra.mxu0 %v992
        %1126 = vmatprep.mubr.bf16.mxu0 %v517
        %1127 = vmatmul.mubr.bf16.gmra.mrb[0].mxu0 %v516
        %v1128 = vpop.f32.mrb[0].mxu0
        %v1129 = vadd.f32 0.0, %v1128
        %v1130 = vpop.f32.mrb[0].mxu0
        %v1131 = vadd.f32 0.0, %v1130
        %v1132 = vpop.f32.mrb[0].mxu0
        %v1133 = vadd.f32 0.0, %v1132
        %v1134 = vpop.f32.mrb[0].mxu0
        %v1135 = vadd.f32 0.0, %v1134
        %1136 = vdwg.mxu0
        %1137 = vmatprep.subr.bf16.mxu0 %v905
        %1138 = vmatpush1.bf16.msra.mxu0 %v904
        %1139 = vmatprep.subr.bf16.mxu0 %v911
        %1140 = vmatpush1.bf16.msra.mxu0 %v910
        %1141 = vmatprep.subr.bf16.mxu0 %v917
        %1142 = vmatpush1.bf16.msra.mxu0 %v916
        %1143 = vmatprep.subr.bf16.mxu0 %v923
        %1144 = vmatpush1.bf16.msra.mxu0 %v922
        %1145 = vmatprep.subr.bf16.mxu0 %v929
        %1146 = vmatpush1.bf16.msra.mxu0 %v928
        %1147 = vmatprep.subr.bf16.mxu0 %v935
        %1148 = vmatpush1.bf16.msra.mxu0 %v934
        %1149 = vmatprep.subr.bf16.mxu0 %v941
        %1150 = vmatpush1.bf16.msra.mxu0 %v940
        %1151 = vmatprep.subr.bf16.mxu0 %v947
        %1152 = vmatpush1.bf16.msra.mxu0 %v946
        %1153 = vmatprep.subr.bf16.mxu0 %v953
        %1154 = vmatpush1.bf16.msra.mxu0 %v952
        %1155 = vmatprep.subr.bf16.mxu0 %v959
        %1156 = vmatpush1.bf16.msra.mxu0 %v958
        %1157 = vmatprep.subr.bf16.mxu0 %v965
        %1158 = vmatpush1.bf16.msra.mxu0 %v964
        %1159 = vmatprep.subr.bf16.mxu0 %v971
        %1160 = vmatpush1.bf16.msra.mxu0 %v970
        %1161 = vmatprep.subr.bf16.mxu0 %v977
        %1162 = vmatpush1.bf16.msra.mxu0 %v976
        %1163 = vmatprep.subr.bf16.mxu0 %v983
        %1164 = vmatpush1.bf16.msra.mxu0 %v982
        %1165 = vmatprep.subr.bf16.mxu0 %v989
        %1166 = vmatpush1.bf16.msra.mxu0 %v988
        %1167 = vmatprep.subr.bf16.mxu0 %v995
        %1168 = vmatpush1.bf16.msra.mxu0 %v994
        %1169 = vmatprep.mubr.bf16.mxu0 %v517
        %1170 = vmatmul.mubr.bf16.gmra.mrb[0].mxu0 %v516
        %v1171 = vpop.f32.mrb[0].mxu0
        %v1172 = vadd.f32 0.0, %v1171
        %v1173 = vpop.f32.mrb[0].mxu0
        %v1174 = vadd.f32 0.0, %v1173
        %v1175 = vpop.f32.mrb[0].mxu0
        %v1176 = vadd.f32 0.0, %v1175
        %v1177 = vpop.f32.mrb[0].mxu0
        %v1178 = vadd.f32 0.0, %v1177
        %1179 = vdwg.mxu0
        %1180 = vmatprep.subr.bf16.mxu0 %v907
        %1181 = vmatpush1.bf16.msra.mxu0 %v906
        %1182 = vmatprep.subr.bf16.mxu0 %v913
        %1183 = vmatpush1.bf16.msra.mxu0 %v912
        %1184 = vmatprep.subr.bf16.mxu0 %v919
        %1185 = vmatpush1.bf16.msra.mxu0 %v918
        %1186 = vmatprep.subr.bf16.mxu0 %v925
        %1187 = vmatpush1.bf16.msra.mxu0 %v924
        %1188 = vmatprep.subr.bf16.mxu0 %v931
        %1189 = vmatpush1.bf16.msra.mxu0 %v930
        %1190 = vmatprep.subr.bf16.mxu0 %v937
        %1191 = vmatpush1.bf16.msra.mxu0 %v936
        %1192 = vmatprep.subr.bf16.mxu0 %v943
        %1193 = vmatpush1.bf16.msra.mxu0 %v942
        %1194 = vmatprep.subr.bf16.mxu0 %v949
        %1195 = vmatpush1.bf16.msra.mxu0 %v948
        %1196 = vmatprep.subr.bf16.mxu0 %v955
        %1197 = vmatpush1.bf16.msra.mxu0 %v954
        %1198 = vmatprep.subr.bf16.mxu0 %v961
        %1199 = vmatpush1.bf16.msra.mxu0 %v960
        %1200 = vmatprep.subr.bf16.mxu0 %v967
        %1201 = vmatpush1.bf16.msra.mxu0 %v966
        %1202 = vmatprep.subr.bf16.mxu0 %v973
        %1203 = vmatpush1.bf16.msra.mxu0 %v972
        %1204 = vmatprep.subr.bf16.mxu0 %v979
        %1205 = vmatpush1.bf16.msra.mxu0 %v978
        %1206 = vmatprep.subr.bf16.mxu0 %v985
        %1207 = vmatpush1.bf16.msra.mxu0 %v984
        %1208 = vmatprep.subr.bf16.mxu0 %v991
        %1209 = vmatpush1.bf16.msra.mxu0 %v990
        %1210 = vmatprep.subr.bf16.mxu0 %v997
        %1211 = vmatpush1.bf16.msra.mxu0 %v996
        %1212 = vmatprep.mubr.bf16.mxu0 %v517
        %1213 = vmatmul.mubr.bf16.gmra.mrb[0].mxu0 %v516
        %v1214 = vpop.f32.mrb[0].mxu0
        %v1215 = vadd.f32 0.0, %v1214
        %v1216 = vpop.f32.mrb[0].mxu0
        %v1217 = vadd.f32 0.0, %v1216
        %v1218 = vpop.f32.mrb[0].mxu0
        %v1219 = vadd.f32 0.0, %v1218
        %v1220 = vpop.f32.mrb[0].mxu0
        %v1221 = vadd.f32 0.0, %v1220
        %1222 = vdwg.mxu0
        %v1223 = vld [vmem:[%s5] sm:$0xff]
        %v1224 = vld [vmem:[%s5 + $0x8] sm:$0xff]
        %v1225 = vld [vmem:[#allocation12] sm:$0xff]
        %v1226 = vld [vmem:[#allocation12 + $0x8] sm:$0xff]
        %v1227 = vpack.c.bf16 %v1219, %v1215
        %v1228 = vpack.c.bf16 %v1221, %v1217
        %v1229 = vlaneseq
        %v1230 = vshrl.u32 %v1229, 7
        %v1231 = vadd.s32 %v1230, 8
        %v1232 = vlaneseq
        %v1233 = vand.u32 %v1232, 127
        %vm1234 = vcmp.le.s32.totalorder %v1233, %v1230
        %vm1235 = vcmp.le.s32.totalorder %v1233, %v1231
        %v1236 = vmul.f32 %v1129, %v1223
        %v1237 = vmul.f32 %v1133, %v1224
        %1238 = vrot.lane.b32.xlu0 %v1129, 64
        %v1239 = vpop.permute.xlu0 %1238
        %1240 = vrot.lane.b32.xlu0 %v1133, 64
        %v1241 = vpop.permute.xlu0 %1240
        %v1242 = vmul.f32 %v1239, %v1225
        %v1243 = vmul.f32 %v1241, %v1226
        %v1244 = vadd.f32 %v1236, %v1242
        %v1245 = vadd.f32 %v1237, %v1243
        %v1246 = vmul.f32 %v1172, %v1223
        %v1247 = vmul.f32 %v1176, %v1224
        %1248 = vrot.lane.b32.xlu0 %v1172, 64
        %v1249 = vpop.permute.xlu0 %1248
        %1250 = vrot.lane.b32.xlu0 %v1176, 64
        %v1251 = vpop.permute.xlu0 %1250
        %v1252 = vmul.f32 %v1249, %v1225
        %v1253 = vmul.f32 %v1251, %v1226
        %v1254 = vadd.f32 %v1246, %v1252
        %v1255 = vadd.f32 %v1247, %v1253
        %v1256 = vpack.c.bf16 %v1245, %v1244
        %v1257 = vpack.c.bf16 %v1255, %v1254
        %1258 = vmatprep.subr.bf16.mxu0 0
        %1259 = vmatpush1.bf16.xpose.msra.mxu0 %v1257
        %1260 = vmatprep.subr.bf16.mxu0 0
        %1261 = vmatpush1.bf16.xpose.msra.mxu0 0
        %1262 = vmatprep.subr.bf16.mxu0 0
        %1263 = vmatpush1.bf16.xpose.msra.mxu0 0
        %1264 = vmatprep.subr.bf16.mxu0 0
        %1265 = vmatpush1.bf16.xpose.msra.mxu0 0
        %1266 = vmatprep.subr.bf16.mxu0 0
        %1267 = vmatpush1.bf16.xpose.msra.mxu0 0
        %1268 = vmatprep.subr.bf16.mxu0 0
        %1269 = vmatpush1.bf16.xpose.msra.mxu0 0
        %1270 = vmatprep.subr.bf16.mxu0 0
        %1271 = vmatpush1.bf16.xpose.msra.mxu0 0
        %1272 = vmatprep.subr.bf16.mxu0 0
        %1273 = vmatpush1.bf16.xpose.msra.mxu0 0
        %1274 = vmatprep.subr.bf16.mxu0 0
        %1275 = vmatpush1.bf16.xpose.msra.mxu0 0
        %1276 = vmatprep.subr.bf16.mxu0 0
        %1277 = vmatpush1.bf16.xpose.msra.mxu0 0
        %1278 = vmatprep.subr.bf16.mxu0 0
        %1279 = vmatpush1.bf16.xpose.msra.mxu0 0
        %1280 = vmatprep.subr.bf16.mxu0 0
        %1281 = vmatpush1.bf16.xpose.msra.mxu0 0
        %1282 = vmatprep.subr.bf16.mxu0 0
        %1283 = vmatpush1.bf16.xpose.msra.mxu0 0
        %1284 = vmatprep.subr.bf16.mxu0 0
        %1285 = vmatpush1.bf16.xpose.msra.mxu0 0
        %1286 = vmatprep.subr.bf16.mxu0 0
        %1287 = vmatpush1.bf16.xpose.msra.mxu0 0
        %1288 = vmatprep.subr.bf16.mxu0 0
        %1289 = vmatpush1.bf16.xpose.msra.mxu0 0
        %1290 = vmatprep.mubr.bf16.mxu0 0
        %1291 = vmatmul.mubr.bf16.gmra.mrb[0].mxu0 %v1256
        %v1292 = vpop.f32.mrb[0].mxu0
        %v1293 = vadd.f32 0.0, %v1292
        %v1294 = vpop.f32.mrb[0].mxu0
        %v1295 = vpop.f32.mrb[0].mxu0
        %v1296 = vadd.f32 0.0, %v1295
        %v1297 = vpop.f32.mrb[0].mxu0
        %1298 = vdwg.mxu0
        %v1299 = vsel %vm1234, %v1293, -1e+30
        %v1300 = vsel %vm1235, %v1296, -1e+30
        %vm1301 = vcmask 130048
        %v1302 = vsel %vm1301, %v1299, -inf
        %1303 = vmax.xlane.f32.xlu0 %v1302
        %v1304 = vpop.xlane.xlu0 %1303
        %v1305 = vsel %vm1301, %v1300, -inf
        %1306 = vmax.xlane.f32.xlu0 %v1305
        %v1307 = vpop.xlane.xlu0 %1306
        %v1308 = vsub.f32 %v1299, %v1304
        %v1309 = vsub.f32 %v1300, %v1307
        %v1310 = vmul.f32 %v1308, 1.442695
        %v1311 = vpow.pop %v1310
        %v1312 = vmul.f32 %v1309, 1.442695
        %v1313 = vpow.pop %v1312
        %v1314 = vsel %vm1301, %v1311, 0.0
        %1315 = vadd.xlane.f32.xlu0 %v1314
        %v1316 = vpop.xlane.xlu0 %1315
        %v1317 = vsel %vm1301, %v1313, 0.0
        %1318 = vadd.xlane.f32.xlu0 %v1317
        %v1319 = vpop.xlane.xlu0 %1318
        %v1320 = vrcp.pop %v1316
        %v1321 = vrcp.pop %v1319
        %v1322 = vmul.f32 %v1311, %v1320
        %v1323 = vmul.f32 %v1313, %v1321
        %v1324 = vpack.c.bf16 %v1323, %v1322
        %v1326 = vsel %vm1301, %v1324, 0
        %1328 = vmatprep.subr.bf16.mxu0 0
        %1329 = vmatpush1.bf16.msra.mxu0 %v1227
        %1330 = vmatprep.subr.bf16.mxu0 0
        %1331 = vmatpush1.bf16.msra.mxu0 0
        %1332 = vmatprep.subr.bf16.mxu0 0
        %1333 = vmatpush1.bf16.msra.mxu0 0
        %1334 = vmatprep.subr.bf16.mxu0 0
        %1335 = vmatpush1.bf16.msra.mxu0 0
        %1336 = vmatprep.subr.bf16.mxu0 0
        %1337 = vmatpush1.bf16.msra.mxu0 0
        %1338 = vmatprep.subr.bf16.mxu0 0
        %1339 = vmatpush1.bf16.msra.mxu0 0
        %1340 = vmatprep.subr.bf16.mxu0 0
        %1341 = vmatpush1.bf16.msra.mxu0 0
        %1342 = vmatprep.subr.bf16.mxu0 0
        %1343 = vmatpush1.bf16.msra.mxu0 0
        %1344 = vmatprep.subr.bf16.mxu0 0
        %1345 = vmatpush1.bf16.msra.mxu0 0
        %1346 = vmatprep.subr.bf16.mxu0 0
        %1347 = vmatpush1.bf16.msra.mxu0 0
        %1348 = vmatprep.subr.bf16.mxu0 0
        %1349 = vmatpush1.bf16.msra.mxu0 0
        %1350 = vmatprep.subr.bf16.mxu0 0
        %1351 = vmatpush1.bf16.msra.mxu0 0
        %1352 = vmatprep.subr.bf16.mxu0 0
        %1353 = vmatpush1.bf16.msra.mxu0 0
        %1354 = vmatprep.subr.bf16.mxu0 0
        %1355 = vmatpush1.bf16.msra.mxu0 0
        %1356 = vmatprep.subr.bf16.mxu0 0
        %1357 = vmatpush1.bf16.msra.mxu0 0
        %1358 = vmatprep.subr.bf16.mxu0 0
        %1359 = vmatpush1.bf16.msra.mxu0 0
        %1360 = vmatprep.mubr.bf16.mxu0 0
        %1361 = vmatmul.mubr.bf16.gmra.mrb[0].mxu0 %v1326
        %v1362 = vpop.f32.mrb[0].mxu0
        %v1363 = vadd.f32 0.0, %v1362
        %v1364 = vpop.f32.mrb[0].mxu0
        %v1365 = vpop.f32.mrb[0].mxu0
        %v1366 = vadd.f32 0.0, %v1365
        %v1367 = vpop.f32.mrb[0].mxu0
        %1368 = vdwg.mxu0
        %v1369 = vpack.c.bf16 %v1366, %v1363
        %1370 = vst [vmem:[#allocation3] sm:$0xff] %v1369
        %v1371 = vmul.f32 %v1131, %v1223
        %v1372 = vmul.f32 %v1135, %v1224
        %1373 = vrot.lane.b32.xlu0 %v1131, 64
        %v1374 = vpop.permute.xlu0 %1373
        %1375 = vrot.lane.b32.xlu0 %v1135, 64
        %v1376 = vpop.permute.xlu0 %1375
        %v1377 = vmul.f32 %v1374, %v1225
        %v1378 = vmul.f32 %v1376, %v1226
        %v1379 = vadd.f32 %v1371, %v1377
        %v1380 = vadd.f32 %v1372, %v1378
        %v1381 = vmul.f32 %v1174, %v1223
        %v1382 = vmul.f32 %v1178, %v1224
        %1383 = vrot.lane.b32.xlu0 %v1174, 64
        %v1384 = vpop.permute.xlu0 %1383
        %1385 = vrot.lane.b32.xlu0 %v1178, 64
        %v1386 = vpop.permute.xlu0 %1385
        %v1387 = vmul.f32 %v1384, %v1225
        %v1388 = vmul.f32 %v1386, %v1226
        %v1389 = vadd.f32 %v1381, %v1387
        %v1390 = vadd.f32 %v1382, %v1388
        %v1391 = vpack.c.bf16 %v1380, %v1379
        %v1392 = vpack.c.bf16 %v1390, %v1389
        %1393 = vmatprep.subr.bf16.mxu0 0
        %1394 = vmatpush1.bf16.xpose.msra.mxu0 %v1392
        %1395 = vmatprep.subr.bf16.mxu0 0
        %1396 = vmatpush1.bf16.xpose.msra.mxu0 0
        %1397 = vmatprep.subr.bf16.mxu0 0
        %1398 = vmatpush1.bf16.xpose.msra.mxu0 0
        %1399 = vmatprep.subr.bf16.mxu0 0
        %1400 = vmatpush1.bf16.xpose.msra.mxu0 0
        %1401 = vmatprep.subr.bf16.mxu0 0
        %1402 = vmatpush1.bf16.xpose.msra.mxu0 0
        %1403 = vmatprep.subr.bf16.mxu0 0
        %1404 = vmatpush1.bf16.xpose.msra.mxu0 0
        %1405 = vmatprep.subr.bf16.mxu0 0
        %1406 = vmatpush1.bf16.xpose.msra.mxu0 0
        %1407 = vmatprep.subr.bf16.mxu0 0
        %1408 = vmatpush1.bf16.xpose.msra.mxu0 0
        %1409 = vmatprep.subr.bf16.mxu0 0
        %1410 = vmatpush1.bf16.xpose.msra.mxu0 0
        %1411 = vmatprep.subr.bf16.mxu0 0
        %1412 = vmatpush1.bf16.xpose.msra.mxu0 0
        %1413 = vmatprep.subr.bf16.mxu0 0
        %1414 = vmatpush1.bf16.xpose.msra.mxu0 0
        %1415 = vmatprep.subr.bf16.mxu0 0
        %1416 = vmatpush1.bf16.xpose.msra.mxu0 0
        %1417 = vmatprep.subr.bf16.mxu0 0
        %1418 = vmatpush1.bf16.xpose.msra.mxu0 0
        %1419 = vmatprep.subr.bf16.mxu0 0
        %1420 = vmatpush1.bf16.xpose.msra.mxu0 0
        %1421 = vmatprep.subr.bf16.mxu0 0
        %1422 = vmatpush1.bf16.xpose.msra.mxu0 0
        %1423 = vmatprep.subr.bf16.mxu0 0
        %1424 = vmatpush1.bf16.xpose.msra.mxu0 0
        %1425 = vmatprep.mubr.bf16.mxu0 0
        %1426 = vmatmul.mubr.bf16.gmra.mrb[0].mxu0 %v1391
        %v1427 = vpop.f32.mrb[0].mxu0
        %v1428 = vadd.f32 0.0, %v1427
        %v1429 = vpop.f32.mrb[0].mxu0
        %v1430 = vpop.f32.mrb[0].mxu0
        %v1431 = vadd.f32 0.0, %v1430
        %v1432 = vpop.f32.mrb[0].mxu0
        %1433 = vdwg.mxu0
        %v1434 = vsel %vm1234, %v1428, -1e+30
        %v1435 = vsel %vm1235, %v1431, -1e+30
        %v1436 = vsel %vm1301, %v1434, -inf
        %1437 = vmax.xlane.f32.xlu0 %v1436
        %v1438 = vpop.xlane.xlu0 %1437
        %v1439 = vsel %vm1301, %v1435, -inf
        %1440 = vmax.xlane.f32.xlu0 %v1439
        %v1441 = vpop.xlane.xlu0 %1440
        %v1442 = vsub.f32 %v1434, %v1438
        %v1443 = vsub.f32 %v1435, %v1441
        %v1444 = vmul.f32 %v1442, 1.442695
        %v1445 = vpow.pop %v1444
        %v1446 = vmul.f32 %v1443, 1.442695
        %v1447 = vpow.pop %v1446
        %v1448 = vsel %vm1301, %v1445, 0.0
        %1449 = vadd.xlane.f32.xlu0 %v1448
        %v1450 = vpop.xlane.xlu0 %1449
        %v1451 = vsel %vm1301, %v1447, 0.0
        %1452 = vadd.xlane.f32.xlu0 %v1451
        %v1453 = vpop.xlane.xlu0 %1452
        %v1454 = vrcp.pop %v1450
        %v1455 = vrcp.pop %v1453
        %v1456 = vmul.f32 %v1445, %v1454
        %v1457 = vmul.f32 %v1447, %v1455
        %v1458 = vpack.c.bf16 %v1457, %v1456
        %v1460 = vsel %vm1301, %v1458, 0
        %1462 = vmatprep.subr.bf16.mxu0 0
        %1463 = vmatpush1.bf16.msra.mxu0 %v1228
        %1464 = vmatprep.subr.bf16.mxu0 0
        %1465 = vmatpush1.bf16.msra.mxu0 0
        %1466 = vmatprep.subr.bf16.mxu0 0
        %1467 = vmatpush1.bf16.msra.mxu0 0
        %1468 = vmatprep.subr.bf16.mxu0 0
        %1469 = vmatpush1.bf16.msra.mxu0 0
        %1470 = vmatprep.subr.bf16.mxu0 0
        %1471 = vmatpush1.bf16.msra.mxu0 0
        %1472 = vmatprep.subr.bf16.mxu0 0
        %1473 = vmatpush1.bf16.msra.mxu0 0
        %1474 = vmatprep.subr.bf16.mxu0 0
        %1475 = vmatpush1.bf16.msra.mxu0 0
        %1476 = vmatprep.subr.bf16.mxu0 0
        %1477 = vmatpush1.bf16.msra.mxu0 0
        %1478 = vmatprep.subr.bf16.mxu0 0
        %1479 = vmatpush1.bf16.msra.mxu0 0
        %1480 = vmatprep.subr.bf16.mxu0 0
        %1481 = vmatpush1.bf16.msra.mxu0 0
        %1482 = vmatprep.subr.bf16.mxu0 0
        %1483 = vmatpush1.bf16.msra.mxu0 0
        %1484 = vmatprep.subr.bf16.mxu0 0
        %1485 = vmatpush1.bf16.msra.mxu0 0
        %1486 = vmatprep.subr.bf16.mxu0 0
        %1487 = vmatpush1.bf16.msra.mxu0 0
        %1488 = vmatprep.subr.bf16.mxu0 0
        %1489 = vmatpush1.bf16.msra.mxu0 0
        %1490 = vmatprep.subr.bf16.mxu0 0
        %1491 = vmatpush1.bf16.msra.mxu0 0
        %1492 = vmatprep.subr.bf16.mxu0 0
        %1493 = vmatpush1.bf16.msra.mxu0 0
        %1494 = vmatprep.mubr.bf16.mxu0 0
        %1495 = vmatmul.mubr.bf16.gmra.mrb[0].mxu0 %v1460
        %v1496 = vpop.f32.mrb[0].mxu0
        %v1497 = vadd.f32 0.0, %v1496
        %v1498 = vpop.f32.mrb[0].mxu0
        %v1499 = vpop.f32.mrb[0].mxu0
        %v1500 = vadd.f32 0.0, %v1499
        %v1501 = vpop.f32.mrb[0].mxu0
        %1502 = vdwg.mxu0
        %v1503 = vpack.c.bf16 %v1500, %v1497
        %1504 = vst [vmem:[#allocation3 + $0x8] sm:$0xff] %v1503
        %v1505 = vld [vmem:[#allocation3] sm:$0xff]
        %v1506 = vld [vmem:[#allocation3 + $0x8] sm:$0xff]
        %v1507 = vld [vmem:[%s402] sm:$0xff]
        %v1508 = vld [vmem:[%s402 + $0x8] sm:$0xff]
        %v1509 = vld [vmem:[%s402 + $0x10] sm:$0xff]
        %v1510 = vld [vmem:[%s402 + $0x18] sm:$0xff]
        %v1511 = vld [vmem:[%s402 + $0x20] sm:$0xff]
        %v1512 = vld [vmem:[%s402 + $0x28] sm:$0xff]
        %v1513 = vld [vmem:[%s402 + $0x30] sm:$0xff]
        %v1514 = vld [vmem:[%s402 + $0x38] sm:$0xff]
        %v1515 = vld [vmem:[%s402 + $0x40] sm:$0xff]
        %v1516 = vld [vmem:[%s402 + $0x48] sm:$0xff]
        %v1517 = vld [vmem:[%s402 + $0x50] sm:$0xff]
        %v1518 = vld [vmem:[%s402 + $0x58] sm:$0xff]
        %v1519 = vld [vmem:[%s402 + $0x60] sm:$0xff]
        %v1520 = vld [vmem:[%s402 + $0x68] sm:$0xff]
        %v1521 = vld [vmem:[%s402 + $0x70] sm:$0xff]
        %v1522 = vld [vmem:[%s402 + $0x78] sm:$0xff]
        %v1523 = vld [vmem:[%s402 + $0x80] sm:$0xff]
        %v1524 = vld [vmem:[%s402 + $0x88] sm:$0xff]
        %v1525 = vld [vmem:[%s402 + $0x90] sm:$0xff]
        %v1526 = vld [vmem:[%s402 + $0x98] sm:$0xff]
        %v1527 = vld [vmem:[%s402 + $0xa0] sm:$0xff]
        %v1528 = vld [vmem:[%s402 + $0xa8] sm:$0xff]
        %v1529 = vld [vmem:[%s402 + $0xb0] sm:$0xff]
        %v1530 = vld [vmem:[%s402 + $0xb8] sm:$0xff]
        %v1531 = vld [vmem:[%s402 + $0xc0] sm:$0xff]
        %v1532 = vld [vmem:[%s402 + $0xc8] sm:$0xff]
        %v1533 = vld [vmem:[%s402 + $0xd0] sm:$0xff]
        %v1534 = vld [vmem:[%s402 + $0xd8] sm:$0xff]
        %v1535 = vld [vmem:[%s402 + $0xe0] sm:$0xff]
        %v1536 = vld [vmem:[%s402 + $0xe8] sm:$0xff]
        %v1537 = vld [vmem:[%s402 + $0xf0] sm:$0xff]
        %v1538 = vld [vmem:[%s402 + $0xf8] sm:$0xff]
        %v1571 = vunpack.c.l.b16 %v1507
        %v1572 = vunpack.c.h.b16 %v1507
        %v1573 = vunpack.c.l.b16 %v1508
        %v1574 = vunpack.c.h.b16 %v1508
        %v1575 = vunpack.c.l.b16 %v1509
        %v1576 = vunpack.c.h.b16 %v1509
        %v1577 = vunpack.c.l.b16 %v1510
        %v1578 = vunpack.c.h.b16 %v1510
        %v1579 = vunpack.c.l.b16 %v1511
        %v1580 = vunpack.c.h.b16 %v1511
        %v1581 = vunpack.c.l.b16 %v1512
        %v1582 = vunpack.c.h.b16 %v1512
        %v1583 = vunpack.c.l.b16 %v1513
        %v1584 = vunpack.c.h.b16 %v1513
        %v1585 = vunpack.c.l.b16 %v1514
        %v1586 = vunpack.c.h.b16 %v1514
        %v1587 = vunpack.c.l.b16 %v1515
        %v1588 = vunpack.c.h.b16 %v1515
        %v1589 = vunpack.c.l.b16 %v1516
        %v1590 = vunpack.c.h.b16 %v1516
        %v1591 = vunpack.c.l.b16 %v1517
        %v1592 = vunpack.c.h.b16 %v1517
        %v1593 = vunpack.c.l.b16 %v1518
        %v1594 = vunpack.c.h.b16 %v1518
        %v1595 = vunpack.c.l.b16 %v1519
        %v1596 = vunpack.c.h.b16 %v1519
        %v1597 = vunpack.c.l.b16 %v1520
        %v1598 = vunpack.c.h.b16 %v1520
        %v1599 = vunpack.c.l.b16 %v1521
        %v1600 = vunpack.c.h.b16 %v1521
        %v1601 = vunpack.c.l.b16 %v1522
        %v1602 = vunpack.c.h.b16 %v1522
        %v1603 = vunpack.c.l.b16 %v1523
        %v1604 = vunpack.c.h.b16 %v1523
        %v1605 = vunpack.c.l.b16 %v1524
        %v1606 = vunpack.c.h.b16 %v1524
        %v1607 = vunpack.c.l.b16 %v1525
        %v1608 = vunpack.c.h.b16 %v1525
        %v1609 = vunpack.c.l.b16 %v1526
        %v1610 = vunpack.c.h.b16 %v1526
        %v1611 = vunpack.c.l.b16 %v1527
        %v1612 = vunpack.c.h.b16 %v1527
        %v1613 = vunpack.c.l.b16 %v1528
        %v1614 = vunpack.c.h.b16 %v1528
        %v1615 = vunpack.c.l.b16 %v1529
        %v1616 = vunpack.c.h.b16 %v1529
        %v1617 = vunpack.c.l.b16 %v1530
        %v1618 = vunpack.c.h.b16 %v1530
        %v1619 = vunpack.c.l.b16 %v1531
        %v1620 = vunpack.c.h.b16 %v1531
        %v1621 = vunpack.c.l.b16 %v1532
        %v1622 = vunpack.c.h.b16 %v1532
        %v1623 = vunpack.c.l.b16 %v1533
        %v1624 = vunpack.c.h.b16 %v1533
        %v1625 = vunpack.c.l.b16 %v1534
        %v1626 = vunpack.c.h.b16 %v1534
        %v1627 = vunpack.c.l.b16 %v1535
        %v1628 = vunpack.c.h.b16 %v1535
        %v1629 = vunpack.c.l.b16 %v1536
        %v1630 = vunpack.c.h.b16 %v1536
        %v1631 = vunpack.c.l.b16 %v1537
        %v1632 = vunpack.c.h.b16 %v1537
        %v1633 = vunpack.c.l.b16 %v1538
        %v1634 = vunpack.c.h.b16 %v1538
        %v1635 = vpack.c.b16 %v1573, %v1571
        %v1636 = vpack.c.b16 %v1574, %v1572
        %v1637 = vpack.c.b16 %v1577, %v1575
        %v1638 = vpack.c.b16 %v1578, %v1576
        %v1639 = vpack.c.b16 %v1581, %v1579
        %v1640 = vpack.c.b16 %v1582, %v1580
        %v1641 = vpack.c.b16 %v1585, %v1583
        %v1642 = vpack.c.b16 %v1586, %v1584
        %v1643 = vpack.c.b16 %v1589, %v1587
        %v1644 = vpack.c.b16 %v1590, %v1588
        %v1645 = vpack.c.b16 %v1593, %v1591
        %v1646 = vpack.c.b16 %v1594, %v1592
        %v1647 = vpack.c.b16 %v1597, %v1595
        %v1648 = vpack.c.b16 %v1598, %v1596
        %v1649 = vpack.c.b16 %v1601, %v1599
        %v1650 = vpack.c.b16 %v1602, %v1600
        %v1651 = vpack.c.b16 %v1605, %v1603
        %v1652 = vpack.c.b16 %v1606, %v1604
        %v1653 = vpack.c.b16 %v1609, %v1607
        %v1654 = vpack.c.b16 %v1610, %v1608
        %v1655 = vpack.c.b16 %v1613, %v1611
        %v1656 = vpack.c.b16 %v1614, %v1612
        %v1657 = vpack.c.b16 %v1617, %v1615
        %v1658 = vpack.c.b16 %v1618, %v1616
        %v1659 = vpack.c.b16 %v1621, %v1619
        %v1660 = vpack.c.b16 %v1622, %v1620
        %v1661 = vpack.c.b16 %v1625, %v1623
        %v1662 = vpack.c.b16 %v1626, %v1624
        %v1663 = vpack.c.b16 %v1629, %v1627
        %v1664 = vpack.c.b16 %v1630, %v1628
        %v1665 = vpack.c.b16 %v1633, %v1631
        %v1666 = vpack.c.b16 %v1634, %v1632
        %1699 = vmatprep.subr.bf16.mxu0 %v1636
        %1700 = vmatpush1.bf16.msra.mxu0 %v1635
        %1701 = vmatprep.subr.bf16.mxu0 %v1638
        %1702 = vmatpush1.bf16.msra.mxu0 %v1637
        %1703 = vmatprep.subr.bf16.mxu0 %v1640
        %1704 = vmatpush1.bf16.msra.mxu0 %v1639
        %1705 = vmatprep.subr.bf16.mxu0 %v1642
        %1706 = vmatpush1.bf16.msra.mxu0 %v1641
        %1707 = vmatprep.subr.bf16.mxu0 %v1644
        %1708 = vmatpush1.bf16.msra.mxu0 %v1643
        %1709 = vmatprep.subr.bf16.mxu0 %v1646
        %1710 = vmatpush1.bf16.msra.mxu0 %v1645
        %1711 = vmatprep.subr.bf16.mxu0 %v1648
        %1712 = vmatpush1.bf16.msra.mxu0 %v1647
        %1713 = vmatprep.subr.bf16.mxu0 %v1650
        %1714 = vmatpush1.bf16.msra.mxu0 %v1649
        %1715 = vmatprep.subr.bf16.mxu0 %v1652
        %1716 = vmatpush1.bf16.msra.mxu0 %v1651
        %1717 = vmatprep.subr.bf16.mxu0 %v1654
        %1718 = vmatpush1.bf16.msra.mxu0 %v1653
        %1719 = vmatprep.subr.bf16.mxu0 %v1656
        %1720 = vmatpush1.bf16.msra.mxu0 %v1655
        %1721 = vmatprep.subr.bf16.mxu0 %v1658
        %1722 = vmatpush1.bf16.msra.mxu0 %v1657
        %1723 = vmatprep.subr.bf16.mxu0 %v1660
        %1724 = vmatpush1.bf16.msra.mxu0 %v1659
        %1725 = vmatprep.subr.bf16.mxu0 %v1662
        %1726 = vmatpush1.bf16.msra.mxu0 %v1661
        %1727 = vmatprep.subr.bf16.mxu0 %v1664
        %1728 = vmatpush1.bf16.msra.mxu0 %v1663
        %1729 = vmatprep.subr.bf16.mxu0 %v1666
        %1730 = vmatpush1.bf16.msra.mxu0 %v1665
        %1731 = vmatprep.mubr.bf16.mxu0 %v1506
        %1732 = vmatmul.mubr.bf16.gmra.mrb[0].mxu0 %v1505
        %v1733 = vpop.f32.mrb[0].mxu0
        %v1734 = vadd.f32 0.0, %v1733
        %v1735 = vpop.f32.mrb[0].mxu0
        %v1736 = vadd.f32 0.0, %v1735
        %v1737 = vpop.f32.mrb[0].mxu0
        %v1738 = vadd.f32 0.0, %v1737
        %v1739 = vpop.f32.mrb[0].mxu0
        %v1740 = vadd.f32 0.0, %v1739
        %1741 = vdwg.mxu0
        %v1742 = vadd.f32 %v491, %v1734
        %v1743 = vadd.f32 %v492, %v1736
        %v1744 = vadd.f32 %v493, %v1738
        %v1745 = vadd.f32 %v494, %v1740
        %v1746 = vmul.f32 %v1742, %v1742
        %v1747 = vmul.f32 %v1743, %v1743
        %v1748 = vmul.f32 %v1744, %v1744
        %v1749 = vmul.f32 %v1745, %v1745
        %v1750 = vadd.f32 %v1746, %v1747
        %1751 = vadd.xlane.f32.xlu0 %v1750
        %v1752 = vpop.xlane.xlu0 %1751
        %v1753 = vadd.f32 %v1748, %v1749
        %1754 = vadd.xlane.f32.xlu0 %v1753
        %v1755 = vpop.xlane.xlu0 %1754
        %v1756 = vmul.f32 %v1752, %v505
        %v1757 = vmul.f32 %v1755, %v505
        %v1758 = vadd.f32 %v1756, 1e-06
        %v1759 = vadd.f32 %v1757, 1e-06
        %v1760 = vrsqrt.pop %v1758
        %v1761 = vrsqrt.pop %v1759
        %v1762 = vmul.f32 %v1742, %v1760
        %v1763 = vmul.f32 %v1743, %v1760
        %v1764 = vmul.f32 %v1744, %v1761
        %v1765 = vmul.f32 %v1745, %v1761
        %v1766 = vpack.c.bf16 %v1764, %v1762
        %v1767 = vpack.c.bf16 %v1765, %v1763
        %v1768 = vld [vmem:[%s411] sm:$0xff]
        %v1769 = vld [vmem:[%s411 + $0x8] sm:$0xff]
        %v1770 = vld [vmem:[%s411 + $0x10] sm:$0xff]
        %v1771 = vld [vmem:[%s411 + $0x18] sm:$0xff]
        %v1772 = vld [vmem:[%s411 + $0x20] sm:$0xff]
        %v1773 = vld [vmem:[%s411 + $0x28] sm:$0xff]
        %v1774 = vld [vmem:[%s411 + $0x30] sm:$0xff]
        %v1775 = vld [vmem:[%s411 + $0x38] sm:$0xff]
        %v1776 = vld [vmem:[%s411 + $0x40] sm:$0xff]
        %v1777 = vld [vmem:[%s411 + $0x48] sm:$0xff]
        %v1778 = vld [vmem:[%s411 + $0x50] sm:$0xff]
        %v1779 = vld [vmem:[%s411 + $0x58] sm:$0xff]
        %v1780 = vld [vmem:[%s411 + $0x60] sm:$0xff]
        %v1781 = vld [vmem:[%s411 + $0x68] sm:$0xff]
        %v1782 = vld [vmem:[%s411 + $0x70] sm:$0xff]
        %v1783 = vld [vmem:[%s411 + $0x78] sm:$0xff]
        %v1784 = vld [vmem:[%s411 + $0x80] sm:$0xff]
        %v1785 = vld [vmem:[%s411 + $0x88] sm:$0xff]
        %v1786 = vld [vmem:[%s411 + $0x90] sm:$0xff]
        %v1787 = vld [vmem:[%s411 + $0x98] sm:$0xff]
        %v1788 = vld [vmem:[%s411 + $0xa0] sm:$0xff]
        %v1789 = vld [vmem:[%s411 + $0xa8] sm:$0xff]
        %v1790 = vld [vmem:[%s411 + $0xb0] sm:$0xff]
        %v1791 = vld [vmem:[%s411 + $0xb8] sm:$0xff]
        %v1792 = vld [vmem:[%s411 + $0xc0] sm:$0xff]
        %v1793 = vld [vmem:[%s411 + $0xc8] sm:$0xff]
        %v1794 = vld [vmem:[%s411 + $0xd0] sm:$0xff]
        %v1795 = vld [vmem:[%s411 + $0xd8] sm:$0xff]
        %v1796 = vld [vmem:[%s411 + $0xe0] sm:$0xff]
        %v1797 = vld [vmem:[%s411 + $0xe8] sm:$0xff]
        %v1798 = vld [vmem:[%s411 + $0xf0] sm:$0xff]
        %v1799 = vld [vmem:[%s411 + $0xf8] sm:$0xff]
        %v1800 = vld [vmem:[%s411 + $0x100] sm:$0xff]
        %v1801 = vld [vmem:[%s411 + $0x108] sm:$0xff]
        %v1802 = vld [vmem:[%s411 + $0x110] sm:$0xff]
        %v1803 = vld [vmem:[%s411 + $0x118] sm:$0xff]
        %v1804 = vld [vmem:[%s411 + $0x120] sm:$0xff]
        %v1805 = vld [vmem:[%s411 + $0x128] sm:$0xff]
        %v1806 = vld [vmem:[%s411 + $0x130] sm:$0xff]
        %v1807 = vld [vmem:[%s411 + $0x138] sm:$0xff]
        %v1808 = vld [vmem:[%s411 + $0x140] sm:$0xff]
        %v1809 = vld [vmem:[%s411 + $0x148] sm:$0xff]
        %v1810 = vld [vmem:[%s411 + $0x150] sm:$0xff]
        %v1811 = vld [vmem:[%s411 + $0x158] sm:$0xff]
        %v1812 = vld [vmem:[%s411 + $0x160] sm:$0xff]
        %v1813 = vld [vmem:[%s411 + $0x168] sm:$0xff]
        %v1814 = vld [vmem:[%s411 + $0x170] sm:$0xff]
        %v1815 = vld [vmem:[%s411 + $0x178] sm:$0xff]
        %v1816 = vld [vmem:[%s411 + $0x180] sm:$0xff]
        %v1817 = vld [vmem:[%s411 + $0x188] sm:$0xff]
        %v1818 = vld [vmem:[%s411 + $0x190] sm:$0xff]
        %v1819 = vld [vmem:[%s411 + $0x198] sm:$0xff]
        %v1820 = vld [vmem:[%s411 + $0x1a0] sm:$0xff]
        %v1821 = vld [vmem:[%s411 + $0x1a8] sm:$0xff]
        %v1822 = vld [vmem:[%s411 + $0x1b0] sm:$0xff]
        %v1823 = vld [vmem:[%s411 + $0x1b8] sm:$0xff]
        %v1824 = vld [vmem:[%s411 + $0x1c0] sm:$0xff]
        %v1825 = vld [vmem:[%s411 + $0x1c8] sm:$0xff]
        %v1826 = vld [vmem:[%s411 + $0x1d0] sm:$0xff]
        %v1827 = vld [vmem:[%s411 + $0x1d8] sm:$0xff]
        %v1828 = vld [vmem:[%s411 + $0x1e0] sm:$0xff]
        %v1829 = vld [vmem:[%s411 + $0x1e8] sm:$0xff]
        %v1830 = vld [vmem:[%s411 + $0x1f0] sm:$0xff]
        %v1831 = vld [vmem:[%s411 + $0x1f8] sm:$0xff]
        %v1832 = vld [vmem:[%s411 + $0x200] sm:$0xff]
        %v1833 = vld [vmem:[%s411 + $0x208] sm:$0xff]
        %v1834 = vld [vmem:[%s411 + $0x210] sm:$0xff]
        %v1835 = vld [vmem:[%s411 + $0x218] sm:$0xff]
        %v1836 = vld [vmem:[%s411 + $0x220] sm:$0xff]
        %v1837 = vld [vmem:[%s411 + $0x228] sm:$0xff]
        %v1838 = vld [vmem:[%s411 + $0x230] sm:$0xff]
        %v1839 = vld [vmem:[%s411 + $0x238] sm:$0xff]
        %v1840 = vld [vmem:[%s411 + $0x240] sm:$0xff]
        %v1841 = vld [vmem:[%s411 + $0x248] sm:$0xff]
        %v1842 = vld [vmem:[%s411 + $0x250] sm:$0xff]
        %v1843 = vld [vmem:[%s411 + $0x258] sm:$0xff]
        %v1844 = vld [vmem:[%s411 + $0x260] sm:$0xff]
        %v1845 = vld [vmem:[%s411 + $0x268] sm:$0xff]
        %v1846 = vld [vmem:[%s411 + $0x270] sm:$0xff]
        %v1847 = vld [vmem:[%s411 + $0x278] sm:$0xff]
        %v1848 = vld [vmem:[%s411 + $0x280] sm:$0xff]
        %v1849 = vld [vmem:[%s411 + $0x288] sm:$0xff]
        %v1850 = vld [vmem:[%s411 + $0x290] sm:$0xff]
        %v1851 = vld [vmem:[%s411 + $0x298] sm:$0xff]
        %v1852 = vld [vmem:[%s411 + $0x2a0] sm:$0xff]
        %v1853 = vld [vmem:[%s411 + $0x2a8] sm:$0xff]
        %v1854 = vld [vmem:[%s411 + $0x2b0] sm:$0xff]
        %v1855 = vld [vmem:[%s411 + $0x2b8] sm:$0xff]
        %v1856 = vld [vmem:[%s411 + $0x2c0] sm:$0xff]
        %v1857 = vld [vmem:[%s411 + $0x2c8] sm:$0xff]
        %v1858 = vld [vmem:[%s411 + $0x2d0] sm:$0xff]
        %v1859 = vld [vmem:[%s411 + $0x2d8] sm:$0xff]
        %v1860 = vld [vmem:[%s411 + $0x2e0] sm:$0xff]
        %v1861 = vld [vmem:[%s411 + $0x2e8] sm:$0xff]
        %v1862 = vld [vmem:[%s411 + $0x2f0] sm:$0xff]
        %v1863 = vld [vmem:[%s411 + $0x2f8] sm:$0xff]
        %v1864 = vld [vmem:[%s411 + $0x300] sm:$0xff]
        %v1865 = vld [vmem:[%s411 + $0x308] sm:$0xff]
        %v1866 = vld [vmem:[%s411 + $0x310] sm:$0xff]
        %v1867 = vld [vmem:[%s411 + $0x318] sm:$0xff]
        %v1868 = vld [vmem:[%s411 + $0x320] sm:$0xff]
        %v1869 = vld [vmem:[%s411 + $0x328] sm:$0xff]
        %v1870 = vld [vmem:[%s411 + $0x330] sm:$0xff]
        %v1871 = vld [vmem:[%s411 + $0x338] sm:$0xff]
        %v1872 = vld [vmem:[%s411 + $0x340] sm:$0xff]
        %v1873 = vld [vmem:[%s411 + $0x348] sm:$0xff]
        %v1874 = vld [vmem:[%s411 + $0x350] sm:$0xff]
        %v1875 = vld [vmem:[%s411 + $0x358] sm:$0xff]
        %v1876 = vld [vmem:[%s411 + $0x360] sm:$0xff]
        %v1877 = vld [vmem:[%s411 + $0x368] sm:$0xff]
        %v1878 = vld [vmem:[%s411 + $0x370] sm:$0xff]
        %v1879 = vld [vmem:[%s411 + $0x378] sm:$0xff]
        %v1880 = vld [vmem:[%s411 + $0x380] sm:$0xff]
        %v1881 = vld [vmem:[%s411 + $0x388] sm:$0xff]
        %v1882 = vld [vmem:[%s411 + $0x390] sm:$0xff]
        %v1883 = vld [vmem:[%s411 + $0x398] sm:$0xff]
        %v1884 = vld [vmem:[%s411 + $0x3a0] sm:$0xff]
        %v1885 = vld [vmem:[%s411 + $0x3a8] sm:$0xff]
        %v1886 = vld [vmem:[%s411 + $0x3b0] sm:$0xff]
        %v1887 = vld [vmem:[%s411 + $0x3b8] sm:$0xff]
        %v1888 = vld [vmem:[%s411 + $0x3c0] sm:$0xff]
        %v1889 = vld [vmem:[%s411 + $0x3c8] sm:$0xff]
        %v1890 = vld [vmem:[%s411 + $0x3d0] sm:$0xff]
        %v1891 = vld [vmem:[%s411 + $0x3d8] sm:$0xff]
        %v1892 = vld [vmem:[%s411 + $0x3e0] sm:$0xff]
        %v1893 = vld [vmem:[%s411 + $0x3e8] sm:$0xff]
        %v1894 = vld [vmem:[%s411 + $0x3f0] sm:$0xff]
        %v1895 = vld [vmem:[%s411 + $0x3f8] sm:$0xff]
        %v2024 = vunpack.c.l.b16 %v1768
        %v2025 = vunpack.c.h.b16 %v1768
        %v2026 = vunpack.c.l.b16 %v1769
        %v2027 = vunpack.c.h.b16 %v1769
        %v2028 = vunpack.c.l.b16 %v1770
        %v2029 = vunpack.c.h.b16 %v1770
        %v2030 = vunpack.c.l.b16 %v1771
        %v2031 = vunpack.c.h.b16 %v1771
        %v2032 = vunpack.c.l.b16 %v1772
        %v2033 = vunpack.c.h.b16 %v1772
        %v2034 = vunpack.c.l.b16 %v1773
        %v2035 = vunpack.c.h.b16 %v1773
        %v2036 = vunpack.c.l.b16 %v1774
        %v2037 = vunpack.c.h.b16 %v1774
        %v2038 = vunpack.c.l.b16 %v1775
        %v2039 = vunpack.c.h.b16 %v1775
        %v2040 = vunpack.c.l.b16 %v1776
        %v2041 = vunpack.c.h.b16 %v1776
        %v2042 = vunpack.c.l.b16 %v1777
        %v2043 = vunpack.c.h.b16 %v1777
        %v2044 = vunpack.c.l.b16 %v1778
        %v2045 = vunpack.c.h.b16 %v1778
        %v2046 = vunpack.c.l.b16 %v1779
        %v2047 = vunpack.c.h.b16 %v1779
        %v2048 = vunpack.c.l.b16 %v1780
        %v2049 = vunpack.c.h.b16 %v1780
        %v2050 = vunpack.c.l.b16 %v1781
        %v2051 = vunpack.c.h.b16 %v1781
        %v2052 = vunpack.c.l.b16 %v1782
        %v2053 = vunpack.c.h.b16 %v1782
        %v2054 = vunpack.c.l.b16 %v1783
        %v2055 = vunpack.c.h.b16 %v1783
        %v2056 = vunpack.c.l.b16 %v1784
        %v2057 = vunpack.c.h.b16 %v1784
        %v2058 = vunpack.c.l.b16 %v1785
        %v2059 = vunpack.c.h.b16 %v1785
        %v2060 = vunpack.c.l.b16 %v1786
        %v2061 = vunpack.c.h.b16 %v1786
        %v2062 = vunpack.c.l.b16 %v1787
        %v2063 = vunpack.c.h.b16 %v1787
        %v2064 = vunpack.c.l.b16 %v1788
        %v2065 = vunpack.c.h.b16 %v1788
        %v2066 = vunpack.c.l.b16 %v1789
        %v2067 = vunpack.c.h.b16 %v1789
        %v2068 = vunpack.c.l.b16 %v1790
        %v2069 = vunpack.c.h.b16 %v1790
        %v2070 = vunpack.c.l.b16 %v1791
        %v2071 = vunpack.c.h.b16 %v1791
        %v2072 = vunpack.c.l.b16 %v1792
        %v2073 = vunpack.c.h.b16 %v1792
        %v2074 = vunpack.c.l.b16 %v1793
        %v2075 = vunpack.c.h.b16 %v1793
        %v2076 = vunpack.c.l.b16 %v1794
        %v2077 = vunpack.c.h.b16 %v1794
        %v2078 = vunpack.c.l.b16 %v1795
        %v2079 = vunpack.c.h.b16 %v1795
        %v2080 = vunpack.c.l.b16 %v1796
        %v2081 = vunpack.c.h.b16 %v1796
        %v2082 = vunpack.c.l.b16 %v1797
        %v2083 = vunpack.c.h.b16 %v1797
        %v2084 = vunpack.c.l.b16 %v1798
        %v2085 = vunpack.c.h.b16 %v1798
        %v2086 = vunpack.c.l.b16 %v1799
        %v2087 = vunpack.c.h.b16 %v1799
        %v2088 = vunpack.c.l.b16 %v1800
        %v2089 = vunpack.c.h.b16 %v1800
        %v2090 = vunpack.c.l.b16 %v1801
        %v2091 = vunpack.c.h.b16 %v1801
        %v2092 = vunpack.c.l.b16 %v1802
        %v2093 = vunpack.c.h.b16 %v1802
        %v2094 = vunpack.c.l.b16 %v1803
        %v2095 = vunpack.c.h.b16 %v1803
        %v2096 = vunpack.c.l.b16 %v1804
        %v2097 = vunpack.c.h.b16 %v1804
        %v2098 = vunpack.c.l.b16 %v1805
        %v2099 = vunpack.c.h.b16 %v1805
        %v2100 = vunpack.c.l.b16 %v1806
        %v2101 = vunpack.c.h.b16 %v1806
        %v2102 = vunpack.c.l.b16 %v1807
        %v2103 = vunpack.c.h.b16 %v1807
        %v2104 = vunpack.c.l.b16 %v1808
        %v2105 = vunpack.c.h.b16 %v1808
        %v2106 = vunpack.c.l.b16 %v1809
        %v2107 = vunpack.c.h.b16 %v1809
        %v2108 = vunpack.c.l.b16 %v1810
        %v2109 = vunpack.c.h.b16 %v1810
        %v2110 = vunpack.c.l.b16 %v1811
        %v2111 = vunpack.c.h.b16 %v1811
        %v2112 = vunpack.c.l.b16 %v1812
        %v2113 = vunpack.c.h.b16 %v1812
        %v2114 = vunpack.c.l.b16 %v1813
        %v2115 = vunpack.c.h.b16 %v1813
        %v2116 = vunpack.c.l.b16 %v1814
        %v2117 = vunpack.c.h.b16 %v1814
        %v2118 = vunpack.c.l.b16 %v1815
        %v2119 = vunpack.c.h.b16 %v1815
        %v2120 = vunpack.c.l.b16 %v1816
        %v2121 = vunpack.c.h.b16 %v1816
        %v2122 = vunpack.c.l.b16 %v1817
        %v2123 = vunpack.c.h.b16 %v1817
        %v2124 = vunpack.c.l.b16 %v1818
        %v2125 = vunpack.c.h.b16 %v1818
        %v2126 = vunpack.c.l.b16 %v1819
        %v2127 = vunpack.c.h.b16 %v1819
        %v2128 = vunpack.c.l.b16 %v1820
        %v2129 = vunpack.c.h.b16 %v1820
        %v2130 = vunpack.c.l.b16 %v1821
        %v2131 = vunpack.c.h.b16 %v1821
        %v2132 = vunpack.c.l.b16 %v1822
        %v2133 = vunpack.c.h.b16 %v1822
        %v2134 = vunpack.c.l.b16 %v1823
        %v2135 = vunpack.c.h.b16 %v1823
        %v2136 = vunpack.c.l.b16 %v1824
        %v2137 = vunpack.c.h.b16 %v1824
        %v2138 = vunpack.c.l.b16 %v1825
        %v2139 = vunpack.c.h.b16 %v1825
        %v2140 = vunpack.c.l.b16 %v1826
        %v2141 = vunpack.c.h.b16 %v1826
        %v2142 = vunpack.c.l.b16 %v1827
        %v2143 = vunpack.c.h.b16 %v1827
        %v2144 = vunpack.c.l.b16 %v1828
        %v2145 = vunpack.c.h.b16 %v1828
        %v2146 = vunpack.c.l.b16 %v1829
        %v2147 = vunpack.c.h.b16 %v1829
        %v2148 = vunpack.c.l.b16 %v1830
        %v2149 = vunpack.c.h.b16 %v1830
        %v2150 = vunpack.c.l.b16 %v1831
        %v2151 = vunpack.c.h.b16 %v1831
        %v2152 = vunpack.c.l.b16 %v1832
        %v2153 = vunpack.c.h.b16 %v1832
        %v2154 = vunpack.c.l.b16 %v1833
        %v2155 = vunpack.c.h.b16 %v1833
        %v2156 = vunpack.c.l.b16 %v1834
        %v2157 = vunpack.c.h.b16 %v1834
        %v2158 = vunpack.c.l.b16 %v1835
        %v2159 = vunpack.c.h.b16 %v1835
        %v2160 = vunpack.c.l.b16 %v1836
        %v2161 = vunpack.c.h.b16 %v1836
        %v2162 = vunpack.c.l.b16 %v1837
        %v2163 = vunpack.c.h.b16 %v1837
        %v2164 = vunpack.c.l.b16 %v1838
        %v2165 = vunpack.c.h.b16 %v1838
        %v2166 = vunpack.c.l.b16 %v1839
        %v2167 = vunpack.c.h.b16 %v1839
        %v2168 = vunpack.c.l.b16 %v1840
        %v2169 = vunpack.c.h.b16 %v1840
        %v2170 = vunpack.c.l.b16 %v1841
        %v2171 = vunpack.c.h.b16 %v1841
        %v2172 = vunpack.c.l.b16 %v1842
        %v2173 = vunpack.c.h.b16 %v1842
        %v2174 = vunpack.c.l.b16 %v1843
        %v2175 = vunpack.c.h.b16 %v1843
        %v2176 = vunpack.c.l.b16 %v1844
        %v2177 = vunpack.c.h.b16 %v1844
        %v2178 = vunpack.c.l.b16 %v1845
        %v2179 = vunpack.c.h.b16 %v1845
        %v2180 = vunpack.c.l.b16 %v1846
        %v2181 = vunpack.c.h.b16 %v1846
        %v2182 = vunpack.c.l.b16 %v1847
        %v2183 = vunpack.c.h.b16 %v1847
        %v2184 = vunpack.c.l.b16 %v1848
        %v2185 = vunpack.c.h.b16 %v1848
        %v2186 = vunpack.c.l.b16 %v1849
        %v2187 = vunpack.c.h.b16 %v1849
        %v2188 = vunpack.c.l.b16 %v1850
        %v2189 = vunpack.c.h.b16 %v1850
        %v2190 = vunpack.c.l.b16 %v1851
        %v2191 = vunpack.c.h.b16 %v1851
        %v2192 = vunpack.c.l.b16 %v1852
        %v2193 = vunpack.c.h.b16 %v1852
        %v2194 = vunpack.c.l.b16 %v1853
        %v2195 = vunpack.c.h.b16 %v1853
        %v2196 = vunpack.c.l.b16 %v1854
        %v2197 = vunpack.c.h.b16 %v1854
        %v2198 = vunpack.c.l.b16 %v1855
        %v2199 = vunpack.c.h.b16 %v1855
        %v2200 = vunpack.c.l.b16 %v1856
        %v2201 = vunpack.c.h.b16 %v1856
        %v2202 = vunpack.c.l.b16 %v1857
        %v2203 = vunpack.c.h.b16 %v1857
        %v2204 = vunpack.c.l.b16 %v1858
        %v2205 = vunpack.c.h.b16 %v1858
        %v2206 = vunpack.c.l.b16 %v1859
        %v2207 = vunpack.c.h.b16 %v1859
        %v2208 = vunpack.c.l.b16 %v1860
        %v2209 = vunpack.c.h.b16 %v1860
        %v2210 = vunpack.c.l.b16 %v1861
        %v2211 = vunpack.c.h.b16 %v1861
        %v2212 = vunpack.c.l.b16 %v1862
        %v2213 = vunpack.c.h.b16 %v1862
        %v2214 = vunpack.c.l.b16 %v1863
        %v2215 = vunpack.c.h.b16 %v1863
        %v2216 = vunpack.c.l.b16 %v1864
        %v2217 = vunpack.c.h.b16 %v1864
        %v2218 = vunpack.c.l.b16 %v1865
        %v2219 = vunpack.c.h.b16 %v1865
        %v2220 = vunpack.c.l.b16 %v1866
        %v2221 = vunpack.c.h.b16 %v1866
        %v2222 = vunpack.c.l.b16 %v1867
        %v2223 = vunpack.c.h.b16 %v1867
        %v2224 = vunpack.c.l.b16 %v1868
        %v2225 = vunpack.c.h.b16 %v1868
        %v2226 = vunpack.c.l.b16 %v1869
        %v2227 = vunpack.c.h.b16 %v1869
        %v2228 = vunpack.c.l.b16 %v1870
        %v2229 = vunpack.c.h.b16 %v1870
        %v2230 = vunpack.c.l.b16 %v1871
        %v2231 = vunpack.c.h.b16 %v1871
        %v2232 = vunpack.c.l.b16 %v1872
        %v2233 = vunpack.c.h.b16 %v1872
        %v2234 = vunpack.c.l.b16 %v1873
        %v2235 = vunpack.c.h.b16 %v1873
        %v2236 = vunpack.c.l.b16 %v1874
        %v2237 = vunpack.c.h.b16 %v1874
        %v2238 = vunpack.c.l.b16 %v1875
        %v2239 = vunpack.c.h.b16 %v1875
        %v2240 = vunpack.c.l.b16 %v1876
        %v2241 = vunpack.c.h.b16 %v1876
        %v2242 = vunpack.c.l.b16 %v1877
        %v2243 = vunpack.c.h.b16 %v1877
        %v2244 = vunpack.c.l.b16 %v1878
        %v2245 = vunpack.c.h.b16 %v1878
        %v2246 = vunpack.c.l.b16 %v1879
        %v2247 = vunpack.c.h.b16 %v1879
        %v2248 = vunpack.c.l.b16 %v1880
        %v2249 = vunpack.c.h.b16 %v1880
        %v2250 = vunpack.c.l.b16 %v1881
        %v2251 = vunpack.c.h.b16 %v1881
        %v2252 = vunpack.c.l.b16 %v1882
        %v2253 = vunpack.c.h.b16 %v1882
        %v2254 = vunpack.c.l.b16 %v1883
        %v2255 = vunpack.c.h.b16 %v1883
        %v2256 = vunpack.c.l.b16 %v1884
        %v2257 = vunpack.c.h.b16 %v1884
        %v2258 = vunpack.c.l.b16 %v1885
        %v2259 = vunpack.c.h.b16 %v1885
        %v2260 = vunpack.c.l.b16 %v1886
        %v2261 = vunpack.c.h.b16 %v1886
        %v2262 = vunpack.c.l.b16 %v1887
        %v2263 = vunpack.c.h.b16 %v1887
        %v2264 = vunpack.c.l.b16 %v1888
        %v2265 = vunpack.c.h.b16 %v1888
        %v2266 = vunpack.c.l.b16 %v1889
        %v2267 = vunpack.c.h.b16 %v1889
        %v2268 = vunpack.c.l.b16 %v1890
        %v2269 = vunpack.c.h.b16 %v1890
        %v2270 = vunpack.c.l.b16 %v1891
        %v2271 = vunpack.c.h.b16 %v1891
        %v2272 = vunpack.c.l.b16 %v1892
        %v2273 = vunpack.c.h.b16 %v1892
        %v2274 = vunpack.c.l.b16 %v1893
        %v2275 = vunpack.c.h.b16 %v1893
        %v2276 = vunpack.c.l.b16 %v1894
        %v2277 = vunpack.c.h.b16 %v1894
        %v2278 = vunpack.c.l.b16 %v1895
        %v2279 = vunpack.c.h.b16 %v1895
        %v2280 = vpack.c.b16 %v2032, %v2024
        %v2281 = vpack.c.b16 %v2033, %v2025
        %v2282 = vpack.c.b16 %v2034, %v2026
        %v2283 = vpack.c.b16 %v2035, %v2027
        %v2284 = vpack.c.b16 %v2036, %v2028
        %v2285 = vpack.c.b16 %v2037, %v2029
        %v2286 = vpack.c.b16 %v2038, %v2030
        %v2287 = vpack.c.b16 %v2039, %v2031
        %v2288 = vpack.c.b16 %v2048, %v2040
        %v2289 = vpack.c.b16 %v2049, %v2041
        %v2290 = vpack.c.b16 %v2050, %v2042
        %v2291 = vpack.c.b16 %v2051, %v2043
        %v2292 = vpack.c.b16 %v2052, %v2044
        %v2293 = vpack.c.b16 %v2053, %v2045
        %v2294 = vpack.c.b16 %v2054, %v2046
        %v2295 = vpack.c.b16 %v2055, %v2047
        %v2296 = vpack.c.b16 %v2064, %v2056
        %v2297 = vpack.c.b16 %v2065, %v2057
        %v2298 = vpack.c.b16 %v2066, %v2058
        %v2299 = vpack.c.b16 %v2067, %v2059
        %v2300 = vpack.c.b16 %v2068, %v2060
        %v2301 = vpack.c.b16 %v2069, %v2061
        %v2302 = vpack.c.b16 %v2070, %v2062
        %v2303 = vpack.c.b16 %v2071, %v2063
        %v2304 = vpack.c.b16 %v2080, %v2072
        %v2305 = vpack.c.b16 %v2081, %v2073
        %v2306 = vpack.c.b16 %v2082, %v2074
        %v2307 = vpack.c.b16 %v2083, %v2075
        %v2308 = vpack.c.b16 %v2084, %v2076
        %v2309 = vpack.c.b16 %v2085, %v2077
        %v2310 = vpack.c.b16 %v2086, %v2078
        %v2311 = vpack.c.b16 %v2087, %v2079
        %v2312 = vpack.c.b16 %v2096, %v2088
        %v2313 = vpack.c.b16 %v2097, %v2089
        %v2314 = vpack.c.b16 %v2098, %v2090
        %v2315 = vpack.c.b16 %v2099, %v2091
        %v2316 = vpack.c.b16 %v2100, %v2092
        %v2317 = vpack.c.b16 %v2101, %v2093
        %v2318 = vpack.c.b16 %v2102, %v2094
        %v2319 = vpack.c.b16 %v2103, %v2095
        %v2320 = vpack.c.b16 %v2112, %v2104
        %v2321 = vpack.c.b16 %v2113, %v2105
        %v2322 = vpack.c.b16 %v2114, %v2106
        %v2323 = vpack.c.b16 %v2115, %v2107
        %v2324 = vpack.c.b16 %v2116, %v2108
        %v2325 = vpack.c.b16 %v2117, %v2109
        %v2326 = vpack.c.b16 %v2118, %v2110
        %v2327 = vpack.c.b16 %v2119, %v2111
        %v2328 = vpack.c.b16 %v2128, %v2120
        %v2329 = vpack.c.b16 %v2129, %v2121
        %v2330 = vpack.c.b16 %v2130, %v2122
        %v2331 = vpack.c.b16 %v2131, %v2123
        %v2332 = vpack.c.b16 %v2132, %v2124
        %v2333 = vpack.c.b16 %v2133, %v2125
        %v2334 = vpack.c.b16 %v2134, %v2126
        %v2335 = vpack.c.b16 %v2135, %v2127
        %v2336 = vpack.c.b16 %v2144, %v2136
        %v2337 = vpack.c.b16 %v2145, %v2137
        %v2338 = vpack.c.b16 %v2146, %v2138
        %v2339 = vpack.c.b16 %v2147, %v2139
        %v2340 = vpack.c.b16 %v2148, %v2140
        %v2341 = vpack.c.b16 %v2149, %v2141
        %v2342 = vpack.c.b16 %v2150, %v2142
        %v2343 = vpack.c.b16 %v2151, %v2143
        %v2344 = vpack.c.b16 %v2160, %v2152
        %v2345 = vpack.c.b16 %v2161, %v2153
        %v2346 = vpack.c.b16 %v2162, %v2154
        %v2347 = vpack.c.b16 %v2163, %v2155
        %v2348 = vpack.c.b16 %v2164, %v2156
        %v2349 = vpack.c.b16 %v2165, %v2157
        %v2350 = vpack.c.b16 %v2166, %v2158
        %v2351 = vpack.c.b16 %v2167, %v2159
        %v2352 = vpack.c.b16 %v2176, %v2168
        %v2353 = vpack.c.b16 %v2177, %v2169
        %v2354 = vpack.c.b16 %v2178, %v2170
        %v2355 = vpack.c.b16 %v2179, %v2171
        %v2356 = vpack.c.b16 %v2180, %v2172
        %v2357 = vpack.c.b16 %v2181, %v2173
        %v2358 = vpack.c.b16 %v2182, %v2174
        %v2359 = vpack.c.b16 %v2183, %v2175
        %v2360 = vpack.c.b16 %v2192, %v2184
        %v2361 = vpack.c.b16 %v2193, %v2185
        %v2362 = vpack.c.b16 %v2194, %v2186
        %v2363 = vpack.c.b16 %v2195, %v2187
        %v2364 = vpack.c.b16 %v2196, %v2188
        %v2365 = vpack.c.b16 %v2197, %v2189
        %v2366 = vpack.c.b16 %v2198, %v2190
        %v2367 = vpack.c.b16 %v2199, %v2191
        %v2368 = vpack.c.b16 %v2208, %v2200
        %v2369 = vpack.c.b16 %v2209, %v2201
        %v2370 = vpack.c.b16 %v2210, %v2202
        %v2371 = vpack.c.b16 %v2211, %v2203
        %v2372 = vpack.c.b16 %v2212, %v2204
        %v2373 = vpack.c.b16 %v2213, %v2205
        %v2374 = vpack.c.b16 %v2214, %v2206
        %v2375 = vpack.c.b16 %v2215, %v2207
        %v2376 = vpack.c.b16 %v2224, %v2216
        %v2377 = vpack.c.b16 %v2225, %v2217
        %v2378 = vpack.c.b16 %v2226, %v2218
        %v2379 = vpack.c.b16 %v2227, %v2219
        %v2380 = vpack.c.b16 %v2228, %v2220
        %v2381 = vpack.c.b16 %v2229, %v2221
        %v2382 = vpack.c.b16 %v2230, %v2222
        %v2383 = vpack.c.b16 %v2231, %v2223
        %v2384 = vpack.c.b16 %v2240, %v2232
        %v2385 = vpack.c.b16 %v2241, %v2233
        %v2386 = vpack.c.b16 %v2242, %v2234
        %v2387 = vpack.c.b16 %v2243, %v2235
        %v2388 = vpack.c.b16 %v2244, %v2236
        %v2389 = vpack.c.b16 %v2245, %v2237
        %v2390 = vpack.c.b16 %v2246, %v2238
        %v2391 = vpack.c.b16 %v2247, %v2239
        %v2392 = vpack.c.b16 %v2256, %v2248
        %v2393 = vpack.c.b16 %v2257, %v2249
        %v2394 = vpack.c.b16 %v2258, %v2250
        %v2395 = vpack.c.b16 %v2259, %v2251
        %v2396 = vpack.c.b16 %v2260, %v2252
        %v2397 = vpack.c.b16 %v2261, %v2253
        %v2398 = vpack.c.b16 %v2262, %v2254
        %v2399 = vpack.c.b16 %v2263, %v2255
        %v2400 = vpack.c.b16 %v2272, %v2264
        %v2401 = vpack.c.b16 %v2273, %v2265
        %v2402 = vpack.c.b16 %v2274, %v2266
        %v2403 = vpack.c.b16 %v2275, %v2267
        %v2404 = vpack.c.b16 %v2276, %v2268
        %v2405 = vpack.c.b16 %v2277, %v2269
        %v2406 = vpack.c.b16 %v2278, %v2270
        %v2407 = vpack.c.b16 %v2279, %v2271
        %2536 = vmatprep.subr.bf16.mxu0 %v2281
        %2537 = vmatpush1.bf16.msra.mxu0 %v2280
        %2538 = vmatprep.subr.bf16.mxu0 %v2289
        %2539 = vmatpush1.bf16.msra.mxu0 %v2288
        %2540 = vmatprep.subr.bf16.mxu0 %v2297
        %2541 = vmatpush1.bf16.msra.mxu0 %v2296
        %2542 = vmatprep.subr.bf16.mxu0 %v2305
        %2543 = vmatpush1.bf16.msra.mxu0 %v2304
        %2544 = vmatprep.subr.bf16.mxu0 %v2313
        %2545 = vmatpush1.bf16.msra.mxu0 %v2312
        %2546 = vmatprep.subr.bf16.mxu0 %v2321
        %2547 = vmatpush1.bf16.msra.mxu0 %v2320
        %2548 = vmatprep.subr.bf16.mxu0 %v2329
        %2549 = vmatpush1.bf16.msra.mxu0 %v2328
        %2550 = vmatprep.subr.bf16.mxu0 %v2337
        %2551 = vmatpush1.bf16.msra.mxu0 %v2336
        %2552 = vmatprep.subr.bf16.mxu0 %v2345
        %2553 = vmatpush1.bf16.msra.mxu0 %v2344
        %2554 = vmatprep.subr.bf16.mxu0 %v2353
        %2555 = vmatpush1.bf16.msra.mxu0 %v2352
        %2556 = vmatprep.subr.bf16.mxu0 %v2361
        %2557 = vmatpush1.bf16.msra.mxu0 %v2360
        %2558 = vmatprep.subr.bf16.mxu0 %v2369
        %2559 = vmatpush1.bf16.msra.mxu0 %v2368
        %2560 = vmatprep.subr.bf16.mxu0 %v2377
        %2561 = vmatpush1.bf16.msra.mxu0 %v2376
        %2562 = vmatprep.subr.bf16.mxu0 %v2385
        %2563 = vmatpush1.bf16.msra.mxu0 %v2384
        %2564 = vmatprep.subr.bf16.mxu0 %v2393
        %2565 = vmatpush1.bf16.msra.mxu0 %v2392
        %2566 = vmatprep.subr.bf16.mxu0 %v2401
        %2567 = vmatpush1.bf16.msra.mxu0 %v2400
        %2568 = vmatprep.mubr.bf16.mxu0 %v1767
        %2569 = vmatmul.mubr.bf16.gmra.mrb[0].mxu0 %v1766
        %v2570 = vpop.f32.mrb[0].mxu0
        %v2571 = vadd.f32 0.0, %v2570
        %v2572 = vpop.f32.mrb[0].mxu0
        %v2573 = vadd.f32 0.0, %v2572
        %v2574 = vpop.f32.mrb[0].mxu0
        %v2575 = vadd.f32 0.0, %v2574
        %v2576 = vpop.f32.mrb[0].mxu0
        %v2577 = vadd.f32 0.0, %v2576
        %2578 = vdwg.mxu0
        %2579 = vmatprep.subr.bf16.mxu0 %v2283
        %2580 = vmatpush1.bf16.msra.mxu0 %v2282
        %2581 = vmatprep.subr.bf16.mxu0 %v2291
        %2582 = vmatpush1.bf16.msra.mxu0 %v2290
        %2583 = vmatprep.subr.bf16.mxu0 %v2299
        %2584 = vmatpush1.bf16.msra.mxu0 %v2298
        %2585 = vmatprep.subr.bf16.mxu0 %v2307
        %2586 = vmatpush1.bf16.msra.mxu0 %v2306
        %2587 = vmatprep.subr.bf16.mxu0 %v2315
        %2588 = vmatpush1.bf16.msra.mxu0 %v2314
        %2589 = vmatprep.subr.bf16.mxu0 %v2323
        %2590 = vmatpush1.bf16.msra.mxu0 %v2322
        %2591 = vmatprep.subr.bf16.mxu0 %v2331
        %2592 = vmatpush1.bf16.msra.mxu0 %v2330
        %2593 = vmatprep.subr.bf16.mxu0 %v2339
        %2594 = vmatpush1.bf16.msra.mxu0 %v2338
        %2595 = vmatprep.subr.bf16.mxu0 %v2347
        %2596 = vmatpush1.bf16.msra.mxu0 %v2346
        %2597 = vmatprep.subr.bf16.mxu0 %v2355
        %2598 = vmatpush1.bf16.msra.mxu0 %v2354
        %2599 = vmatprep.subr.bf16.mxu0 %v2363
        %2600 = vmatpush1.bf16.msra.mxu0 %v2362
        %2601 = vmatprep.subr.bf16.mxu0 %v2371
        %2602 = vmatpush1.bf16.msra.mxu0 %v2370
        %2603 = vmatprep.subr.bf16.mxu0 %v2379
        %2604 = vmatpush1.bf16.msra.mxu0 %v2378
        %2605 = vmatprep.subr.bf16.mxu0 %v2387
        %2606 = vmatpush1.bf16.msra.mxu0 %v2386
        %2607 = vmatprep.subr.bf16.mxu0 %v2395
        %2608 = vmatpush1.bf16.msra.mxu0 %v2394
        %2609 = vmatprep.subr.bf16.mxu0 %v2403
        %2610 = vmatpush1.bf16.msra.mxu0 %v2402
        %2611 = vmatprep.mubr.bf16.mxu0 %v1767
        %2612 = vmatmul.mubr.bf16.gmra.mrb[0].mxu0 %v1766
        %v2613 = vpop.f32.mrb[0].mxu0
        %v2614 = vadd.f32 0.0, %v2613
        %v2615 = vpop.f32.mrb[0].mxu0
        %v2616 = vadd.f32 0.0, %v2615
        %v2617 = vpop.f32.mrb[0].mxu0
        %v2618 = vadd.f32 0.0, %v2617
        %v2619 = vpop.f32.mrb[0].mxu0
        %v2620 = vadd.f32 0.0, %v2619
        %2621 = vdwg.mxu0
        %2622 = vmatprep.subr.bf16.mxu0 %v2285
        %2623 = vmatpush1.bf16.msra.mxu0 %v2284
        %2624 = vmatprep.subr.bf16.mxu0 %v2293
        %2625 = vmatpush1.bf16.msra.mxu0 %v2292
        %2626 = vmatprep.subr.bf16.mxu0 %v2301
        %2627 = vmatpush1.bf16.msra.mxu0 %v2300
        %2628 = vmatprep.subr.bf16.mxu0 %v2309
        %2629 = vmatpush1.bf16.msra.mxu0 %v2308
        %2630 = vmatprep.subr.bf16.mxu0 %v2317
        %2631 = vmatpush1.bf16.msra.mxu0 %v2316
        %2632 = vmatprep.subr.bf16.mxu0 %v2325
        %2633 = vmatpush1.bf16.msra.mxu0 %v2324
        %2634 = vmatprep.subr.bf16.mxu0 %v2333
        %2635 = vmatpush1.bf16.msra.mxu0 %v2332
        %2636 = vmatprep.subr.bf16.mxu0 %v2341
        %2637 = vmatpush1.bf16.msra.mxu0 %v2340
        %2638 = vmatprep.subr.bf16.mxu0 %v2349
        %2639 = vmatpush1.bf16.msra.mxu0 %v2348
        %2640 = vmatprep.subr.bf16.mxu0 %v2357
        %2641 = vmatpush1.bf16.msra.mxu0 %v2356
        %2642 = vmatprep.subr.bf16.mxu0 %v2365
        %2643 = vmatpush1.bf16.msra.mxu0 %v2364
        %2644 = vmatprep.subr.bf16.mxu0 %v2373
        %2645 = vmatpush1.bf16.msra.mxu0 %v2372
        %2646 = vmatprep.subr.bf16.mxu0 %v2381
        %2647 = vmatpush1.bf16.msra.mxu0 %v2380
        %2648 = vmatprep.subr.bf16.mxu0 %v2389
        %2649 = vmatpush1.bf16.msra.mxu0 %v2388
        %2650 = vmatprep.subr.bf16.mxu0 %v2397
        %2651 = vmatpush1.bf16.msra.mxu0 %v2396
        %2652 = vmatprep.subr.bf16.mxu0 %v2405
        %2653 = vmatpush1.bf16.msra.mxu0 %v2404
        %2654 = vmatprep.mubr.bf16.mxu0 %v1767
        %2655 = vmatmul.mubr.bf16.gmra.mrb[0].mxu0 %v1766
        %v2656 = vpop.f32.mrb[0].mxu0
        %v2657 = vadd.f32 0.0, %v2656
        %v2658 = vpop.f32.mrb[0].mxu0
        %v2659 = vadd.f32 0.0, %v2658
        %v2660 = vpop.f32.mrb[0].mxu0
        %v2661 = vadd.f32 0.0, %v2660
        %v2662 = vpop.f32.mrb[0].mxu0
        %v2663 = vadd.f32 0.0, %v2662
        %2664 = vdwg.mxu0
        %2665 = vmatprep.subr.bf16.mxu0 %v2287
        %2666 = vmatpush1.bf16.msra.mxu0 %v2286
        %2667 = vmatprep.subr.bf16.mxu0 %v2295
        %2668 = vmatpush1.bf16.msra.mxu0 %v2294
        %2669 = vmatprep.subr.bf16.mxu0 %v2303
        %2670 = vmatpush1.bf16.msra.mxu0 %v2302
        %2671 = vmatprep.subr.bf16.mxu0 %v2311
        %2672 = vmatpush1.bf16.msra.mxu0 %v2310
        %2673 = vmatprep.subr.bf16.mxu0 %v2319
        %2674 = vmatpush1.bf16.msra.mxu0 %v2318
        %2675 = vmatprep.subr.bf16.mxu0 %v2327
        %2676 = vmatpush1.bf16.msra.mxu0 %v2326
        %2677 = vmatprep.subr.bf16.mxu0 %v2335
        %2678 = vmatpush1.bf16.msra.mxu0 %v2334
        %2679 = vmatprep.subr.bf16.mxu0 %v2343
        %2680 = vmatpush1.bf16.msra.mxu0 %v2342
        %2681 = vmatprep.subr.bf16.mxu0 %v2351
        %2682 = vmatpush1.bf16.msra.mxu0 %v2350
        %2683 = vmatprep.subr.bf16.mxu0 %v2359
        %2684 = vmatpush1.bf16.msra.mxu0 %v2358
        %2685 = vmatprep.subr.bf16.mxu0 %v2367
        %2686 = vmatpush1.bf16.msra.mxu0 %v2366
        %2687 = vmatprep.subr.bf16.mxu0 %v2375
        %2688 = vmatpush1.bf16.msra.mxu0 %v2374
        %2689 = vmatprep.subr.bf16.mxu0 %v2383
        %2690 = vmatpush1.bf16.msra.mxu0 %v2382
        %2691 = vmatprep.subr.bf16.mxu0 %v2391
        %2692 = vmatpush1.bf16.msra.mxu0 %v2390
        %2693 = vmatprep.subr.bf16.mxu0 %v2399
        %2694 = vmatpush1.bf16.msra.mxu0 %v2398
        %2695 = vmatprep.subr.bf16.mxu0 %v2407
        %2696 = vmatpush1.bf16.msra.mxu0 %v2406
        %2697 = vmatprep.mubr.bf16.mxu0 %v1767
        %2698 = vmatmul.mubr.bf16.gmra.mrb[0].mxu0 %v1766
        %v2699 = vpop.f32.mrb[0].mxu0
        %v2700 = vadd.f32 0.0, %v2699
        %v2701 = vpop.f32.mrb[0].mxu0
        %v2702 = vadd.f32 0.0, %v2701
        %v2703 = vpop.f32.mrb[0].mxu0
        %v2704 = vadd.f32 0.0, %v2703
        %v2705 = vpop.f32.mrb[0].mxu0
        %v2706 = vadd.f32 0.0, %v2705
        %2707 = vdwg.mxu0
        %v2708 = vmul.f32 %v2571, 0.5
        %v2709 = vmul.f32 %v2573, 0.5
        %v2710 = vmul.f32 %v2614, 0.5
        %v2711 = vmul.f32 %v2616, 0.5
        %v2712 = vmul.f32 %v2657, 0.5
        %v2713 = vmul.f32 %v2659, 0.5
        %v2714 = vmul.f32 %v2700, 0.5
        %v2715 = vmul.f32 %v2702, 0.5
        %v2716 = vmul.f32 %v2575, 0.5
        %v2717 = vmul.f32 %v2577, 0.5
        %v2718 = vmul.f32 %v2618, 0.5
        %v2719 = vmul.f32 %v2620, 0.5
        %v2720 = vmul.f32 %v2661, 0.5
        %v2721 = vmul.f32 %v2663, 0.5
        %v2722 = vmul.f32 %v2704, 0.5
        %v2723 = vmul.f32 %v2706, 0.5
        %v2724 = vmul.f32 %v2571, 0.70710677
        %v2725 = vmul.f32 %v2573, 0.70710677
        %v2726 = vmul.f32 %v2614, 0.70710677
        %v2727 = vmul.f32 %v2616, 0.70710677
        %v2728 = vmul.f32 %v2657, 0.70710677
        %v2729 = vmul.f32 %v2659, 0.70710677
        %v2730 = vmul.f32 %v2700, 0.70710677
        %v2731 = vmul.f32 %v2702, 0.70710677
        %v2732 = vmul.f32 %v2575, 0.70710677
        %v2733 = vmul.f32 %v2577, 0.70710677
        %v2734 = vmul.f32 %v2618, 0.70710677
        %v2735 = vmul.f32 %v2620, 0.70710677
        %v2736 = vmul.f32 %v2661, 0.70710677
        %v2737 = vmul.f32 %v2663, 0.70710677
        %v2738 = vmul.f32 %v2704, 0.70710677
        %v2739 = vmul.f32 %v2706, 0.70710677
        %v2740 = vand.u32 2147483647, %v2724
        %v2741 = vand.u32 2147483647, %v2725
        %v2742 = vand.u32 2147483647, %v2726
        %v2743 = vand.u32 2147483647, %v2727
        %v2744 = vand.u32 2147483647, %v2728
        %v2745 = vand.u32 2147483647, %v2729
        %v2746 = vand.u32 2147483647, %v2730
        %v2747 = vand.u32 2147483647, %v2731
        %v2748 = vand.u32 2147483647, %v2732
        %v2749 = vand.u32 2147483647, %v2733
        %v2750 = vand.u32 2147483647, %v2734
        %v2751 = vand.u32 2147483647, %v2735
        %v2752 = vand.u32 2147483647, %v2736
        %v2753 = vand.u32 2147483647, %v2737
        %v2754 = vand.u32 2147483647, %v2738
        %v2755 = vand.u32 2147483647, %v2739
        %v2756 = vmul.f32 %v2740, 0.3275911
        %v2757 = vmul.f32 %v2741, 0.3275911
        %v2758 = vmul.f32 %v2742, 0.3275911
        %v2759 = vmul.f32 %v2743, 0.3275911
        %v2760 = vmul.f32 %v2744, 0.3275911
        %v2761 = vmul.f32 %v2745, 0.3275911
        %v2762 = vmul.f32 %v2746, 0.3275911
        %v2763 = vmul.f32 %v2747, 0.3275911
        %v2764 = vmul.f32 %v2748, 0.3275911
        %v2765 = vmul.f32 %v2749, 0.3275911
        %v2766 = vmul.f32 %v2750, 0.3275911
        %v2767 = vmul.f32 %v2751, 0.3275911
        %v2768 = vmul.f32 %v2752, 0.3275911
        %v2769 = vmul.f32 %v2753, 0.3275911
        %v2770 = vmul.f32 %v2754, 0.3275911
        %v2771 = vmul.f32 %v2755, 0.3275911
        %v2772 = vadd.f32 %v2756, 1.0
        %v2773 = vadd.f32 %v2757, 1.0
        %v2774 = vadd.f32 %v2758, 1.0
        %v2775 = vadd.f32 %v2759, 1.0
        %v2776 = vadd.f32 %v2760, 1.0
        %v2777 = vadd.f32 %v2761, 1.0
        %v2778 = vadd.f32 %v2762, 1.0
        %v2779 = vadd.f32 %v2763, 1.0
        %v2780 = vadd.f32 %v2764, 1.0
        %v2781 = vadd.f32 %v2765, 1.0
        %v2782 = vadd.f32 %v2766, 1.0
        %v2783 = vadd.f32 %v2767, 1.0
        %v2784 = vadd.f32 %v2768, 1.0
        %v2785 = vadd.f32 %v2769, 1.0
        %v2786 = vadd.f32 %v2770, 1.0
        %v2787 = vadd.f32 %v2771, 1.0
        %v2788 = vrcp.pop %v2772
        %v2789 = vmul.f32 1.0, %v2788
        %v2790 = vrcp.pop %v2773
        %v2791 = vmul.f32 1.0, %v2790
        %v2792 = vrcp.pop %v2774
        %v2793 = vmul.f32 1.0, %v2792
        %v2794 = vrcp.pop %v2775
        %v2795 = vmul.f32 1.0, %v2794
        %v2796 = vrcp.pop %v2776
        %v2797 = vmul.f32 1.0, %v2796
        %v2798 = vrcp.pop %v2777
        %v2799 = vmul.f32 1.0, %v2798
        %v2800 = vrcp.pop %v2778
        %v2801 = vmul.f32 1.0, %v2800
        %v2802 = vrcp.pop %v2779
        %v2803 = vmul.f32 1.0, %v2802
        %v2804 = vrcp.pop %v2780
        %v2805 = vmul.f32 1.0, %v2804
        %v2806 = vrcp.pop %v2781
        %v2807 = vmul.f32 1.0, %v2806
        %v2808 = vrcp.pop %v2782
        %v2809 = vmul.f32 1.0, %v2808
        %v2810 = vrcp.pop %v2783
        %v2811 = vmul.f32 1.0, %v2810
        %v2812 = vrcp.pop %v2784
        %v2813 = vmul.f32 1.0, %v2812
        %v2814 = vrcp.pop %v2785
        %v2815 = vmul.f32 1.0, %v2814
        %v2816 = vrcp.pop %v2786
        %v2817 = vmul.f32 1.0, %v2816
        %v2818 = vrcp.pop %v2787
        %v2819 = vmul.f32 1.0, %v2818
        %v2820 = vmul.f32 %v2789, 1.0614054
        %v2821 = vmul.f32 %v2791, 1.0614054
        %v2822 = vmul.f32 %v2793, 1.0614054
        %v2823 = vmul.f32 %v2795, 1.0614054
        %v2824 = vmul.f32 %v2797, 1.0614054
        %v2825 = vmul.f32 %v2799, 1.0614054
        %v2826 = vmul.f32 %v2801, 1.0614054
        %v2827 = vmul.f32 %v2803, 1.0614054
        %v2828 = vmul.f32 %v2805, 1.0614054
        %v2829 = vmul.f32 %v2807, 1.0614054
        %v2830 = vmul.f32 %v2809, 1.0614054
        %v2831 = vmul.f32 %v2811, 1.0614054
        %v2832 = vmul.f32 %v2813, 1.0614054
        %v2833 = vmul.f32 %v2815, 1.0614054
        %v2834 = vmul.f32 %v2817, 1.0614054
        %v2835 = vmul.f32 %v2819, 1.0614054
        %v2836 = vadd.f32 %v2820, -1.4531521
        %v2837 = vadd.f32 %v2821, -1.4531521
        %v2838 = vadd.f32 %v2822, -1.4531521
        %v2839 = vadd.f32 %v2823, -1.4531521
        %v2840 = vadd.f32 %v2824, -1.4531521
        %v2841 = vadd.f32 %v2825, -1.4531521
        %v2842 = vadd.f32 %v2826, -1.4531521
        %v2843 = vadd.f32 %v2827, -1.4531521
        %v2844 = vadd.f32 %v2828, -1.4531521
        %v2845 = vadd.f32 %v2829, -1.4531521
        %v2846 = vadd.f32 %v2830, -1.4531521
        %v2847 = vadd.f32 %v2831, -1.4531521
        %v2848 = vadd.f32 %v2832, -1.4531521
        %v2849 = vadd.f32 %v2833, -1.4531521
        %v2850 = vadd.f32 %v2834, -1.4531521
        %v2851 = vadd.f32 %v2835, -1.4531521
        %v2852 = vmul.f32 %v2836, %v2789
        %v2853 = vmul.f32 %v2837, %v2791
        %v2854 = vmul.f32 %v2838, %v2793
        %v2855 = vmul.f32 %v2839, %v2795
        %v2856 = vmul.f32 %v2840, %v2797
        %v2857 = vmul.f32 %v2841, %v2799
        %v2858 = vmul.f32 %v2842, %v2801
        %v2859 = vmul.f32 %v2843, %v2803
        %v2860 = vmul.f32 %v2844, %v2805
        %v2861 = vmul.f32 %v2845, %v2807
        %v2862 = vmul.f32 %v2846, %v2809
        %v2863 = vmul.f32 %v2847, %v2811
        %v2864 = vmul.f32 %v2848, %v2813
        %v2865 = vmul.f32 %v2849, %v2815
        %v2866 = vmul.f32 %v2850, %v2817
        %v2867 = vmul.f32 %v2851, %v2819
        %v2868 = vadd.f32 %v2852, 1.4214138
        %v2869 = vadd.f32 %v2853, 1.4214138
        %v2870 = vadd.f32 %v2854, 1.4214138
        %v2871 = vadd.f32 %v2855, 1.4214138
        %v2872 = vadd.f32 %v2856, 1.4214138
        %v2873 = vadd.f32 %v2857, 1.4214138
        %v2874 = vadd.f32 %v2858, 1.4214138
        %v2875 = vadd.f32 %v2859, 1.4214138
        %v2876 = vadd.f32 %v2860, 1.4214138
        %v2877 = vadd.f32 %v2861, 1.4214138
        %v2878 = vadd.f32 %v2862, 1.4214138
        %v2879 = vadd.f32 %v2863, 1.4214138
        %v2880 = vadd.f32 %v2864, 1.4214138
        %v2881 = vadd.f32 %v2865, 1.4214138
        %v2882 = vadd.f32 %v2866, 1.4214138
        %v2883 = vadd.f32 %v2867, 1.4214138
        %v2884 = vmul.f32 %v2868, %v2789
        %v2885 = vmul.f32 %v2869, %v2791
        %v2886 = vmul.f32 %v2870, %v2793
        %v2887 = vmul.f32 %v2871, %v2795
        %v2888 = vmul.f32 %v2872, %v2797
        %v2889 = vmul.f32 %v2873, %v2799
        %v2890 = vmul.f32 %v2874, %v2801
        %v2891 = vmul.f32 %v2875, %v2803
        %v2892 = vmul.f32 %v2876, %v2805
        %v2893 = vmul.f32 %v2877, %v2807
        %v2894 = vmul.f32 %v2878, %v2809
        %v2895 = vmul.f32 %v2879, %v2811
        %v2896 = vmul.f32 %v2880, %v2813
        %v2897 = vmul.f32 %v2881, %v2815
        %v2898 = vmul.f32 %v2882, %v2817
        %v2899 = vmul.f32 %v2883, %v2819
        %v2900 = vadd.f32 %v2884, -0.28449672
        %v2901 = vadd.f32 %v2885, -0.28449672
        %v2902 = vadd.f32 %v2886, -0.28449672
        %v2903 = vadd.f32 %v2887, -0.28449672
        %v2904 = vadd.f32 %v2888, -0.28449672
        %v2905 = vadd.f32 %v2889, -0.28449672
        %v2906 = vadd.f32 %v2890, -0.28449672
        %v2907 = vadd.f32 %v2891, -0.28449672
        %v2908 = vadd.f32 %v2892, -0.28449672
        %v2909 = vadd.f32 %v2893, -0.28449672
        %v2910 = vadd.f32 %v2894, -0.28449672
        %v2911 = vadd.f32 %v2895, -0.28449672
        %v2912 = vadd.f32 %v2896, -0.28449672
        %v2913 = vadd.f32 %v2897, -0.28449672
        %v2914 = vadd.f32 %v2898, -0.28449672
        %v2915 = vadd.f32 %v2899, -0.28449672
        %v2916 = vmul.f32 %v2900, %v2789
        %v2917 = vmul.f32 %v2901, %v2791
        %v2918 = vmul.f32 %v2902, %v2793
        %v2919 = vmul.f32 %v2903, %v2795
        %v2920 = vmul.f32 %v2904, %v2797
        %v2921 = vmul.f32 %v2905, %v2799
        %v2922 = vmul.f32 %v2906, %v2801
        %v2923 = vmul.f32 %v2907, %v2803
        %v2924 = vmul.f32 %v2908, %v2805
        %v2925 = vmul.f32 %v2909, %v2807
        %v2926 = vmul.f32 %v2910, %v2809
        %v2927 = vmul.f32 %v2911, %v2811
        %v2928 = vmul.f32 %v2912, %v2813
        %v2929 = vmul.f32 %v2913, %v2815
        %v2930 = vmul.f32 %v2914, %v2817
        %v2931 = vmul.f32 %v2915, %v2819
        %v2932 = vadd.f32 %v2916, 0.2548296
        %v2933 = vadd.f32 %v2917, 0.2548296
        %v2934 = vadd.f32 %v2918, 0.2548296
        %v2935 = vadd.f32 %v2919, 0.2548296
        %v2936 = vadd.f32 %v2920, 0.2548296
        %v2937 = vadd.f32 %v2921, 0.2548296
        %v2938 = vadd.f32 %v2922, 0.2548296
        %v2939 = vadd.f32 %v2923, 0.2548296
        %v2940 = vadd.f32 %v2924, 0.2548296
        %v2941 = vadd.f32 %v2925, 0.2548296
        %v2942 = vadd.f32 %v2926, 0.2548296
        %v2943 = vadd.f32 %v2927, 0.2548296
        %v2944 = vadd.f32 %v2928, 0.2548296
        %v2945 = vadd.f32 %v2929, 0.2548296
        %v2946 = vadd.f32 %v2930, 0.2548296
        %v2947 = vadd.f32 %v2931, 0.2548296
        %v2948 = vmul.f32 %v2932, %v2789
        %v2949 = vmul.f32 %v2933, %v2791
        %v2950 = vmul.f32 %v2934, %v2793
        %v2951 = vmul.f32 %v2935, %v2795
        %v2952 = vmul.f32 %v2936, %v2797
        %v2953 = vmul.f32 %v2937, %v2799
        %v2954 = vmul.f32 %v2938, %v2801
        %v2955 = vmul.f32 %v2939, %v2803
        %v2956 = vmul.f32 %v2940, %v2805
        %v2957 = vmul.f32 %v2941, %v2807
        %v2958 = vmul.f32 %v2942, %v2809
        %v2959 = vmul.f32 %v2943, %v2811
        %v2960 = vmul.f32 %v2944, %v2813
        %v2961 = vmul.f32 %v2945, %v2815
        %v2962 = vmul.f32 %v2946, %v2817
        %v2963 = vmul.f32 %v2947, %v2819
        %v2964 = vsub.f32 0.0, %v2740
        %v2965 = vsub.f32 0.0, %v2741
        %v2966 = vsub.f32 0.0, %v2742
        %v2967 = vsub.f32 0.0, %v2743
        %v2968 = vsub.f32 0.0, %v2744
        %v2969 = vsub.f32 0.0, %v2745
        %v2970 = vsub.f32 0.0, %v2746
        %v2971 = vsub.f32 0.0, %v2747
        %v2972 = vsub.f32 0.0, %v2748
        %v2973 = vsub.f32 0.0, %v2749
        %v2974 = vsub.f32 0.0, %v2750
        %v2975 = vsub.f32 0.0, %v2751
        %v2976 = vsub.f32 0.0, %v2752
        %v2977 = vsub.f32 0.0, %v2753
        %v2978 = vsub.f32 0.0, %v2754
        %v2979 = vsub.f32 0.0, %v2755
        %v2980 = vmul.f32 %v2964, %v2740
        %v2981 = vmul.f32 %v2965, %v2741
        %v2982 = vmul.f32 %v2966, %v2742
        %v2983 = vmul.f32 %v2967, %v2743
        %v2984 = vmul.f32 %v2968, %v2744
        %v2985 = vmul.f32 %v2969, %v2745
        %v2986 = vmul.f32 %v2970, %v2746
        %v2987 = vmul.f32 %v2971, %v2747
        %v2988 = vmul.f32 %v2972, %v2748
        %v2989 = vmul.f32 %v2973, %v2749
        %v2990 = vmul.f32 %v2974, %v2750
        %v2991 = vmul.f32 %v2975, %v2751
        %v2992 = vmul.f32 %v2976, %v2752
        %v2993 = vmul.f32 %v2977, %v2753
        %v2994 = vmul.f32 %v2978, %v2754
        %v2995 = vmul.f32 %v2979, %v2755
        %v2996 = vmul.f32 %v2980, 1.442695
        %v2997 = vpow.pop %v2996
        %v2998 = vmul.f32 %v2981, 1.442695
        %v2999 = vpow.pop %v2998
        %v3000 = vmul.f32 %v2982, 1.442695
        %v3001 = vpow.pop %v3000
        %v3002 = vmul.f32 %v2983, 1.442695
        %v3003 = vpow.pop %v3002
        %v3004 = vmul.f32 %v2984, 1.442695
        %v3005 = vpow.pop %v3004
        %v3006 = vmul.f32 %v2985, 1.442695
        %v3007 = vpow.pop %v3006
        %v3008 = vmul.f32 %v2986, 1.442695
        %v3009 = vpow.pop %v3008
        %v3010 = vmul.f32 %v2987, 1.442695
        %v3011 = vpow.pop %v3010
        %v3012 = vmul.f32 %v2988, 1.442695
        %v3013 = vpow.pop %v3012
        %v3014 = vmul.f32 %v2989, 1.442695
        %v3015 = vpow.pop %v3014
        %v3016 = vmul.f32 %v2990, 1.442695
        %v3017 = vpow.pop %v3016
        %v3018 = vmul.f32 %v2991, 1.442695
        %v3019 = vpow.pop %v3018
        %v3020 = vmul.f32 %v2992, 1.442695
        %v3021 = vpow.pop %v3020
        %v3022 = vmul.f32 %v2993, 1.442695
        %v3023 = vpow.pop %v3022
        %v3024 = vmul.f32 %v2994, 1.442695
        %v3025 = vpow.pop %v3024
        %v3026 = vmul.f32 %v2995, 1.442695
        %v3027 = vpow.pop %v3026
        %v3028 = vmul.f32 %v2948, %v2997
        %v3029 = vmul.f32 %v2949, %v2999
        %v3030 = vmul.f32 %v2950, %v3001
        %v3031 = vmul.f32 %v2951, %v3003
        %v3032 = vmul.f32 %v2952, %v3005
        %v3033 = vmul.f32 %v2953, %v3007
        %v3034 = vmul.f32 %v2954, %v3009
        %v3035 = vmul.f32 %v2955, %v3011
        %v3036 = vmul.f32 %v2956, %v3013
        %v3037 = vmul.f32 %v2957, %v3015
        %v3038 = vmul.f32 %v2958, %v3017
        %v3039 = vmul.f32 %v2959, %v3019
        %v3040 = vmul.f32 %v2960, %v3021
        %v3041 = vmul.f32 %v2961, %v3023
        %v3042 = vmul.f32 %v2962, %v3025
        %v3043 = vmul.f32 %v2963, %v3027
        %v3044 = vsub.f32 1.0, %v3028
        %v3045 = vsub.f32 1.0, %v3029
        %v3046 = vsub.f32 1.0, %v3030
        %v3047 = vsub.f32 1.0, %v3031
        %v3048 = vsub.f32 1.0, %v3032
        %v3049 = vsub.f32 1.0, %v3033
        %v3050 = vsub.f32 1.0, %v3034
        %v3051 = vsub.f32 1.0, %v3035
        %v3052 = vsub.f32 1.0, %v3036
        %v3053 = vsub.f32 1.0, %v3037
        %v3054 = vsub.f32 1.0, %v3038
        %v3055 = vsub.f32 1.0, %v3039
        %v3056 = vsub.f32 1.0, %v3040
        %v3057 = vsub.f32 1.0, %v3041
        %v3058 = vsub.f32 1.0, %v3042
        %v3059 = vsub.f32 1.0, %v3043
        %vm3060 = vcmp.lt.f32.partialorder %v2724, 0.0
        %vm3061 = vcmp.lt.f32.partialorder %v2725, 0.0
        %vm3062 = vcmp.lt.f32.partialorder %v2726, 0.0
        %vm3063 = vcmp.lt.f32.partialorder %v2727, 0.0
        %vm3064 = vcmp.lt.f32.partialorder %v2728, 0.0
        %vm3065 = vcmp.lt.f32.partialorder %v2729, 0.0
        %vm3066 = vcmp.lt.f32.partialorder %v2730, 0.0
        %vm3067 = vcmp.lt.f32.partialorder %v2731, 0.0
        %vm3068 = vcmp.lt.f32.partialorder %v2732, 0.0
        %vm3069 = vcmp.lt.f32.partialorder %v2733, 0.0
        %vm3070 = vcmp.lt.f32.partialorder %v2734, 0.0
        %vm3071 = vcmp.lt.f32.partialorder %v2735, 0.0
        %vm3072 = vcmp.lt.f32.partialorder %v2736, 0.0
        %vm3073 = vcmp.lt.f32.partialorder %v2737, 0.0
        %vm3074 = vcmp.lt.f32.partialorder %v2738, 0.0
        %vm3075 = vcmp.lt.f32.partialorder %v2739, 0.0
        %v3076 = vsub.f32 0.0, %v3044
        %v3077 = vsub.f32 0.0, %v3045
        %v3078 = vsub.f32 0.0, %v3046
        %v3079 = vsub.f32 0.0, %v3047
        %v3080 = vsub.f32 0.0, %v3048
        %v3081 = vsub.f32 0.0, %v3049
        %v3082 = vsub.f32 0.0, %v3050
        %v3083 = vsub.f32 0.0, %v3051
        %v3084 = vsub.f32 0.0, %v3052
        %v3085 = vsub.f32 0.0, %v3053
        %v3086 = vsub.f32 0.0, %v3054
        %v3087 = vsub.f32 0.0, %v3055
        %v3088 = vsub.f32 0.0, %v3056
        %v3089 = vsub.f32 0.0, %v3057
        %v3090 = vsub.f32 0.0, %v3058
        %v3091 = vsub.f32 0.0, %v3059
        %v3092 = vsel %vm3060, %v3076, %v3044
        %v3093 = vsel %vm3061, %v3077, %v3045
        %v3094 = vsel %vm3062, %v3078, %v3046
        %v3095 = vsel %vm3063, %v3079, %v3047
        %v3096 = vsel %vm3064, %v3080, %v3048
        %v3097 = vsel %vm3065, %v3081, %v3049
        %v3098 = vsel %vm3066, %v3082, %v3050
        %v3099 = vsel %vm3067, %v3083, %v3051
        %v3100 = vsel %vm3068, %v3084, %v3052
        %v3101 = vsel %vm3069, %v3085, %v3053
        %v3102 = vsel %vm3070, %v3086, %v3054
        %v3103 = vsel %vm3071, %v3087, %v3055
        %v3104 = vsel %vm3072, %v3088, %v3056
        %v3105 = vsel %vm3073, %v3089, %v3057
        %v3106 = vsel %vm3074, %v3090, %v3058
        %v3107 = vsel %vm3075, %v3091, %v3059
        %v3108 = vadd.f32 %v3092, 1.0
        %v3109 = vadd.f32 %v3093, 1.0
        %v3110 = vadd.f32 %v3094, 1.0
        %v3111 = vadd.f32 %v3095, 1.0
        %v3112 = vadd.f32 %v3096, 1.0
        %v3113 = vadd.f32 %v3097, 1.0
        %v3114 = vadd.f32 %v3098, 1.0
        %v3115 = vadd.f32 %v3099, 1.0
        %v3116 = vadd.f32 %v3100, 1.0
        %v3117 = vadd.f32 %v3101, 1.0
        %v3118 = vadd.f32 %v3102, 1.0
        %v3119 = vadd.f32 %v3103, 1.0
        %v3120 = vadd.f32 %v3104, 1.0
        %v3121 = vadd.f32 %v3105, 1.0
        %v3122 = vadd.f32 %v3106, 1.0
        %v3123 = vadd.f32 %v3107, 1.0
        %v3124 = vmul.f32 %v2708, %v3108
        %v3125 = vmul.f32 %v2709, %v3109
        %v3126 = vmul.f32 %v2710, %v3110
        %v3127 = vmul.f32 %v2711, %v3111
        %v3128 = vmul.f32 %v2712, %v3112
        %v3129 = vmul.f32 %v2713, %v3113
        %v3130 = vmul.f32 %v2714, %v3114
        %v3131 = vmul.f32 %v2715, %v3115
        %v3132 = vmul.f32 %v2716, %v3116
        %v3133 = vmul.f32 %v2717, %v3117
        %v3134 = vmul.f32 %v2718, %v3118
        %v3135 = vmul.f32 %v2719, %v3119
        %v3136 = vmul.f32 %v2720, %v3120
        %v3137 = vmul.f32 %v2721, %v3121
        %v3138 = vmul.f32 %v2722, %v3122
        %v3139 = vmul.f32 %v2723, %v3123
        %v3140 = vpack.c.bf16 %v3132, %v3124
        %v3141 = vpack.c.bf16 %v3133, %v3125
        %v3142 = vpack.c.bf16 %v3134, %v3126
        %v3143 = vpack.c.bf16 %v3135, %v3127
        %v3144 = vpack.c.bf16 %v3136, %v3128
        %v3145 = vpack.c.bf16 %v3137, %v3129
        %v3146 = vpack.c.bf16 %v3138, %v3130
        %v3147 = vpack.c.bf16 %v3139, %v3131
        %v3148 = vld [vmem:[%s420] sm:$0xff]
        %v3149 = vld [vmem:[%s420 + $0x8] sm:$0xff]
        %v3150 = vld [vmem:[%s420 + $0x10] sm:$0xff]
        %v3151 = vld [vmem:[%s420 + $0x18] sm:$0xff]
        %v3152 = vld [vmem:[%s420 + $0x20] sm:$0xff]
        %v3153 = vld [vmem:[%s420 + $0x28] sm:$0xff]
        %v3154 = vld [vmem:[%s420 + $0x30] sm:$0xff]
        %v3155 = vld [vmem:[%s420 + $0x38] sm:$0xff]
        %v3156 = vld [vmem:[%s420 + $0x40] sm:$0xff]
        %v3157 = vld [vmem:[%s420 + $0x48] sm:$0xff]
        %v3158 = vld [vmem:[%s420 + $0x50] sm:$0xff]
        %v3159 = vld [vmem:[%s420 + $0x58] sm:$0xff]
        %v3160 = vld [vmem:[%s420 + $0x60] sm:$0xff]
        %v3161 = vld [vmem:[%s420 + $0x68] sm:$0xff]
        %v3162 = vld [vmem:[%s420 + $0x70] sm:$0xff]
        %v3163 = vld [vmem:[%s420 + $0x78] sm:$0xff]
        %v3164 = vld [vmem:[%s420 + $0x80] sm:$0xff]
        %v3165 = vld [vmem:[%s420 + $0x88] sm:$0xff]
        %v3166 = vld [vmem:[%s420 + $0x90] sm:$0xff]
        %v3167 = vld [vmem:[%s420 + $0x98] sm:$0xff]
        %v3168 = vld [vmem:[%s420 + $0xa0] sm:$0xff]
        %v3169 = vld [vmem:[%s420 + $0xa8] sm:$0xff]
        %v3170 = vld [vmem:[%s420 + $0xb0] sm:$0xff]
        %v3171 = vld [vmem:[%s420 + $0xb8] sm:$0xff]
        %v3172 = vld [vmem:[%s420 + $0xc0] sm:$0xff]
        %v3173 = vld [vmem:[%s420 + $0xc8] sm:$0xff]
        %v3174 = vld [vmem:[%s420 + $0xd0] sm:$0xff]
        %v3175 = vld [vmem:[%s420 + $0xd8] sm:$0xff]
        %v3176 = vld [vmem:[%s420 + $0xe0] sm:$0xff]
        %v3177 = vld [vmem:[%s420 + $0xe8] sm:$0xff]
        %v3178 = vld [vmem:[%s420 + $0xf0] sm:$0xff]
        %v3179 = vld [vmem:[%s420 + $0xf8] sm:$0xff]
        %v3180 = vld [vmem:[%s420 + $0x100] sm:$0xff]
        %v3181 = vld [vmem:[%s420 + $0x108] sm:$0xff]
        %v3182 = vld [vmem:[%s420 + $0x110] sm:$0xff]
        %v3183 = vld [vmem:[%s420 + $0x118] sm:$0xff]
        %v3184 = vld [vmem:[%s420 + $0x120] sm:$0xff]
        %v3185 = vld [vmem:[%s420 + $0x128] sm:$0xff]
        %v3186 = vld [vmem:[%s420 + $0x130] sm:$0xff]
        %v3187 = vld [vmem:[%s420 + $0x138] sm:$0xff]
        %v3188 = vld [vmem:[%s420 + $0x140] sm:$0xff]
        %v3189 = vld [vmem:[%s420 + $0x148] sm:$0xff]
        %v3190 = vld [vmem:[%s420 + $0x150] sm:$0xff]
        %v3191 = vld [vmem:[%s420 + $0x158] sm:$0xff]
        %v3192 = vld [vmem:[%s420 + $0x160] sm:$0xff]
        %v3193 = vld [vmem:[%s420 + $0x168] sm:$0xff]
        %v3194 = vld [vmem:[%s420 + $0x170] sm:$0xff]
        %v3195 = vld [vmem:[%s420 + $0x178] sm:$0xff]
        %v3196 = vld [vmem:[%s420 + $0x180] sm:$0xff]
        %v3197 = vld [vmem:[%s420 + $0x188] sm:$0xff]
        %v3198 = vld [vmem:[%s420 + $0x190] sm:$0xff]
        %v3199 = vld [vmem:[%s420 + $0x198] sm:$0xff]
        %v3200 = vld [vmem:[%s420 + $0x1a0] sm:$0xff]
        %v3201 = vld [vmem:[%s420 + $0x1a8] sm:$0xff]
        %v3202 = vld [vmem:[%s420 + $0x1b0] sm:$0xff]
        %v3203 = vld [vmem:[%s420 + $0x1b8] sm:$0xff]
        %v3204 = vld [vmem:[%s420 + $0x1c0] sm:$0xff]
        %v3205 = vld [vmem:[%s420 + $0x1c8] sm:$0xff]
        %v3206 = vld [vmem:[%s420 + $0x1d0] sm:$0xff]
        %v3207 = vld [vmem:[%s420 + $0x1d8] sm:$0xff]
        %v3208 = vld [vmem:[%s420 + $0x1e0] sm:$0xff]
        %v3209 = vld [vmem:[%s420 + $0x1e8] sm:$0xff]
        %v3210 = vld [vmem:[%s420 + $0x1f0] sm:$0xff]
        %v3211 = vld [vmem:[%s420 + $0x1f8] sm:$0xff]
        %v3212 = vld [vmem:[%s420 + $0x200] sm:$0xff]
        %v3213 = vld [vmem:[%s420 + $0x208] sm:$0xff]
        %v3214 = vld [vmem:[%s420 + $0x210] sm:$0xff]
        %v3215 = vld [vmem:[%s420 + $0x218] sm:$0xff]
        %v3216 = vld [vmem:[%s420 + $0x220] sm:$0xff]
        %v3217 = vld [vmem:[%s420 + $0x228] sm:$0xff]
        %v3218 = vld [vmem:[%s420 + $0x230] sm:$0xff]
        %v3219 = vld [vmem:[%s420 + $0x238] sm:$0xff]
        %v3220 = vld [vmem:[%s420 + $0x240] sm:$0xff]
        %v3221 = vld [vmem:[%s420 + $0x248] sm:$0xff]
        %v3222 = vld [vmem:[%s420 + $0x250] sm:$0xff]
        %v3223 = vld [vmem:[%s420 + $0x258] sm:$0xff]
        %v3224 = vld [vmem:[%s420 + $0x260] sm:$0xff]
        %v3225 = vld [vmem:[%s420 + $0x268] sm:$0xff]
        %v3226 = vld [vmem:[%s420 + $0x270] sm:$0xff]
        %v3227 = vld [vmem:[%s420 + $0x278] sm:$0xff]
        %v3228 = vld [vmem:[%s420 + $0x280] sm:$0xff]
        %v3229 = vld [vmem:[%s420 + $0x288] sm:$0xff]
        %v3230 = vld [vmem:[%s420 + $0x290] sm:$0xff]
        %v3231 = vld [vmem:[%s420 + $0x298] sm:$0xff]
        %v3232 = vld [vmem:[%s420 + $0x2a0] sm:$0xff]
        %v3233 = vld [vmem:[%s420 + $0x2a8] sm:$0xff]
        %v3234 = vld [vmem:[%s420 + $0x2b0] sm:$0xff]
        %v3235 = vld [vmem:[%s420 + $0x2b8] sm:$0xff]
        %v3236 = vld [vmem:[%s420 + $0x2c0] sm:$0xff]
        %v3237 = vld [vmem:[%s420 + $0x2c8] sm:$0xff]
        %v3238 = vld [vmem:[%s420 + $0x2d0] sm:$0xff]
        %v3239 = vld [vmem:[%s420 + $0x2d8] sm:$0xff]
        %v3240 = vld [vmem:[%s420 + $0x2e0] sm:$0xff]
        %v3241 = vld [vmem:[%s420 + $0x2e8] sm:$0xff]
        %v3242 = vld [vmem:[%s420 + $0x2f0] sm:$0xff]
        %v3243 = vld [vmem:[%s420 + $0x2f8] sm:$0xff]
        %v3244 = vld [vmem:[%s420 + $0x300] sm:$0xff]
        %v3245 = vld [vmem:[%s420 + $0x308] sm:$0xff]
        %v3246 = vld [vmem:[%s420 + $0x310] sm:$0xff]
        %v3247 = vld [vmem:[%s420 + $0x318] sm:$0xff]
        %v3248 = vld [vmem:[%s420 + $0x320] sm:$0xff]
        %v3249 = vld [vmem:[%s420 + $0x328] sm:$0xff]
        %v3250 = vld [vmem:[%s420 + $0x330] sm:$0xff]
        %v3251 = vld [vmem:[%s420 + $0x338] sm:$0xff]
        %v3252 = vld [vmem:[%s420 + $0x340] sm:$0xff]
        %v3253 = vld [vmem:[%s420 + $0x348] sm:$0xff]
        %v3254 = vld [vmem:[%s420 + $0x350] sm:$0xff]
        %v3255 = vld [vmem:[%s420 + $0x358] sm:$0xff]
        %v3256 = vld [vmem:[%s420 + $0x360] sm:$0xff]
        %v3257 = vld [vmem:[%s420 + $0x368] sm:$0xff]
        %v3258 = vld [vmem:[%s420 + $0x370] sm:$0xff]
        %v3259 = vld [vmem:[%s420 + $0x378] sm:$0xff]
        %v3260 = vld [vmem:[%s420 + $0x380] sm:$0xff]
        %v3261 = vld [vmem:[%s420 + $0x388] sm:$0xff]
        %v3262 = vld [vmem:[%s420 + $0x390] sm:$0xff]
        %v3263 = vld [vmem:[%s420 + $0x398] sm:$0xff]
        %v3264 = vld [vmem:[%s420 + $0x3a0] sm:$0xff]
        %v3265 = vld [vmem:[%s420 + $0x3a8] sm:$0xff]
        %v3266 = vld [vmem:[%s420 + $0x3b0] sm:$0xff]
        %v3267 = vld [vmem:[%s420 + $0x3b8] sm:$0xff]
        %v3268 = vld [vmem:[%s420 + $0x3c0] sm:$0xff]
        %v3269 = vld [vmem:[%s420 + $0x3c8] sm:$0xff]
        %v3270 = vld [vmem:[%s420 + $0x3d0] sm:$0xff]
        %v3271 = vld [vmem:[%s420 + $0x3d8] sm:$0xff]
        %v3272 = vld [vmem:[%s420 + $0x3e0] sm:$0xff]
        %v3273 = vld [vmem:[%s420 + $0x3e8] sm:$0xff]
        %v3274 = vld [vmem:[%s420 + $0x3f0] sm:$0xff]
        %v3275 = vld [vmem:[%s420 + $0x3f8] sm:$0xff]
        %v3404 = vunpack.c.l.b16 %v3148
        %v3405 = vunpack.c.h.b16 %v3148
        %v3406 = vunpack.c.l.b16 %v3149
        %v3407 = vunpack.c.h.b16 %v3149
        %v3408 = vunpack.c.l.b16 %v3150
        %v3409 = vunpack.c.h.b16 %v3150
        %v3410 = vunpack.c.l.b16 %v3151
        %v3411 = vunpack.c.h.b16 %v3151
        %v3412 = vunpack.c.l.b16 %v3152
        %v3413 = vunpack.c.h.b16 %v3152
        %v3414 = vunpack.c.l.b16 %v3153
        %v3415 = vunpack.c.h.b16 %v3153
        %v3416 = vunpack.c.l.b16 %v3154
        %v3417 = vunpack.c.h.b16 %v3154
        %v3418 = vunpack.c.l.b16 %v3155
        %v3419 = vunpack.c.h.b16 %v3155
        %v3420 = vunpack.c.l.b16 %v3156
        %v3421 = vunpack.c.h.b16 %v3156
        %v3422 = vunpack.c.l.b16 %v3157
        %v3423 = vunpack.c.h.b16 %v3157
        %v3424 = vunpack.c.l.b16 %v3158
        %v3425 = vunpack.c.h.b16 %v3158
        %v3426 = vunpack.c.l.b16 %v3159
        %v3427 = vunpack.c.h.b16 %v3159
        %v3428 = vunpack.c.l.b16 %v3160
        %v3429 = vunpack.c.h.b16 %v3160
        %v3430 = vunpack.c.l.b16 %v3161
        %v3431 = vunpack.c.h.b16 %v3161
        %v3432 = vunpack.c.l.b16 %v3162
        %v3433 = vunpack.c.h.b16 %v3162
        %v3434 = vunpack.c.l.b16 %v3163
        %v3435 = vunpack.c.h.b16 %v3163
        %v3436 = vunpack.c.l.b16 %v3164
        %v3437 = vunpack.c.h.b16 %v3164
        %v3438 = vunpack.c.l.b16 %v3165
        %v3439 = vunpack.c.h.b16 %v3165
        %v3440 = vunpack.c.l.b16 %v3166
        %v3441 = vunpack.c.h.b16 %v3166
        %v3442 = vunpack.c.l.b16 %v3167
        %v3443 = vunpack.c.h.b16 %v3167
        %v3444 = vunpack.c.l.b16 %v3168
        %v3445 = vunpack.c.h.b16 %v3168
        %v3446 = vunpack.c.l.b16 %v3169
        %v3447 = vunpack.c.h.b16 %v3169
        %v3448 = vunpack.c.l.b16 %v3170
        %v3449 = vunpack.c.h.b16 %v3170
        %v3450 = vunpack.c.l.b16 %v3171
        %v3451 = vunpack.c.h.b16 %v3171
        %v3452 = vunpack.c.l.b16 %v3172
        %v3453 = vunpack.c.h.b16 %v3172
        %v3454 = vunpack.c.l.b16 %v3173
        %v3455 = vunpack.c.h.b16 %v3173
        %v3456 = vunpack.c.l.b16 %v3174
        %v3457 = vunpack.c.h.b16 %v3174
        %v3458 = vunpack.c.l.b16 %v3175
        %v3459 = vunpack.c.h.b16 %v3175
        %v3460 = vunpack.c.l.b16 %v3176
        %v3461 = vunpack.c.h.b16 %v3176
        %v3462 = vunpack.c.l.b16 %v3177
        %v3463 = vunpack.c.h.b16 %v3177
        %v3464 = vunpack.c.l.b16 %v3178
        %v3465 = vunpack.c.h.b16 %v3178
        %v3466 = vunpack.c.l.b16 %v3179
        %v3467 = vunpack.c.h.b16 %v3179
        %v3468 = vunpack.c.l.b16 %v3180
        %v3469 = vunpack.c.h.b16 %v3180
        %v3470 = vunpack.c.l.b16 %v3181
        %v3471 = vunpack.c.h.b16 %v3181
        %v3472 = vunpack.c.l.b16 %v3182
        %v3473 = vunpack.c.h.b16 %v3182
        %v3474 = vunpack.c.l.b16 %v3183
        %v3475 = vunpack.c.h.b16 %v3183
        %v3476 = vunpack.c.l.b16 %v3184
        %v3477 = vunpack.c.h.b16 %v3184
        %v3478 = vunpack.c.l.b16 %v3185
        %v3479 = vunpack.c.h.b16 %v3185
        %v3480 = vunpack.c.l.b16 %v3186
        %v3481 = vunpack.c.h.b16 %v3186
        %v3482 = vunpack.c.l.b16 %v3187
        %v3483 = vunpack.c.h.b16 %v3187
        %v3484 = vunpack.c.l.b16 %v3188
        %v3485 = vunpack.c.h.b16 %v3188
        %v3486 = vunpack.c.l.b16 %v3189
        %v3487 = vunpack.c.h.b16 %v3189
        %v3488 = vunpack.c.l.b16 %v3190
        %v3489 = vunpack.c.h.b16 %v3190
        %v3490 = vunpack.c.l.b16 %v3191
        %v3491 = vunpack.c.h.b16 %v3191
        %v3492 = vunpack.c.l.b16 %v3192
        %v3493 = vunpack.c.h.b16 %v3192
        %v3494 = vunpack.c.l.b16 %v3193
        %v3495 = vunpack.c.h.b16 %v3193
        %v3496 = vunpack.c.l.b16 %v3194
        %v3497 = vunpack.c.h.b16 %v3194
        %v3498 = vunpack.c.l.b16 %v3195
        %v3499 = vunpack.c.h.b16 %v3195
        %v3500 = vunpack.c.l.b16 %v3196
        %v3501 = vunpack.c.h.b16 %v3196
        %v3502 = vunpack.c.l.b16 %v3197
        %v3503 = vunpack.c.h.b16 %v3197
        %v3504 = vunpack.c.l.b16 %v3198
        %v3505 = vunpack.c.h.b16 %v3198
        %v3506 = vunpack.c.l.b16 %v3199
        %v3507 = vunpack.c.h.b16 %v3199
        %v3508 = vunpack.c.l.b16 %v3200
        %v3509 = vunpack.c.h.b16 %v3200
        %v3510 = vunpack.c.l.b16 %v3201
        %v3511 = vunpack.c.h.b16 %v3201
        %v3512 = vunpack.c.l.b16 %v3202
        %v3513 = vunpack.c.h.b16 %v3202
        %v3514 = vunpack.c.l.b16 %v3203
        %v3515 = vunpack.c.h.b16 %v3203
        %v3516 = vunpack.c.l.b16 %v3204
        %v3517 = vunpack.c.h.b16 %v3204
        %v3518 = vunpack.c.l.b16 %v3205
        %v3519 = vunpack.c.h.b16 %v3205
        %v3520 = vunpack.c.l.b16 %v3206
        %v3521 = vunpack.c.h.b16 %v3206
        %v3522 = vunpack.c.l.b16 %v3207
        %v3523 = vunpack.c.h.b16 %v3207
        %v3524 = vunpack.c.l.b16 %v3208
        %v3525 = vunpack.c.h.b16 %v3208
        %v3526 = vunpack.c.l.b16 %v3209
        %v3527 = vunpack.c.h.b16 %v3209
        %v3528 = vunpack.c.l.b16 %v3210
        %v3529 = vunpack.c.h.b16 %v3210
        %v3530 = vunpack.c.l.b16 %v3211
        %v3531 = vunpack.c.h.b16 %v3211
        %v3532 = vunpack.c.l.b16 %v3212
        %v3533 = vunpack.c.h.b16 %v3212
        %v3534 = vunpack.c.l.b16 %v3213
        %v3535 = vunpack.c.h.b16 %v3213
        %v3536 = vunpack.c.l.b16 %v3214
        %v3537 = vunpack.c.h.b16 %v3214
        %v3538 = vunpack.c.l.b16 %v3215
        %v3539 = vunpack.c.h.b16 %v3215
        %v3540 = vunpack.c.l.b16 %v3216
        %v3541 = vunpack.c.h.b16 %v3216
        %v3542 = vunpack.c.l.b16 %v3217
        %v3543 = vunpack.c.h.b16 %v3217
        %v3544 = vunpack.c.l.b16 %v3218
        %v3545 = vunpack.c.h.b16 %v3218
        %v3546 = vunpack.c.l.b16 %v3219
        %v3547 = vunpack.c.h.b16 %v3219
        %v3548 = vunpack.c.l.b16 %v3220
        %v3549 = vunpack.c.h.b16 %v3220
        %v3550 = vunpack.c.l.b16 %v3221
        %v3551 = vunpack.c.h.b16 %v3221
        %v3552 = vunpack.c.l.b16 %v3222
        %v3553 = vunpack.c.h.b16 %v3222
        %v3554 = vunpack.c.l.b16 %v3223
        %v3555 = vunpack.c.h.b16 %v3223
        %v3556 = vunpack.c.l.b16 %v3224
        %v3557 = vunpack.c.h.b16 %v3224
        %v3558 = vunpack.c.l.b16 %v3225
        %v3559 = vunpack.c.h.b16 %v3225
        %v3560 = vunpack.c.l.b16 %v3226
        %v3561 = vunpack.c.h.b16 %v3226
        %v3562 = vunpack.c.l.b16 %v3227
        %v3563 = vunpack.c.h.b16 %v3227
        %v3564 = vunpack.c.l.b16 %v3228
        %v3565 = vunpack.c.h.b16 %v3228
        %v3566 = vunpack.c.l.b16 %v3229
        %v3567 = vunpack.c.h.b16 %v3229
        %v3568 = vunpack.c.l.b16 %v3230
        %v3569 = vunpack.c.h.b16 %v3230
        %v3570 = vunpack.c.l.b16 %v3231
        %v3571 = vunpack.c.h.b16 %v3231
        %v3572 = vunpack.c.l.b16 %v3232
        %v3573 = vunpack.c.h.b16 %v3232
        %v3574 = vunpack.c.l.b16 %v3233
        %v3575 = vunpack.c.h.b16 %v3233
        %v3576 = vunpack.c.l.b16 %v3234
        %v3577 = vunpack.c.h.b16 %v3234
        %v3578 = vunpack.c.l.b16 %v3235
        %v3579 = vunpack.c.h.b16 %v3235
        %v3580 = vunpack.c.l.b16 %v3236
        %v3581 = vunpack.c.h.b16 %v3236
        %v3582 = vunpack.c.l.b16 %v3237
        %v3583 = vunpack.c.h.b16 %v3237
        %v3584 = vunpack.c.l.b16 %v3238
        %v3585 = vunpack.c.h.b16 %v3238
        %v3586 = vunpack.c.l.b16 %v3239
        %v3587 = vunpack.c.h.b16 %v3239
        %v3588 = vunpack.c.l.b16 %v3240
        %v3589 = vunpack.c.h.b16 %v3240
        %v3590 = vunpack.c.l.b16 %v3241
        %v3591 = vunpack.c.h.b16 %v3241
        %v3592 = vunpack.c.l.b16 %v3242
        %v3593 = vunpack.c.h.b16 %v3242
        %v3594 = vunpack.c.l.b16 %v3243
        %v3595 = vunpack.c.h.b16 %v3243
        %v3596 = vunpack.c.l.b16 %v3244
        %v3597 = vunpack.c.h.b16 %v3244
        %v3598 = vunpack.c.l.b16 %v3245
        %v3599 = vunpack.c.h.b16 %v3245
        %v3600 = vunpack.c.l.b16 %v3246
        %v3601 = vunpack.c.h.b16 %v3246
        %v3602 = vunpack.c.l.b16 %v3247
        %v3603 = vunpack.c.h.b16 %v3247
        %v3604 = vunpack.c.l.b16 %v3248
        %v3605 = vunpack.c.h.b16 %v3248
        %v3606 = vunpack.c.l.b16 %v3249
        %v3607 = vunpack.c.h.b16 %v3249
        %v3608 = vunpack.c.l.b16 %v3250
        %v3609 = vunpack.c.h.b16 %v3250
        %v3610 = vunpack.c.l.b16 %v3251
        %v3611 = vunpack.c.h.b16 %v3251
        %v3612 = vunpack.c.l.b16 %v3252
        %v3613 = vunpack.c.h.b16 %v3252
        %v3614 = vunpack.c.l.b16 %v3253
        %v3615 = vunpack.c.h.b16 %v3253
        %v3616 = vunpack.c.l.b16 %v3254
        %v3617 = vunpack.c.h.b16 %v3254
        %v3618 = vunpack.c.l.b16 %v3255
        %v3619 = vunpack.c.h.b16 %v3255
        %v3620 = vunpack.c.l.b16 %v3256
        %v3621 = vunpack.c.h.b16 %v3256
        %v3622 = vunpack.c.l.b16 %v3257
        %v3623 = vunpack.c.h.b16 %v3257
        %v3624 = vunpack.c.l.b16 %v3258
        %v3625 = vunpack.c.h.b16 %v3258
        %v3626 = vunpack.c.l.b16 %v3259
        %v3627 = vunpack.c.h.b16 %v3259
        %v3628 = vunpack.c.l.b16 %v3260
        %v3629 = vunpack.c.h.b16 %v3260
        %v3630 = vunpack.c.l.b16 %v3261
        %v3631 = vunpack.c.h.b16 %v3261
        %v3632 = vunpack.c.l.b16 %v3262
        %v3633 = vunpack.c.h.b16 %v3262
        %v3634 = vunpack.c.l.b16 %v3263
        %v3635 = vunpack.c.h.b16 %v3263
        %v3636 = vunpack.c.l.b16 %v3264
        %v3637 = vunpack.c.h.b16 %v3264
        %v3638 = vunpack.c.l.b16 %v3265
        %v3639 = vunpack.c.h.b16 %v3265
        %v3640 = vunpack.c.l.b16 %v3266
        %v3641 = vunpack.c.h.b16 %v3266
        %v3642 = vunpack.c.l.b16 %v3267
        %v3643 = vunpack.c.h.b16 %v3267
        %v3644 = vunpack.c.l.b16 %v3268
        %v3645 = vunpack.c.h.b16 %v3268
        %v3646 = vunpack.c.l.b16 %v3269
        %v3647 = vunpack.c.h.b16 %v3269
        %v3648 = vunpack.c.l.b16 %v3270
        %v3649 = vunpack.c.h.b16 %v3270
        %v3650 = vunpack.c.l.b16 %v3271
        %v3651 = vunpack.c.h.b16 %v3271
        %v3652 = vunpack.c.l.b16 %v3272
        %v3653 = vunpack.c.h.b16 %v3272
        %v3654 = vunpack.c.l.b16 %v3273
        %v3655 = vunpack.c.h.b16 %v3273
        %v3656 = vunpack.c.l.b16 %v3274
        %v3657 = vunpack.c.h.b16 %v3274
        %v3658 = vunpack.c.l.b16 %v3275
        %v3659 = vunpack.c.h.b16 %v3275
        %v3660 = vpack.c.b16 %v3406, %v3404
        %v3661 = vpack.c.b16 %v3407, %v3405
        %v3662 = vpack.c.b16 %v3410, %v3408
        %v3663 = vpack.c.b16 %v3411, %v3409
        %v3664 = vpack.c.b16 %v3414, %v3412
        %v3665 = vpack.c.b16 %v3415, %v3413
        %v3666 = vpack.c.b16 %v3418, %v3416
        %v3667 = vpack.c.b16 %v3419, %v3417
        %v3668 = vpack.c.b16 %v3422, %v3420
        %v3669 = vpack.c.b16 %v3423, %v3421
        %v3670 = vpack.c.b16 %v3426, %v3424
        %v3671 = vpack.c.b16 %v3427, %v3425
        %v3672 = vpack.c.b16 %v3430, %v3428
        %v3673 = vpack.c.b16 %v3431, %v3429
        %v3674 = vpack.c.b16 %v3434, %v3432
        %v3675 = vpack.c.b16 %v3435, %v3433
        %v3676 = vpack.c.b16 %v3438, %v3436
        %v3677 = vpack.c.b16 %v3439, %v3437
        %v3678 = vpack.c.b16 %v3442, %v3440
        %v3679 = vpack.c.b16 %v3443, %v3441
        %v3680 = vpack.c.b16 %v3446, %v3444
        %v3681 = vpack.c.b16 %v3447, %v3445
        %v3682 = vpack.c.b16 %v3450, %v3448
        %v3683 = vpack.c.b16 %v3451, %v3449
        %v3684 = vpack.c.b16 %v3454, %v3452
        %v3685 = vpack.c.b16 %v3455, %v3453
        %v3686 = vpack.c.b16 %v3458, %v3456
        %v3687 = vpack.c.b16 %v3459, %v3457
        %v3688 = vpack.c.b16 %v3462, %v3460
        %v3689 = vpack.c.b16 %v3463, %v3461
        %v3690 = vpack.c.b16 %v3466, %v3464
        %v3691 = vpack.c.b16 %v3467, %v3465
        %v3692 = vpack.c.b16 %v3470, %v3468
        %v3693 = vpack.c.b16 %v3471, %v3469
        %v3694 = vpack.c.b16 %v3474, %v3472
        %v3695 = vpack.c.b16 %v3475, %v3473
        %v3696 = vpack.c.b16 %v3478, %v3476
        %v3697 = vpack.c.b16 %v3479, %v3477
        %v3698 = vpack.c.b16 %v3482, %v3480
        %v3699 = vpack.c.b16 %v3483, %v3481
        %v3700 = vpack.c.b16 %v3486, %v3484
        %v3701 = vpack.c.b16 %v3487, %v3485
        %v3702 = vpack.c.b16 %v3490, %v3488
        %v3703 = vpack.c.b16 %v3491, %v3489
        %v3704 = vpack.c.b16 %v3494, %v3492
        %v3705 = vpack.c.b16 %v3495, %v3493
        %v3706 = vpack.c.b16 %v3498, %v3496
        %v3707 = vpack.c.b16 %v3499, %v3497
        %v3708 = vpack.c.b16 %v3502, %v3500
        %v3709 = vpack.c.b16 %v3503, %v3501
        %v3710 = vpack.c.b16 %v3506, %v3504
        %v3711 = vpack.c.b16 %v3507, %v3505
        %v3712 = vpack.c.b16 %v3510, %v3508
        %v3713 = vpack.c.b16 %v3511, %v3509
        %v3714 = vpack.c.b16 %v3514, %v3512
        %v3715 = vpack.c.b16 %v3515, %v3513
        %v3716 = vpack.c.b16 %v3518, %v3516
        %v3717 = vpack.c.b16 %v3519, %v3517
        %v3718 = vpack.c.b16 %v3522, %v3520
        %v3719 = vpack.c.b16 %v3523, %v3521
        %v3720 = vpack.c.b16 %v3526, %v3524
        %v3721 = vpack.c.b16 %v3527, %v3525
        %v3722 = vpack.c.b16 %v3530, %v3528
        %v3723 = vpack.c.b16 %v3531, %v3529
        %v3724 = vpack.c.b16 %v3534, %v3532
        %v3725 = vpack.c.b16 %v3535, %v3533
        %v3726 = vpack.c.b16 %v3538, %v3536
        %v3727 = vpack.c.b16 %v3539, %v3537
        %v3728 = vpack.c.b16 %v3542, %v3540
        %v3729 = vpack.c.b16 %v3543, %v3541
        %v3730 = vpack.c.b16 %v3546, %v3544
        %v3731 = vpack.c.b16 %v3547, %v3545
        %v3732 = vpack.c.b16 %v3550, %v3548
        %v3733 = vpack.c.b16 %v3551, %v3549
        %v3734 = vpack.c.b16 %v3554, %v3552
        %v3735 = vpack.c.b16 %v3555, %v3553
        %v3736 = vpack.c.b16 %v3558, %v3556
        %v3737 = vpack.c.b16 %v3559, %v3557
        %v3738 = vpack.c.b16 %v3562, %v3560
        %v3739 = vpack.c.b16 %v3563, %v3561
        %v3740 = vpack.c.b16 %v3566, %v3564
        %v3741 = vpack.c.b16 %v3567, %v3565
        %v3742 = vpack.c.b16 %v3570, %v3568
        %v3743 = vpack.c.b16 %v3571, %v3569
        %v3744 = vpack.c.b16 %v3574, %v3572
        %v3745 = vpack.c.b16 %v3575, %v3573
        %v3746 = vpack.c.b16 %v3578, %v3576
        %v3747 = vpack.c.b16 %v3579, %v3577
        %v3748 = vpack.c.b16 %v3582, %v3580
        %v3749 = vpack.c.b16 %v3583, %v3581
        %v3750 = vpack.c.b16 %v3586, %v3584
        %v3751 = vpack.c.b16 %v3587, %v3585
        %v3752 = vpack.c.b16 %v3590, %v3588
        %v3753 = vpack.c.b16 %v3591, %v3589
        %v3754 = vpack.c.b16 %v3594, %v3592
        %v3755 = vpack.c.b16 %v3595, %v3593
        %v3756 = vpack.c.b16 %v3598, %v3596
        %v3757 = vpack.c.b16 %v3599, %v3597
        %v3758 = vpack.c.b16 %v3602, %v3600
        %v3759 = vpack.c.b16 %v3603, %v3601
        %v3760 = vpack.c.b16 %v3606, %v3604
        %v3761 = vpack.c.b16 %v3607, %v3605
        %v3762 = vpack.c.b16 %v3610, %v3608
        %v3763 = vpack.c.b16 %v3611, %v3609
        %v3764 = vpack.c.b16 %v3614, %v3612
        %v3765 = vpack.c.b16 %v3615, %v3613
        %v3766 = vpack.c.b16 %v3618, %v3616
        %v3767 = vpack.c.b16 %v3619, %v3617
        %v3768 = vpack.c.b16 %v3622, %v3620
        %v3769 = vpack.c.b16 %v3623, %v3621
        %v3770 = vpack.c.b16 %v3626, %v3624
        %v3771 = vpack.c.b16 %v3627, %v3625
        %v3772 = vpack.c.b16 %v3630, %v3628
        %v3773 = vpack.c.b16 %v3631, %v3629
        %v3774 = vpack.c.b16 %v3634, %v3632
        %v3775 = vpack.c.b16 %v3635, %v3633
        %v3776 = vpack.c.b16 %v3638, %v3636
        %v3777 = vpack.c.b16 %v3639, %v3637
        %v3778 = vpack.c.b16 %v3642, %v3640
        %v3779 = vpack.c.b16 %v3643, %v3641
        %v3780 = vpack.c.b16 %v3646, %v3644
        %v3781 = vpack.c.b16 %v3647, %v3645
        %v3782 = vpack.c.b16 %v3650, %v3648
        %v3783 = vpack.c.b16 %v3651, %v3649
        %v3784 = vpack.c.b16 %v3654, %v3652
        %v3785 = vpack.c.b16 %v3655, %v3653
        %v3786 = vpack.c.b16 %v3658, %v3656
        %v3787 = vpack.c.b16 %v3659, %v3657
        %3916 = vmatprep.subr.bf16.mxu0 %v3661
        %3917 = vmatpush1.bf16.msra.mxu0 %v3660
        %3918 = vmatprep.subr.bf16.mxu0 %v3663
        %3919 = vmatpush1.bf16.msra.mxu0 %v3662
        %3920 = vmatprep.subr.bf16.mxu0 %v3665
        %3921 = vmatpush1.bf16.msra.mxu0 %v3664
        %3922 = vmatprep.subr.bf16.mxu0 %v3667
        %3923 = vmatpush1.bf16.msra.mxu0 %v3666
        %3924 = vmatprep.subr.bf16.mxu0 %v3669
        %3925 = vmatpush1.bf16.msra.mxu0 %v3668
        %3926 = vmatprep.subr.bf16.mxu0 %v3671
        %3927 = vmatpush1.bf16.msra.mxu0 %v3670
        %3928 = vmatprep.subr.bf16.mxu0 %v3673
        %3929 = vmatpush1.bf16.msra.mxu0 %v3672
        %3930 = vmatprep.subr.bf16.mxu0 %v3675
        %3931 = vmatpush1.bf16.msra.mxu0 %v3674
        %3932 = vmatprep.subr.bf16.mxu0 %v3677
        %3933 = vmatpush1.bf16.msra.mxu0 %v3676
        %3934 = vmatprep.subr.bf16.mxu0 %v3679
        %3935 = vmatpush1.bf16.msra.mxu0 %v3678
        %3936 = vmatprep.subr.bf16.mxu0 %v3681
        %3937 = vmatpush1.bf16.msra.mxu0 %v3680
        %3938 = vmatprep.subr.bf16.mxu0 %v3683
        %3939 = vmatpush1.bf16.msra.mxu0 %v3682
        %3940 = vmatprep.subr.bf16.mxu0 %v3685
        %3941 = vmatpush1.bf16.msra.mxu0 %v3684
        %3942 = vmatprep.subr.bf16.mxu0 %v3687
        %3943 = vmatpush1.bf16.msra.mxu0 %v3686
        %3944 = vmatprep.subr.bf16.mxu0 %v3689
        %3945 = vmatpush1.bf16.msra.mxu0 %v3688
        %3946 = vmatprep.subr.bf16.mxu0 %v3691
        %3947 = vmatpush1.bf16.msra.mxu0 %v3690
        %3948 = vmatprep.mubr.bf16.mxu0 %v3141
        %3949 = vmatmul.mubr.bf16.gmra.mrb[0].mxu0 %v3140
        %v3950 = vpop.f32.mrb[0].mxu0
        %v3951 = vadd.f32 0.0, %v3950
        %v3952 = vpop.f32.mrb[0].mxu0
        %v3953 = vadd.f32 0.0, %v3952
        %v3954 = vpop.f32.mrb[0].mxu0
        %v3955 = vadd.f32 0.0, %v3954
        %v3956 = vpop.f32.mrb[0].mxu0
        %v3957 = vadd.f32 0.0, %v3956
        %3958 = vdwg.mxu0
        %3959 = vmatprep.subr.bf16.mxu0 %v3693
        %3960 = vmatpush1.bf16.msra.mxu0 %v3692
        %3961 = vmatprep.subr.bf16.mxu0 %v3695
        %3962 = vmatpush1.bf16.msra.mxu0 %v3694
        %3963 = vmatprep.subr.bf16.mxu0 %v3697
        %3964 = vmatpush1.bf16.msra.mxu0 %v3696
        %3965 = vmatprep.subr.bf16.mxu0 %v3699
        %3966 = vmatpush1.bf16.msra.mxu0 %v3698
        %3967 = vmatprep.subr.bf16.mxu0 %v3701
        %3968 = vmatpush1.bf16.msra.mxu0 %v3700
        %3969 = vmatprep.subr.bf16.mxu0 %v3703
        %3970 = vmatpush1.bf16.msra.mxu0 %v3702
        %3971 = vmatprep.subr.bf16.mxu0 %v3705
        %3972 = vmatpush1.bf16.msra.mxu0 %v3704
        %3973 = vmatprep.subr.bf16.mxu0 %v3707
        %3974 = vmatpush1.bf16.msra.mxu0 %v3706
        %3975 = vmatprep.subr.bf16.mxu0 %v3709
        %3976 = vmatpush1.bf16.msra.mxu0 %v3708
        %3977 = vmatprep.subr.bf16.mxu0 %v3711
        %3978 = vmatpush1.bf16.msra.mxu0 %v3710
        %3979 = vmatprep.subr.bf16.mxu0 %v3713
        %3980 = vmatpush1.bf16.msra.mxu0 %v3712
        %3981 = vmatprep.subr.bf16.mxu0 %v3715
        %3982 = vmatpush1.bf16.msra.mxu0 %v3714
        %3983 = vmatprep.subr.bf16.mxu0 %v3717
        %3984 = vmatpush1.bf16.msra.mxu0 %v3716
        %3985 = vmatprep.subr.bf16.mxu0 %v3719
        %3986 = vmatpush1.bf16.msra.mxu0 %v3718
        %3987 = vmatprep.subr.bf16.mxu0 %v3721
        %3988 = vmatpush1.bf16.msra.mxu0 %v3720
        %3989 = vmatprep.subr.bf16.mxu0 %v3723
        %3990 = vmatpush1.bf16.msra.mxu0 %v3722
        %3991 = vmatprep.mubr.bf16.mxu0 %v3143
        %3992 = vmatmul.mubr.bf16.gmra.mrb[0].mxu0 %v3142
        %v3993 = vpop.f32.mrb[0].mxu0
        %v3994 = vadd.f32 %v3951, %v3993
        %v3995 = vpop.f32.mrb[0].mxu0
        %v3996 = vadd.f32 %v3953, %v3995
        %v3997 = vpop.f32.mrb[0].mxu0
        %v3998 = vadd.f32 %v3955, %v3997
        %v3999 = vpop.f32.mrb[0].mxu0
        %v4000 = vadd.f32 %v3957, %v3999
        %4001 = vdwg.mxu0
        %4002 = vmatprep.subr.bf16.mxu0 %v3725
        %4003 = vmatpush1.bf16.msra.mxu0 %v3724
        %4004 = vmatprep.subr.bf16.mxu0 %v3727
        %4005 = vmatpush1.bf16.msra.mxu0 %v3726
        %4006 = vmatprep.subr.bf16.mxu0 %v3729
        %4007 = vmatpush1.bf16.msra.mxu0 %v3728
        %4008 = vmatprep.subr.bf16.mxu0 %v3731
        %4009 = vmatpush1.bf16.msra.mxu0 %v3730
        %4010 = vmatprep.subr.bf16.mxu0 %v3733
        %4011 = vmatpush1.bf16.msra.mxu0 %v3732
        %4012 = vmatprep.subr.bf16.mxu0 %v3735
        %4013 = vmatpush1.bf16.msra.mxu0 %v3734
        %4014 = vmatprep.subr.bf16.mxu0 %v3737
        %4015 = vmatpush1.bf16.msra.mxu0 %v3736
        %4016 = vmatprep.subr.bf16.mxu0 %v3739
        %4017 = vmatpush1.bf16.msra.mxu0 %v3738
        %4018 = vmatprep.subr.bf16.mxu0 %v3741
        %4019 = vmatpush1.bf16.msra.mxu0 %v3740
        %4020 = vmatprep.subr.bf16.mxu0 %v3743
        %4021 = vmatpush1.bf16.msra.mxu0 %v3742
        %4022 = vmatprep.subr.bf16.mxu0 %v3745
        %4023 = vmatpush1.bf16.msra.mxu0 %v3744
        %4024 = vmatprep.subr.bf16.mxu0 %v3747
        %4025 = vmatpush1.bf16.msra.mxu0 %v3746
        %4026 = vmatprep.subr.bf16.mxu0 %v3749
        %4027 = vmatpush1.bf16.msra.mxu0 %v3748
        %4028 = vmatprep.subr.bf16.mxu0 %v3751
        %4029 = vmatpush1.bf16.msra.mxu0 %v3750
        %4030 = vmatprep.subr.bf16.mxu0 %v3753
        %4031 = vmatpush1.bf16.msra.mxu0 %v3752
        %4032 = vmatprep.subr.bf16.mxu0 %v3755
        %4033 = vmatpush1.bf16.msra.mxu0 %v3754
        %4034 = vmatprep.mubr.bf16.mxu0 %v3145
        %4035 = vmatmul.mubr.bf16.gmra.mrb[0].mxu0 %v3144
        %v4036 = vpop.f32.mrb[0].mxu0
        %v4037 = vadd.f32 %v3994, %v4036
        %v4038 = vpop.f32.mrb[0].mxu0
        %v4039 = vadd.f32 %v3996, %v4038
        %v4040 = vpop.f32.mrb[0].mxu0
        %v4041 = vadd.f32 %v3998, %v4040
        %v4042 = vpop.f32.mrb[0].mxu0
        %v4043 = vadd.f32 %v4000, %v4042
        %4044 = vdwg.mxu0
        %4045 = vmatprep.subr.bf16.mxu0 %v3757
        %4046 = vmatpush1.bf16.msra.mxu0 %v3756
        %4047 = vmatprep.subr.bf16.mxu0 %v3759
        %4048 = vmatpush1.bf16.msra.mxu0 %v3758
        %4049 = vmatprep.subr.bf16.mxu0 %v3761
        %4050 = vmatpush1.bf16.msra.mxu0 %v3760
        %4051 = vmatprep.subr.bf16.mxu0 %v3763
        %4052 = vmatpush1.bf16.msra.mxu0 %v3762
        %4053 = vmatprep.subr.bf16.mxu0 %v3765
        %4054 = vmatpush1.bf16.msra.mxu0 %v3764
        %4055 = vmatprep.subr.bf16.mxu0 %v3767
        %4056 = vmatpush1.bf16.msra.mxu0 %v3766
        %4057 = vmatprep.subr.bf16.mxu0 %v3769
        %4058 = vmatpush1.bf16.msra.mxu0 %v3768
        %4059 = vmatprep.subr.bf16.mxu0 %v3771
        %4060 = vmatpush1.bf16.msra.mxu0 %v3770
        %4061 = vmatprep.subr.bf16.mxu0 %v3773
        %4062 = vmatpush1.bf16.msra.mxu0 %v3772
        %4063 = vmatprep.subr.bf16.mxu0 %v3775
        %4064 = vmatpush1.bf16.msra.mxu0 %v3774
        %4065 = vmatprep.subr.bf16.mxu0 %v3777
        %4066 = vmatpush1.bf16.msra.mxu0 %v3776
        %4067 = vmatprep.subr.bf16.mxu0 %v3779
        %4068 = vmatpush1.bf16.msra.mxu0 %v3778
        %4069 = vmatprep.subr.bf16.mxu0 %v3781
        %4070 = vmatpush1.bf16.msra.mxu0 %v3780
        %4071 = vmatprep.subr.bf16.mxu0 %v3783
        %4072 = vmatpush1.bf16.msra.mxu0 %v3782
        %4073 = vmatprep.subr.bf16.mxu0 %v3785
        %4074 = vmatpush1.bf16.msra.mxu0 %v3784
        %4075 = vmatprep.subr.bf16.mxu0 %v3787
        %4076 = vmatpush1.bf16.msra.mxu0 %v3786
        %4077 = vmatprep.mubr.bf16.mxu0 %v3147
        %4078 = vmatmul.mubr.bf16.gmra.mrb[0].mxu0 %v3146
        %v4079 = vpop.f32.mrb[0].mxu0
        %v4080 = vadd.f32 %v4037, %v4079
        %v4081 = vpop.f32.mrb[0].mxu0
        %v4082 = vadd.f32 %v4039, %v4081
        %v4083 = vpop.f32.mrb[0].mxu0
        %v4084 = vadd.f32 %v4041, %v4083
        %v4085 = vpop.f32.mrb[0].mxu0
        %v4086 = vadd.f32 %v4043, %v4085
        %4087 = vdwg.mxu0
        %v4088 = vadd.f32 %v1742, %v4080
        %v4089 = vadd.f32 %v1743, %v4082
        %v4090 = vadd.f32 %v1744, %v4084
        %v4091 = vadd.f32 %v1745, %v4086
        %4092 = vst [vmem:[#allocation2] sm:$0xff] %v4088
        %4093 = vst [vmem:[#allocation2 + $0x8] sm:$0xff] %v4089
        %4094 = vst [vmem:[#allocation2 + $0x10] sm:$0xff] %v4090
        %4095 = vst [vmem:[#allocation2 + $0x18] sm:$0xff] %v4091
        %p4096 = scmp.eq.s32.totalorder %s33, 1
        // Predicated region
        $region77: #{tpu_custom_call.1} parent=47 // pred_check
          %p4097 = pneg %p4096
        $region78: #{tpu_custom_call.1} parent=47 // pred_check_branch
          %4099 = sbr.rel (%p4097) target = $region80
        $region79: #{tpu_custom_call.1} parent=47 // pred_region
          %v4100 = vmul.f32 %v4090, %v4090
          %v4101 = vmul.f32 %v4091, %v4091
          %vm4102 = vcmask 1047559
          %v4103 = vsel %vm4102, %v4100, 0.0
          %v4104 = vsel %vm4102, %v4101, 0.0
          %v4105 = vadd.f32 %v4103, %v4104
          %4106 = vadd.xlane.f32.xlu0 %v4105
          %v4107 = vpop.xlane.xlu0 %4106
          %v4108 = vmul.f32 %v4107, %v505
          %v4109 = vadd.f32 %v4108, 1e-06
          %v4110 = vrsqrt.pop %v4109
          %v4111 = vmul.f32 %v4090, %v4110
          %v4112 = vmul.f32 %v4091, %v4110
          %v4113 = vpack.c.bf16 %v4111, %v4111
          %v4114 = vpack.c.bf16 %v4112, %v4112
          %v4117 = vcombine.low %v4113, %v4114
          %v4119 = vunpack.c.l.s4 1966171168
          %v4120 = vunpack.c.0.s8 %v4119
          %v4121 = vlaneseq
          %v4122 = vshrl.u32 %v4121, 7
          %v4123 = vsub.s32 %v4120, %v4122
          %v4124 = vrot.slane %v4117, %v4123
          %v4125 = vcombine.high %v4124, %v4124
          %v4127 = vunpack.c.l.s4 1966171168
          %v4128 = vunpack.c.0.s8 %v4127
          %v4129 = vlaneseq
          %v4130 = vshrl.u32 %v4129, 7
          %v4131 = vsub.s32 %v4128, %v4130
          %v4132 = vrot.slane %v4125, %v4131
          %v4133 = vcombine.high %v4132, %v4132
          %v4135 = vshrl.u32 %v4133, 16
          %v4137 = vrot.slane %v4135, 7
          %v4138 = vrot.slane %v4137, 1
          %vm4140 = vcmask 1040384
          %vm4141 = vsmask.f32 256
          %vm4142 = vmand %vm4140, %vm4141
          %vm4143 = vcmask 1041409
          %vm4144 = vsmask.f32 1280
          %vm4145 = vmand %vm4143, %vm4144
          %vm4146 = vmor %vm4145, %vm4142
          %v4147 = vld [vmem:[%s477] sm:$0x3]
          %v4148 = vsel %vm4146, %v4138, %v4147
          %4149 = vst [vmem:[%s477] sm:$0x3] %v4148
        $region80: #{tpu_custom_call.1} parent=47 // pred_fallthru
          _
        %p4150 = scmp.lt.s32.totalorder %s32, 1
        %s4151 = scalar_select %p4150, %s32, 1
        %s4152 = smul.addr %s4151, 2
        %s4153 = scalar_lea.vmem %s7, %s4152
        // Predicated region
        $region81: #{tpu_custom_call.1} parent=47 // pred_check
          %p4154 = pneg %p230
        $region82: #{tpu_custom_call.1} parent=47 // pred_check_branch
          %4156 = sbr.rel (%p4154) target = $region84
        $region83: #{tpu_custom_call.1} parent=47 // pred_region
          _
        $region84: #{tpu_custom_call.1} parent=47 // pred_fallthru
          _
      $region48: #{tpu_custom_call.1} parent=5 // pred_fallthru
        _
      %p4157 = scmp.le.s32.totalorder 2, %s23
      // Predicated region
      $region85: #{tpu_custom_call.1} parent=5 // pred_check
        %p4158 = pneg %p4157
      $region86: #{tpu_custom_call.1} parent=5 // pred_check_branch
        %4160 = sbr.rel (%p4158) target = $region88
      $region87: #{tpu_custom_call.1} parent=5 // pred_region
        %s4161 = ssub.s32 %s23, 2
        // Predicated region
        $region89: #{tpu_custom_call.1} parent=87 // pred_check
          %p4162 = pneg %p236
        $region90: #{tpu_custom_call.1} parent=87 // pred_check_branch
          %4164 = sbr.rel (%p4162) target = $region92
        $region91: #{tpu_custom_call.1} parent=87 // pred_region
          %p4165 = scmp.lt.s32.totalorder %s34, 1
          %s4166 = scalar_select %p4165, %s34, 1
          %s4167 = smul.addr %s4166, 2
          %s4168 = scalar_lea.vmem %s7, %s4167
        $region92: #{tpu_custom_call.1} parent=87 // pred_fallthru
          _
      $region88: #{tpu_custom_call.1} parent=5 // pred_fallthru
        _
    $region6: #{tpu_custom_call.1} parent=1 // loop_footer
      %s27 = sadd.s32 1, %s23
    $region7: #{tpu_custom_call.1} parent=1 // loop_footer_branch
      %22 = sbr.rel target = $region3
    $region8: #{tpu_custom_call.1} parent=1 // loop_exit
      _
    %4169 = vsyncpa [#allocation5], 1
    %s4170 = scalar_lea.sflag [#allocation5], 1
    %4171 = vsyncpa %s4170, 1
    %4172 = vsyncpa [#allocation7], 1
    %s4173 = scalar_lea.sflag [#allocation7], 1
    %4174 = vsyncpa %s4173, 1
    %4175 = vsyncpa [#allocation10], 1
    %s4176 = scalar_lea.sflag [#allocation10], 1
    %4177 = vsyncpa %s4176, 1
    %4178 = vsyncpa [#allocation13], 1

</llo_original>
